<compile_context>
chip_gen: v5e
topology: v5e:2x2
jax: 0.10.0
libtpu: 0.0.40
codegen_flags: <defaults>
</compile_context>

<pallas_src>
import math
import functools

import jax
import jax.numpy as jnp
from jax.experimental import pallas as pl
from jax.experimental.pallas import tpu as pltpu

# ----------------------------- model config ---------------------------------
VOCAB = 512          # synthetic vocab (template ids taken mod VOCAB)
HIDDEN = 64          # hidden_size
FFN = 128            # MLP intermediate size
N_LAYERS = 2
PREFIX_LEN = 4       # prefix_prompt tokenized length
EPS = 1e-6
NEG_INF = -1e30

TPL_START = [2 % VOCAB, 106 % VOCAB, 9020 % VOCAB, 108 % VOCAB]   # len 4
TPL_END = [107 % VOCAB, 108 % VOCAB]                              # len 2
PREFIX_IDS = [11, 23, 45, 67]                                     # len PREFIX_LEN


# ----------------------------- Pallas kernel ---------------------------------
def _rmsnorm(x, scale):
    ms = jnp.mean(x * x, axis=-1, keepdims=True)
    return x * jax.lax.rsqrt(ms + EPS) * scale


def fused_forward_kernel(ids_ref, prefix_ref, emb_ref,
                         ln_attn_ref, wqkv_ref, wo_ref,
                         ln_mlp_ref, wgu_ref, wd_ref,
                         lnf_ref, lmh_ref, o_ref, *, batch, seq):
    """Whole-batch decoder + lm_head in one invocation (layers unrolled).

    ids_ref:    (M, 1)   int32, M = batch*seq (flattened token ids, 0 for pad)
    prefix_ref: (P, D)   f32 prefix rows (trainable param or embed(prefix_ids))
    emb_ref:    (V, D)   f32 embedding table (input-side gather)
    ln_*_ref:   (L, 1, D) f32 RMSNorm scales
    wqkv_ref:   (L, D, 3D) bf16 fused q/k/v
    wo_ref:     (L, D, D)  bf16
    wgu_ref:    (L, D, 2F) bf16 fused gate/up
    wd_ref:     (L, F, D)  bf16
    lnf_ref:    (1, D)   f32 final RMSNorm scale
    lmh_ref:    (D, V)   bf16 pre-transposed tied lm_head (lane-dense V)
    o_ref:      (M, V)   f32 logits
    """
    M = batch * seq
    V, D = emb_ref.shape
    scale = 1.0 / math.sqrt(D)

    # ---- embedding gather via exact one-hot matmul (no HBM embeds) ----
    ids = ids_ref[...]                                        # (M, 1) int32
    vio = jax.lax.broadcasted_iota(jnp.int32, (M, V), 1)
    onehot = (vio == ids).astype(jnp.float32)                 # (M, V)
    h = jnp.dot(onehot, emb_ref[...],
                preferred_element_type=jnp.float32)           # (M, D) f32

    # ---- prefix overlay: rows [b*seq+4, b*seq+4+P) <- prefix_ref ----
    rpos = jax.lax.broadcasted_iota(jnp.int32, (M, 1), 0)
    for b in range(batch):                                    # static (B small)
        base = b * seq + len(TPL_START)
        for j in range(PREFIX_LEN):
            h = jnp.where(rpos == base + j, prefix_ref[j:j + 1, :], h)

    # ---- block-diagonal causal mask over the flattened batch ----
    rr = jax.lax.broadcasted_iota(jnp.int32, (M, M), 0)
    cc = jax.lax.broadcasted_iota(jnp.int32, (M, M), 1)
    same = None
    for b in range(batch):                                    # no int div/mod
        lo, hi = b * seq, (b + 1) * seq
        blk = (rr >= lo) & (rr < hi) & (cc >= lo) & (cc < hi)
        same = blk if same is None else (same | blk)
    mask = same & (cc <= rr)

    for li in range(N_LAYERS):                                # static unroll
        # ---- attention ----
        xn = _rmsnorm(h, ln_attn_ref[li]).astype(jnp.bfloat16)      # (M, D)
        qkv = jnp.dot(xn, wqkv_ref[li],
                      preferred_element_type=jnp.float32)           # (M, 3D)
        qkv_b = qkv.astype(jnp.bfloat16)                            # single cast
        q = qkv_b[:, :D]
        k = qkv_b[:, D:2 * D]
        v = qkv_b[:, 2 * D:]

        # q @ k^T without materializing a transpose (contract dim 1 of both)
        scores = jax.lax.dot_general(
            q, k, (((1,), (1,)), ((), ())),
            preferred_element_type=jnp.float32) * scale             # (M, M) f32
        scores = jnp.where(mask, scores, NEG_INF)

        m = jnp.max(scores, axis=-1, keepdims=True)
        p = jnp.exp(scores - m)
        inv = pl.reciprocal(jnp.sum(p, axis=-1, keepdims=True), approx=True)
        attn = (p * inv).astype(jnp.bfloat16)                       # (M, M)

        ctx = jnp.dot(attn, v,
                      preferred_element_type=jnp.float32).astype(jnp.bfloat16)
        h = h + jnp.dot(ctx, wo_ref[li], preferred_element_type=jnp.float32)

        # ---- gated-GeLU MLP ----
        hn = _rmsnorm(h, ln_mlp_ref[li]).astype(jnp.bfloat16)
        gu = jnp.dot(hn, wgu_ref[li], preferred_element_type=jnp.float32)
        g = jax.nn.gelu(gu[:, :FFN], approximate=True)
        u = gu[:, FFN:]
        h = h + jnp.dot((g * u).astype(jnp.bfloat16), wd_ref[li],
                        preferred_element_type=jnp.float32)

    # ---- final RMSNorm + tied lm_head (pre-transposed, lane-dense V) ----
    xn = _rmsnorm(h, lnf_ref[...]).astype(jnp.bfloat16)
    o_ref[...] = jnp.dot(xn, lmh_ref[...], preferred_element_type=jnp.float32)


# ----------------------------- pallas_call wrapper ----------------------------
def _full_spec(arr):
    nd = arr.ndim
    return pl.BlockSpec(arr.shape, lambda i, _nd=nd: (0,) * _nd)


def run_fused_forward(ids_flat, prefix_rows, params, *, batch, seq):
    """ids_flat: (batch*seq, 1) int32 -> logits (batch*seq, VOCAB) f32."""
    M = batch * seq
    args = (ids_flat, prefix_rows, params["embed"],
            params["ln_attn"], params["wqkv"], params["wo"],
            params["ln_mlp"], params["wgu"], params["wd"],
            params["ln_f"], params["embed_t_bf16"])
    kernel = functools.partial(fused_forward_kernel, batch=batch, seq=seq)
    return pl.pallas_call(
        kernel,
        out_shape=jax.ShapeDtypeStruct((M, VOCAB), jnp.float32),
        grid_spec=pltpu.PrefetchScalarGridSpec(
            num_scalar_prefetch=0,
            grid=(1,),                      # single whole-batch step
            in_specs=[_full_spec(a) for a in args],
            out_specs=pl.BlockSpec((M, VOCAB), lambda i: (0, 0)),
        ),
        compiler_params=pltpu.CompilerParams(
            dimension_semantics=("arbitrary",)),
    )(*args)


# ----------------------------- parameter init --------------------------------
def init_params(key):
    keys = jax.random.split(key, 2 + N_LAYERS)
    params = {}
    embed = 0.02 * jax.random.normal(keys[0], (VOCAB, HIDDEN), jnp.float32)
    params["embed"] = embed                                   # (V, D) f32
    params["embed_t_bf16"] = embed.T.astype(jnp.bfloat16)     # (D, V) lm_head
    params["ln_f"] = jnp.ones((1, HIDDEN), jnp.float32)

    ln_attn, ln_mlp, wqkv, wo, wgu, wd = [], [], [], [], [], []
    for li in range(N_LAYERS):
        lk = jax.random.split(keys[2 + li], 7)
        wq = 0.02 * jax.random.normal(lk[0], (HIDDEN, HIDDEN), jnp.float32)
        wk = 0.02 * jax.random.normal(lk[1], (HIDDEN, HIDDEN), jnp.float32)
        wv = 0.02 * jax.random.normal(lk[2], (HIDDEN, HIDDEN), jnp.float32)
        w_o = 0.02 * jax.random.normal(lk[3], (HIDDEN, HIDDEN), jnp.float32)
        wg = 0.02 * jax.random.normal(lk[4], (HIDDEN, FFN), jnp.float32)
        wu = 0.02 * jax.random.normal(lk[5], (HIDDEN, FFN), jnp.float32)
        w_d = 0.02 * jax.random.normal(lk[6], (FFN, HIDDEN), jnp.float32)

        ln_attn.append(jnp.ones((1, HIDDEN), jnp.float32))
        ln_mlp.append(jnp.ones((1, HIDDEN), jnp.float32))
        wqkv.append(jnp.concatenate([wq, wk, wv], axis=1))     # (D, 3D)
        wo.append(w_o)
        wgu.append(jnp.concatenate([wg, wu], axis=1))          # (D, 2F)
        wd.append(w_d)

    params["ln_attn"] = jnp.stack(ln_attn)                       # (L, 1, D)
    params["ln_mlp"] = jnp.stack(ln_mlp)                         # (L, 1, D)
    params["wqkv"] = jnp.stack(wqkv).astype(jnp.bfloat16)        # (L, D, 3D)
    params["wo"] = jnp.stack(wo).astype(jnp.bfloat16)            # (L, D, D)
    params["wgu"] = jnp.stack(wgu).astype(jnp.bfloat16)          # (L, D, 2F)
    params["wd"] = jnp.stack(wd).astype(jnp.bfloat16)            # (L, F, D)

    prefix_ids = jnp.asarray(PREFIX_IDS, jnp.int32)
    params["prefix_ids"] = prefix_ids
    # trainable prefix initialized from embed(prefix_ids), mirroring
    # `word_embeds.detach().clone().squeeze()` in the module __init__.
    params["prefix_embeddings"] = embed[prefix_ids]              # (P, D) f32
    # fixed embeddings used for the use_prefix=False ("reference") path.
    params["prefix_init_embeds"] = embed[prefix_ids]             # (P, D) f32
    return params


# ----------------------------- forward ---------------------------------------
def _build_inputs(params, input_ids, use_prefix):
    """Tiny int32 id plumbing (no (B,T,D) embeds are built on the host)."""
    B, S = input_ids.shape
    head_ids = jnp.asarray(TPL_START + PREFIX_IDS + TPL_END, jnp.int32)   # (10,)
    head = jnp.broadcast_to(head_ids[None, :], (B, head_ids.shape[0]))
    ids = jnp.concatenate([head, input_ids[:, 7:].astype(jnp.int32)], axis=1)
    T_real = ids.shape[1]
    T_pad = ((T_real + 7) // 8) * 8            # B*T_pad = 48 -> 16-aligned M
    if T_pad != T_real:
        ids = jnp.pad(ids, ((0, 0), (0, T_pad - T_real)))
    ids_flat = ids.reshape(B * T_pad, 1)
    prefix_rows = (params["prefix_embeddings"] if use_prefix
                   else params["prefix_init_embeds"])
    return ids_flat, prefix_rows, B, T_real, T_pad


def prefix_tuning_forward(params, input_ids, use_prefix=True):
    """Mirror of PrefixTuningPolicyModel.forward (attention_mask=None path)."""
    ids_flat, prefix_rows, B, T_real, T_pad = _build_inputs(
        params, input_ids, use_prefix)
    logits = run_fused_forward(ids_flat, prefix_rows, params,
                               batch=B, seq=T_pad)               # (B*T_pad, V)
    return logits.reshape(B, T_pad, VOCAB)[:, :T_real, :]        # (B, T, V)


# ----------------------------- pure-JAX mirror (for tolerance check) ---------
def _reference_logits(params, ids_flat, prefix_rows, batch, seq):
    D = HIDDEN
    scale = 1.0 / math.sqrt(D)
    M = batch * seq
    h = jnp.take(params["embed"], ids_flat[:, 0], axis=0)        # (M, D) f32
    for b in range(batch):
        base = b * seq + len(TPL_START)
        h = h.at[base:base + PREFIX_LEN].set(prefix_rows)
    rr = jnp.arange(M)[:, None]
    cc = jnp.arange(M)[None, :]
    mask = ((rr // seq) == (cc // seq)) & (cc <= rr)

    def rms(v, s):
        return v * jax.lax.rsqrt(jnp.mean(v * v, -1, keepdims=True) + EPS) * s

    for li in range(N_LAYERS):
        xn = rms(h, params["ln_attn"][li]).astype(jnp.bfloat16)
        qkv = jnp.dot(xn, params["wqkv"][li],
                      preferred_element_type=jnp.float32).astype(jnp.bfloat16)
        q, k, v = qkv[:, :D], qkv[:, D:2 * D], qkv[:, 2 * D:]
        s = jnp.dot(q, k.T, preferred_element_type=jnp.float32) * scale
        s = jnp.where(mask, s, NEG_INF)
        p = jax.nn.softmax(s, axis=-1)
        ctx = jnp.dot(p.astype(jnp.bfloat16), v,
                      preferred_element_type=jnp.float32).astype(jnp.bfloat16)
        h = h + jnp.dot(ctx, params["wo"][li], preferred_element_type=jnp.float32)
        hn = rms(h, params["ln_mlp"][li]).astype(jnp.bfloat16)
        gu = jnp.dot(hn, params["wgu"][li], preferred_element_type=jnp.float32)
        g = jax.nn.gelu(gu[:, :FFN], approximate=True)
        h = h + jnp.dot((g * gu[:, FFN:]).astype(jnp.bfloat16), params["wd"][li],
                        preferred_element_type=jnp.float32)
    xn = rms(h, params["ln_f"]).astype(jnp.bfloat16)
    return jnp.dot(xn, params["embed_t_bf16"], preferred_element_type=jnp.float32)


# ----------------------------- main -------------------------------------------
if __name__ == "__main__":
    key = jax.random.PRNGKey(0)
    k_inp, k_par = jax.random.split(key)
    params = init_params(k_par)

    B, S = 2, 16
    input_ids = jax.random.randint(k_inp, (B, S), 0, VOCAB, dtype=jnp.int32)

    fwd = jax.jit(functools.partial(prefix_tuning_forward, use_prefix=True))
    logits = fwd(params, input_ids)
    jax.block_until_ready(logits)

    fwd_nopfx = jax.jit(functools.partial(prefix_tuning_forward, use_prefix=False))
    logits_nopfx = fwd_nopfx(params, input_ids)
    jax.block_until_ready(logits_nopfx)

    expected_T = len(TPL_START) + PREFIX_LEN + len(TPL_END) + (S - 7)   # 19
    assert logits.shape == (B, expected_T, VOCAB), logits.shape
    assert logits_nopfx.shape == (B, expected_T, VOCAB), logits_nopfx.shape
    assert bool(jnp.all(jnp.isfinite(logits))), "non-finite logits"

    # loose tolerance: bf16 operands + approx softmax reciprocal in the kernel
    for use_prefix, got in ((True, logits), (False, logits_nopfx)):
        ids_flat, pref, Bq, T_real, T_pad = _build_inputs(params, input_ids,
                                                          use_prefix)
        ref = _reference_logits(params, ids_flat, pref, Bq, T_pad)
        ref = ref.reshape(Bq, T_pad, VOCAB)[:, :T_real, :]
        max_err = float(jnp.max(jnp.abs(got - ref)))
        assert max_err < 7.5e-2, f"max_err={max_err}"

    # TODO(synk): generate_response / truncate_from_beginning (tokenizer,
    # chat templates, sampling loops) are host-side logic, not kernels.
    print("KERNEL_OK")
</pallas_src>

<mosaic_0001>
module attributes {stable_mosaic.version = 11 : i64} {
  func.func @fused_forward_kernel(%arg0: i32, %arg1: memref<48x1xi32, #tpu.memory_space<vmem>>, %arg2: memref<4x64xf32, #tpu.memory_space<vmem>>, %arg3: memref<512x64xf32, #tpu.memory_space<vmem>>, %arg4: memref<2x1x64xf32, #tpu.memory_space<vmem>>, %arg5: memref<2x64x192xbf16, #tpu.memory_space<vmem>>, %arg6: memref<2x64x64xbf16, #tpu.memory_space<vmem>>, %arg7: memref<2x1x64xf32, #tpu.memory_space<vmem>>, %arg8: memref<2x64x256xbf16, #tpu.memory_space<vmem>>, %arg9: memref<2x128x64xbf16, #tpu.memory_space<vmem>>, %arg10: memref<1x64xf32, #tpu.memory_space<vmem>>, %arg11: memref<64x512xbf16, #tpu.memory_space<vmem>>, %arg12: memref<48x512xf32, #tpu.memory_space<vmem>>) attributes {dimension_semantics = [#tpu.dimension_semantics<arbitrary>], iteration_bounds = array<i64: 1>, scalar_prefetch = 0 : i64, scratch_operands = 0 : i64, tpu.core_type = #tpu.core_type<tc>, window_params = [{pipeline_mode = #tpu.pipeline_mode<synchronous>, transform_indices = @transform_0, window_bounds = array<i64: 48, 1>}, {pipeline_mode = #tpu.pipeline_mode<synchronous>, transform_indices = @transform_1, window_bounds = array<i64: 4, 64>}, {pipeline_mode = #tpu.pipeline_mode<synchronous>, transform_indices = @transform_2, window_bounds = array<i64: 512, 64>}, {pipeline_mode = #tpu.pipeline_mode<synchronous>, transform_indices = @transform_3, window_bounds = array<i64: 2, 1, 64>}, {pipeline_mode = #tpu.pipeline_mode<synchronous>, transform_indices = @transform_4, window_bounds = array<i64: 2, 64, 192>}, {pipeline_mode = #tpu.pipeline_mode<synchronous>, transform_indices = @transform_5, window_bounds = array<i64: 2, 64, 64>}, {pipeline_mode = #tpu.pipeline_mode<synchronous>, transform_indices = @transform_6, window_bounds = array<i64: 2, 1, 64>}, {pipeline_mode = #tpu.pipeline_mode<synchronous>, transform_indices = @transform_7, window_bounds = array<i64: 2, 64, 256>}, {pipeline_mode = #tpu.pipeline_mode<synchronous>, transform_indices = @transform_8, window_bounds = array<i64: 2, 128, 64>}, {pipeline_mode = #tpu.pipeline_mode<synchronous>, transform_indices = @transform_9, window_bounds = array<i64: 1, 64>}, {pipeline_mode = #tpu.pipeline_mode<synchronous>, transform_indices = @transform_10, window_bounds = array<i64: 64, 512>}, {pipeline_mode = #tpu.pipeline_mode<synchronous>, transform_indices = @transform_11, window_bounds = array<i64: 48, 512>}]} {
    %c0 = arith.constant 0 : index
    %c0_0 = arith.constant 0 : index
    %0 = vector.load %arg1[%c0, %c0_0] : memref<48x1xi32, #tpu.memory_space<vmem>>, vector<48x1xi32>
    %1 = tpu.iota {dimensions = array<i32: 1>} : vector<48x512xi32>
    %2 = vector.broadcast %0 : vector<48x1xi32> to vector<48x512xi32>
    %3 = arith.cmpi eq, %1, %2 : vector<48x512xi32>
    %4 = arith.extui %3 : vector<48x512xi1> to vector<48x512xi32>
    %5 = arith.sitofp %4 : vector<48x512xi32> to vector<48x512xf32>
    %c0_1 = arith.constant 0 : index
    %c0_2 = arith.constant 0 : index
    %6 = vector.load %arg3[%c0_1, %c0_2] : memref<512x64xf32, #tpu.memory_space<vmem>>, vector<512x64xf32>
    %cst = arith.constant dense<0.000000e+00> : vector<48x64xf32>
    %7 = tpu.matmul %5, %6, %cst {dimension_numbers = #tpu.dot_dimension_numbers<[1], [0], [0], [1], [0, 0, 1, 1], [], []>} : vector<48x512xf32>, vector<512x64xf32>, vector<48x64xf32> -> vector<48x64xf32>
    %8 = tpu.iota {dimensions = array<i32: 0>} : vector<48x1xi32>
    %c4_i32 = arith.constant 4 : i32
    %9 = vector.broadcast %c4_i32 : i32 to vector<48x1xi32>
    %10 = arith.cmpi eq, %8, %9 : vector<48x1xi32>
    %c0_3 = arith.constant 0 : index
    %c0_4 = arith.constant 0 : index
    %11 = vector.load %arg2[%c0_3, %c0_4] : memref<4x64xf32, #tpu.memory_space<vmem>>, vector<1x64xf32>
    %12 = vector.shape_cast %10 : vector<48x1xi1> to vector<48x1xi1>
    %13 = vector.broadcast %12 : vector<48x1xi1> to vector<48x64xi1>
    %14 = vector.shape_cast %11 : vector<1x64xf32> to vector<1x64xf32>
    %15 = vector.broadcast %14 : vector<1x64xf32> to vector<48x64xf32>
    %16 = arith.select %13, %15, %7 : vector<48x64xi1>, vector<48x64xf32>
    %c5_i32 = arith.constant 5 : i32
    %17 = vector.broadcast %c5_i32 : i32 to vector<48x1xi32>
    %18 = arith.cmpi eq, %8, %17 : vector<48x1xi32>
    %c1 = arith.constant 1 : index
    %c0_5 = arith.constant 0 : index
    %19 = vector.load %arg2[%c1, %c0_5] : memref<4x64xf32, #tpu.memory_space<vmem>>, vector<1x64xf32>
    %20 = vector.shape_cast %18 : vector<48x1xi1> to vector<48x1xi1>
    %21 = vector.broadcast %20 : vector<48x1xi1> to vector<48x64xi1>
    %22 = vector.shape_cast %19 : vector<1x64xf32> to vector<1x64xf32>
    %23 = vector.broadcast %22 : vector<1x64xf32> to vector<48x64xf32>
    %24 = arith.select %21, %23, %16 : vector<48x64xi1>, vector<48x64xf32>
    %c6_i32 = arith.constant 6 : i32
    %25 = vector.broadcast %c6_i32 : i32 to vector<48x1xi32>
    %26 = arith.cmpi eq, %8, %25 : vector<48x1xi32>
    %c2 = arith.constant 2 : index
    %c0_6 = arith.constant 0 : index
    %27 = vector.load %arg2[%c2, %c0_6] : memref<4x64xf32, #tpu.memory_space<vmem>>, vector<1x64xf32>
    %28 = vector.shape_cast %26 : vector<48x1xi1> to vector<48x1xi1>
    %29 = vector.broadcast %28 : vector<48x1xi1> to vector<48x64xi1>
    %30 = vector.shape_cast %27 : vector<1x64xf32> to vector<1x64xf32>
    %31 = vector.broadcast %30 : vector<1x64xf32> to vector<48x64xf32>
    %32 = arith.select %29, %31, %24 : vector<48x64xi1>, vector<48x64xf32>
    %c7_i32 = arith.constant 7 : i32
    %33 = vector.broadcast %c7_i32 : i32 to vector<48x1xi32>
    %34 = arith.cmpi eq, %8, %33 : vector<48x1xi32>
    %c3 = arith.constant 3 : index
    %c0_7 = arith.constant 0 : index
    %35 = vector.load %arg2[%c3, %c0_7] : memref<4x64xf32, #tpu.memory_space<vmem>>, vector<1x64xf32>
    %36 = vector.shape_cast %34 : vector<48x1xi1> to vector<48x1xi1>
    %37 = vector.broadcast %36 : vector<48x1xi1> to vector<48x64xi1>
    %38 = vector.shape_cast %35 : vector<1x64xf32> to vector<1x64xf32>
    %39 = vector.broadcast %38 : vector<1x64xf32> to vector<48x64xf32>
    %40 = arith.select %37, %39, %32 : vector<48x64xi1>, vector<48x64xf32>
    %c28_i32 = arith.constant 28 : i32
    %41 = vector.broadcast %c28_i32 : i32 to vector<48x1xi32>
    %42 = arith.cmpi eq, %8, %41 : vector<48x1xi32>
    %c0_8 = arith.constant 0 : index
    %c0_9 = arith.constant 0 : index
    %43 = vector.load %arg2[%c0_8, %c0_9] : memref<4x64xf32, #tpu.memory_space<vmem>>, vector<1x64xf32>
    %44 = vector.shape_cast %42 : vector<48x1xi1> to vector<48x1xi1>
    %45 = vector.broadcast %44 : vector<48x1xi1> to vector<48x64xi1>
    %46 = vector.shape_cast %43 : vector<1x64xf32> to vector<1x64xf32>
    %47 = vector.broadcast %46 : vector<1x64xf32> to vector<48x64xf32>
    %48 = arith.select %45, %47, %40 : vector<48x64xi1>, vector<48x64xf32>
    %c29_i32 = arith.constant 29 : i32
    %49 = vector.broadcast %c29_i32 : i32 to vector<48x1xi32>
    %50 = arith.cmpi eq, %8, %49 : vector<48x1xi32>
    %c1_10 = arith.constant 1 : index
    %c0_11 = arith.constant 0 : index
    %51 = vector.load %arg2[%c1_10, %c0_11] : memref<4x64xf32, #tpu.memory_space<vmem>>, vector<1x64xf32>
    %52 = vector.shape_cast %50 : vector<48x1xi1> to vector<48x1xi1>
    %53 = vector.broadcast %52 : vector<48x1xi1> to vector<48x64xi1>
    %54 = vector.shape_cast %51 : vector<1x64xf32> to vector<1x64xf32>
    %55 = vector.broadcast %54 : vector<1x64xf32> to vector<48x64xf32>
    %56 = arith.select %53, %55, %48 : vector<48x64xi1>, vector<48x64xf32>
    %c30_i32 = arith.constant 30 : i32
    %57 = vector.broadcast %c30_i32 : i32 to vector<48x1xi32>
    %58 = arith.cmpi eq, %8, %57 : vector<48x1xi32>
    %c2_12 = arith.constant 2 : index
    %c0_13 = arith.constant 0 : index
    %59 = vector.load %arg2[%c2_12, %c0_13] : memref<4x64xf32, #tpu.memory_space<vmem>>, vector<1x64xf32>
    %60 = vector.shape_cast %58 : vector<48x1xi1> to vector<48x1xi1>
    %61 = vector.broadcast %60 : vector<48x1xi1> to vector<48x64xi1>
    %62 = vector.shape_cast %59 : vector<1x64xf32> to vector<1x64xf32>
    %63 = vector.broadcast %62 : vector<1x64xf32> to vector<48x64xf32>
    %64 = arith.select %61, %63, %56 : vector<48x64xi1>, vector<48x64xf32>
    %c31_i32 = arith.constant 31 : i32
    %65 = vector.broadcast %c31_i32 : i32 to vector<48x1xi32>
    %66 = arith.cmpi eq, %8, %65 : vector<48x1xi32>
    %c3_14 = arith.constant 3 : index
    %c0_15 = arith.constant 0 : index
    %67 = vector.load %arg2[%c3_14, %c0_15] : memref<4x64xf32, #tpu.memory_space<vmem>>, vector<1x64xf32>
    %68 = vector.shape_cast %66 : vector<48x1xi1> to vector<48x1xi1>
    %69 = vector.broadcast %68 : vector<48x1xi1> to vector<48x64xi1>
    %70 = vector.shape_cast %67 : vector<1x64xf32> to vector<1x64xf32>
    %71 = vector.broadcast %70 : vector<1x64xf32> to vector<48x64xf32>
    %72 = arith.select %69, %71, %64 : vector<48x64xi1>, vector<48x64xf32>
    %73 = tpu.iota {dimensions = array<i32: 0>} : vector<48x48xi32>
    %74 = tpu.iota {dimensions = array<i32: 1>} : vector<48x48xi32>
    %c0_i32 = arith.constant 0 : i32
    %75 = vector.broadcast %c0_i32 : i32 to vector<48x48xi32>
    %76 = arith.cmpi sge, %73, %75 : vector<48x48xi32>
    %c24_i32 = arith.constant 24 : i32
    %77 = vector.broadcast %c24_i32 : i32 to vector<48x48xi32>
    %78 = arith.cmpi slt, %73, %77 : vector<48x48xi32>
    %79 = arith.andi %76, %78 : vector<48x48xi1>
    %c0_i32_16 = arith.constant 0 : i32
    %80 = vector.broadcast %c0_i32_16 : i32 to vector<48x48xi32>
    %81 = arith.cmpi sge, %74, %80 : vector<48x48xi32>
    %82 = arith.andi %79, %81 : vector<48x48xi1>
    %c24_i32_17 = arith.constant 24 : i32
    %83 = vector.broadcast %c24_i32_17 : i32 to vector<48x48xi32>
    %84 = arith.cmpi slt, %74, %83 : vector<48x48xi32>
    %85 = arith.andi %82, %84 : vector<48x48xi1>
    %c24_i32_18 = arith.constant 24 : i32
    %86 = vector.broadcast %c24_i32_18 : i32 to vector<48x48xi32>
    %87 = arith.cmpi sge, %73, %86 : vector<48x48xi32>
    %c48_i32 = arith.constant 48 : i32
    %88 = vector.broadcast %c48_i32 : i32 to vector<48x48xi32>
    %89 = arith.cmpi slt, %73, %88 : vector<48x48xi32>
    %90 = arith.andi %87, %89 : vector<48x48xi1>
    %c24_i32_19 = arith.constant 24 : i32
    %91 = vector.broadcast %c24_i32_19 : i32 to vector<48x48xi32>
    %92 = arith.cmpi sge, %74, %91 : vector<48x48xi32>
    %93 = arith.andi %90, %92 : vector<48x48xi1>
    %c48_i32_20 = arith.constant 48 : i32
    %94 = vector.broadcast %c48_i32_20 : i32 to vector<48x48xi32>
    %95 = arith.cmpi slt, %74, %94 : vector<48x48xi32>
    %96 = arith.andi %93, %95 : vector<48x48xi1>
    %97 = arith.ori %85, %96 : vector<48x48xi1>
    %98 = arith.cmpi sle, %74, %73 : vector<48x48xi32>
    %99 = arith.andi %97, %98 : vector<48x48xi1>
    %c0_21 = arith.constant 0 : index
    %c0_22 = arith.constant 0 : index
    %c0_23 = arith.constant 0 : index
    %100 = vector.load %arg4[%c0_21, %c0_22, %c0_23] : memref<2x1x64xf32, #tpu.memory_space<vmem>>, vector<1x1x64xf32>
    %101 = vector.shape_cast %100 : vector<1x1x64xf32> to vector<1x64xf32>
    %102 = arith.mulf %72, %72 : vector<48x64xf32>
    %cst_24 = arith.constant dense<0.000000e+00> : vector<48xf32>
    %103 = vector.multi_reduction <add>, %102, %cst_24 [1] : vector<48x64xf32> to vector<48xf32>
    %104 = vector.shape_cast %103 : vector<48xf32> to vector<48x1xf32>
    %cst_25 = arith.constant 6.400000e+01 : f32
    %105 = vector.broadcast %cst_25 : f32 to vector<48x1xf32>
    %106 = arith.divf %104, %105 : vector<48x1xf32>
    %cst_26 = arith.constant 9.99999997E-7 : f32
    %107 = vector.broadcast %cst_26 : f32 to vector<48x1xf32>
    %108 = arith.addf %106, %107 : vector<48x1xf32>
    %109 = math.rsqrt %108 : vector<48x1xf32>
    %110 = vector.broadcast %109 : vector<48x1xf32> to vector<48x64xf32>
    %111 = arith.mulf %72, %110 : vector<48x64xf32>
    %112 = vector.broadcast %101 : vector<1x64xf32> to vector<48x64xf32>
    %113 = arith.mulf %111, %112 : vector<48x64xf32>
    %114 = arith.truncf %113 : vector<48x64xf32> to vector<48x64xbf16>
    %c0_27 = arith.constant 0 : index
    %c0_28 = arith.constant 0 : index
    %c0_29 = arith.constant 0 : index
    %115 = vector.load %arg5[%c0_27, %c0_28, %c0_29] : memref<2x64x192xbf16, #tpu.memory_space<vmem>>, vector<1x64x192xbf16>
    %116 = vector.shape_cast %115 : vector<1x64x192xbf16> to vector<64x192xbf16>
    %cst_30 = arith.constant dense<0.000000e+00> : vector<48x192xf32>
    %117 = tpu.matmul %114, %116, %cst_30 {dimension_numbers = #tpu.dot_dimension_numbers<[1], [0], [0], [1], [0, 0, 1, 1], [], []>} : vector<48x64xbf16>, vector<64x192xbf16>, vector<48x192xf32> -> vector<48x192xf32>
    %118 = arith.truncf %117 : vector<48x192xf32> to vector<48x192xbf16>
    %119 = vector.extract_strided_slice %118 {offsets = [0, 0], sizes = [48, 64], strides = [1, 1]} : vector<48x192xbf16> to vector<48x64xbf16>
    %120 = vector.extract_strided_slice %118 {offsets = [0, 64], sizes = [48, 64], strides = [1, 1]} : vector<48x192xbf16> to vector<48x64xbf16>
    %121 = vector.extract_strided_slice %118 {offsets = [0, 128], sizes = [48, 64], strides = [1, 1]} : vector<48x192xbf16> to vector<48x64xbf16>
    %cst_31 = arith.constant dense<0.000000e+00> : vector<48x48xf32>
    %122 = tpu.matmul %119, %120, %cst_31 {dimension_numbers = #tpu.dot_dimension_numbers<[1], [1], [0], [0], [0, 0, 1, 0], [], []>} : vector<48x64xbf16>, vector<48x64xbf16>, vector<48x48xf32> -> vector<48x48xf32>
    %cst_32 = arith.constant 1.250000e-01 : f32
    %123 = vector.broadcast %cst_32 : f32 to vector<48x48xf32>
    %124 = arith.mulf %122, %123 : vector<48x48xf32>
    %cst_33 = arith.constant -1.000000e+30 : f32
    %125 = vector.broadcast %cst_33 : f32 to vector<48x48xf32>
    %126 = arith.select %99, %124, %125 : vector<48x48xi1>, vector<48x48xf32>
    %cst_34 = arith.constant dense<0xFF800000> : vector<48xf32>
    %127 = vector.multi_reduction <maximumf>, %126, %cst_34 [1] : vector<48x48xf32> to vector<48xf32>
    %128 = vector.shape_cast %127 : vector<48xf32> to vector<48x1xf32>
    %129 = vector.broadcast %128 : vector<48x1xf32> to vector<48x48xf32>
    %130 = arith.subf %126, %129 : vector<48x48xf32>
    %131 = math.exp %130 : vector<48x48xf32>
    %cst_35 = arith.constant dense<0.000000e+00> : vector<48xf32>
    %132 = vector.multi_reduction <add>, %131, %cst_35 [1] : vector<48x48xf32> to vector<48xf32>
    %133 = vector.shape_cast %132 : vector<48xf32> to vector<48x1xf32>
    %134 = tpu.reciprocal %133 {approx = true} : vector<48x1xf32> -> vector<48x1xf32>
    %135 = vector.broadcast %134 : vector<48x1xf32> to vector<48x48xf32>
    %136 = arith.mulf %131, %135 : vector<48x48xf32>
    %137 = arith.truncf %136 : vector<48x48xf32> to vector<48x48xbf16>
    %cst_36 = arith.constant dense<0.000000e+00> : vector<48x64xf32>
    %138 = tpu.matmul %137, %121, %cst_36 {dimension_numbers = #tpu.dot_dimension_numbers<[1], [0], [0], [1], [0, 0, 1, 1], [], []>} : vector<48x48xbf16>, vector<48x64xbf16>, vector<48x64xf32> -> vector<48x64xf32>
    %139 = arith.truncf %138 : vector<48x64xf32> to vector<48x64xbf16>
    %c0_37 = arith.constant 0 : index
    %c0_38 = arith.constant 0 : index
    %c0_39 = arith.constant 0 : index
    %140 = vector.load %arg6[%c0_37, %c0_38, %c0_39] : memref<2x64x64xbf16, #tpu.memory_space<vmem>>, vector<1x64x64xbf16>
    %141 = vector.shape_cast %140 : vector<1x64x64xbf16> to vector<64x64xbf16>
    %cst_40 = arith.constant dense<0.000000e+00> : vector<48x64xf32>
    %142 = tpu.matmul %139, %141, %cst_40 {dimension_numbers = #tpu.dot_dimension_numbers<[1], [0], [0], [1], [0, 0, 1, 1], [], []>} : vector<48x64xbf16>, vector<64x64xbf16>, vector<48x64xf32> -> vector<48x64xf32>
    %143 = arith.addf %72, %142 : vector<48x64xf32>
    %c0_41 = arith.constant 0 : index
    %c0_42 = arith.constant 0 : index
    %c0_43 = arith.constant 0 : index
    %144 = vector.load %arg7[%c0_41, %c0_42, %c0_43] : memref<2x1x64xf32, #tpu.memory_space<vmem>>, vector<1x1x64xf32>
    %145 = vector.shape_cast %144 : vector<1x1x64xf32> to vector<1x64xf32>
    %146 = arith.mulf %143, %143 : vector<48x64xf32>
    %cst_44 = arith.constant dense<0.000000e+00> : vector<48xf32>
    %147 = vector.multi_reduction <add>, %146, %cst_44 [1] : vector<48x64xf32> to vector<48xf32>
    %148 = vector.shape_cast %147 : vector<48xf32> to vector<48x1xf32>
    %cst_45 = arith.constant 6.400000e+01 : f32
    %149 = vector.broadcast %cst_45 : f32 to vector<48x1xf32>
    %150 = arith.divf %148, %149 : vector<48x1xf32>
    %cst_46 = arith.constant 9.99999997E-7 : f32
    %151 = vector.broadcast %cst_46 : f32 to vector<48x1xf32>
    %152 = arith.addf %150, %151 : vector<48x1xf32>
    %153 = math.rsqrt %152 : vector<48x1xf32>
    %154 = vector.broadcast %153 : vector<48x1xf32> to vector<48x64xf32>
    %155 = arith.mulf %143, %154 : vector<48x64xf32>
    %156 = vector.broadcast %145 : vector<1x64xf32> to vector<48x64xf32>
    %157 = arith.mulf %155, %156 : vector<48x64xf32>
    %158 = arith.truncf %157 : vector<48x64xf32> to vector<48x64xbf16>
    %c0_47 = arith.constant 0 : index
    %c0_48 = arith.constant 0 : index
    %c0_49 = arith.constant 0 : index
    %159 = vector.load %arg8[%c0_47, %c0_48, %c0_49] : memref<2x64x256xbf16, #tpu.memory_space<vmem>>, vector<1x64x256xbf16>
    %160 = vector.shape_cast %159 : vector<1x64x256xbf16> to vector<64x256xbf16>
    %cst_50 = arith.constant dense<0.000000e+00> : vector<48x256xf32>
    %161 = tpu.matmul %158, %160, %cst_50 {dimension_numbers = #tpu.dot_dimension_numbers<[1], [0], [0], [1], [0, 0, 1, 1], [], []>} : vector<48x64xbf16>, vector<64x256xbf16>, vector<48x256xf32> -> vector<48x256xf32>
    %162 = vector.extract_strided_slice %161 {offsets = [0, 0], sizes = [48, 128], strides = [1, 1]} : vector<48x256xf32> to vector<48x128xf32>
    %163 = arith.mulf %162, %162 : vector<48x128xf32>
    %164 = arith.mulf %162, %163 : vector<48x128xf32>
    %cst_51 = arith.constant 4.471500e-02 : f32
    %165 = vector.broadcast %cst_51 : f32 to vector<48x128xf32>
    %166 = arith.mulf %165, %164 : vector<48x128xf32>
    %167 = arith.addf %162, %166 : vector<48x128xf32>
    %cst_52 = arith.constant 0.797884583 : f32
    %168 = vector.broadcast %cst_52 : f32 to vector<48x128xf32>
    %169 = arith.mulf %168, %167 : vector<48x128xf32>
    %170 = math.tanh %169 : vector<48x128xf32>
    %cst_53 = arith.constant 1.000000e+00 : f32
    %171 = vector.broadcast %cst_53 : f32 to vector<48x128xf32>
    %172 = arith.addf %171, %170 : vector<48x128xf32>
    %cst_54 = arith.constant 5.000000e-01 : f32
    %173 = vector.broadcast %cst_54 : f32 to vector<48x128xf32>
    %174 = arith.mulf %173, %172 : vector<48x128xf32>
    %175 = arith.mulf %162, %174 : vector<48x128xf32>
    %176 = vector.extract_strided_slice %161 {offsets = [0, 128], sizes = [48, 128], strides = [1, 1]} : vector<48x256xf32> to vector<48x128xf32>
    %177 = arith.mulf %175, %176 : vector<48x128xf32>
    %178 = arith.truncf %177 : vector<48x128xf32> to vector<48x128xbf16>
    %c0_55 = arith.constant 0 : index
    %c0_56 = arith.constant 0 : index
    %c0_57 = arith.constant 0 : index
    %179 = vector.load %arg9[%c0_55, %c0_56, %c0_57] : memref<2x128x64xbf16, #tpu.memory_space<vmem>>, vector<1x128x64xbf16>
    %180 = vector.shape_cast %179 : vector<1x128x64xbf16> to vector<128x64xbf16>
    %cst_58 = arith.constant dense<0.000000e+00> : vector<48x64xf32>
    %181 = tpu.matmul %178, %180, %cst_58 {dimension_numbers = #tpu.dot_dimension_numbers<[1], [0], [0], [1], [0, 0, 1, 1], [], []>} : vector<48x128xbf16>, vector<128x64xbf16>, vector<48x64xf32> -> vector<48x64xf32>
    %182 = arith.addf %143, %181 : vector<48x64xf32>
    %c1_59 = arith.constant 1 : index
    %c0_60 = arith.constant 0 : index
    %c0_61 = arith.constant 0 : index
    %183 = vector.load %arg4[%c1_59, %c0_60, %c0_61] : memref<2x1x64xf32, #tpu.memory_space<vmem>>, vector<1x1x64xf32>
    %184 = vector.shape_cast %183 : vector<1x1x64xf32> to vector<1x64xf32>
    %185 = arith.mulf %182, %182 : vector<48x64xf32>
    %cst_62 = arith.constant dense<0.000000e+00> : vector<48xf32>
    %186 = vector.multi_reduction <add>, %185, %cst_62 [1] : vector<48x64xf32> to vector<48xf32>
    %187 = vector.shape_cast %186 : vector<48xf32> to vector<48x1xf32>
    %cst_63 = arith.constant 6.400000e+01 : f32
    %188 = vector.broadcast %cst_63 : f32 to vector<48x1xf32>
    %189 = arith.divf %187, %188 : vector<48x1xf32>
    %cst_64 = arith.constant 9.99999997E-7 : f32
    %190 = vector.broadcast %cst_64 : f32 to vector<48x1xf32>
    %191 = arith.addf %189, %190 : vector<48x1xf32>
    %192 = math.rsqrt %191 : vector<48x1xf32>
    %193 = vector.broadcast %192 : vector<48x1xf32> to vector<48x64xf32>
    %194 = arith.mulf %182, %193 : vector<48x64xf32>
    %195 = vector.broadcast %184 : vector<1x64xf32> to vector<48x64xf32>
    %196 = arith.mulf %194, %195 : vector<48x64xf32>
    %197 = arith.truncf %196 : vector<48x64xf32> to vector<48x64xbf16>
    %c1_65 = arith.constant 1 : index
    %c0_66 = arith.constant 0 : index
    %c0_67 = arith.constant 0 : index
    %198 = vector.load %arg5[%c1_65, %c0_66, %c0_67] : memref<2x64x192xbf16, #tpu.memory_space<vmem>>, vector<1x64x192xbf16>
    %199 = vector.shape_cast %198 : vector<1x64x192xbf16> to vector<64x192xbf16>
    %cst_68 = arith.constant dense<0.000000e+00> : vector<48x192xf32>
    %200 = tpu.matmul %197, %199, %cst_68 {dimension_numbers = #tpu.dot_dimension_numbers<[1], [0], [0], [1], [0, 0, 1, 1], [], []>} : vector<48x64xbf16>, vector<64x192xbf16>, vector<48x192xf32> -> vector<48x192xf32>
    %201 = arith.truncf %200 : vector<48x192xf32> to vector<48x192xbf16>
    %202 = vector.extract_strided_slice %201 {offsets = [0, 0], sizes = [48, 64], strides = [1, 1]} : vector<48x192xbf16> to vector<48x64xbf16>
    %203 = vector.extract_strided_slice %201 {offsets = [0, 64], sizes = [48, 64], strides = [1, 1]} : vector<48x192xbf16> to vector<48x64xbf16>
    %204 = vector.extract_strided_slice %201 {offsets = [0, 128], sizes = [48, 64], strides = [1, 1]} : vector<48x192xbf16> to vector<48x64xbf16>
    %cst_69 = arith.constant dense<0.000000e+00> : vector<48x48xf32>
    %205 = tpu.matmul %202, %203, %cst_69 {dimension_numbers = #tpu.dot_dimension_numbers<[1], [1], [0], [0], [0, 0, 1, 0], [], []>} : vector<48x64xbf16>, vector<48x64xbf16>, vector<48x48xf32> -> vector<48x48xf32>
    %cst_70 = arith.constant 1.250000e-01 : f32
    %206 = vector.broadcast %cst_70 : f32 to vector<48x48xf32>
    %207 = arith.mulf %205, %206 : vector<48x48xf32>
    %cst_71 = arith.constant -1.000000e+30 : f32
    %208 = vector.broadcast %cst_71 : f32 to vector<48x48xf32>
    %209 = arith.select %99, %207, %208 : vector<48x48xi1>, vector<48x48xf32>
    %cst_72 = arith.constant dense<0xFF800000> : vector<48xf32>
    %210 = vector.multi_reduction <maximumf>, %209, %cst_72 [1] : vector<48x48xf32> to vector<48xf32>
    %211 = vector.shape_cast %210 : vector<48xf32> to vector<48x1xf32>
    %212 = vector.broadcast %211 : vector<48x1xf32> to vector<48x48xf32>
    %213 = arith.subf %209, %212 : vector<48x48xf32>
    %214 = math.exp %213 : vector<48x48xf32>
    %cst_73 = arith.constant dense<0.000000e+00> : vector<48xf32>
    %215 = vector.multi_reduction <add>, %214, %cst_73 [1] : vector<48x48xf32> to vector<48xf32>
    %216 = vector.shape_cast %215 : vector<48xf32> to vector<48x1xf32>
    %217 = tpu.reciprocal %216 {approx = true} : vector<48x1xf32> -> vector<48x1xf32>
    %218 = vector.broadcast %217 : vector<48x1xf32> to vector<48x48xf32>
    %219 = arith.mulf %214, %218 : vector<48x48xf32>
    %220 = arith.truncf %219 : vector<48x48xf32> to vector<48x48xbf16>
    %cst_74 = arith.constant dense<0.000000e+00> : vector<48x64xf32>
    %221 = tpu.matmul %220, %204, %cst_74 {dimension_numbers = #tpu.dot_dimension_numbers<[1], [0], [0], [1], [0, 0, 1, 1], [], []>} : vector<48x48xbf16>, vector<48x64xbf16>, vector<48x64xf32> -> vector<48x64xf32>
    %222 = arith.truncf %221 : vector<48x64xf32> to vector<48x64xbf16>
    %c1_75 = arith.constant 1 : index
    %c0_76 = arith.constant 0 : index
    %c0_77 = arith.constant 0 : index
    %223 = vector.load %arg6[%c1_75, %c0_76, %c0_77] : memref<2x64x64xbf16, #tpu.memory_space<vmem>>, vector<1x64x64xbf16>
    %224 = vector.shape_cast %223 : vector<1x64x64xbf16> to vector<64x64xbf16>
    %cst_78 = arith.constant dense<0.000000e+00> : vector<48x64xf32>
    %225 = tpu.matmul %222, %224, %cst_78 {dimension_numbers = #tpu.dot_dimension_numbers<[1], [0], [0], [1], [0, 0, 1, 1], [], []>} : vector<48x64xbf16>, vector<64x64xbf16>, vector<48x64xf32> -> vector<48x64xf32>
    %226 = arith.addf %182, %225 : vector<48x64xf32>
    %c1_79 = arith.constant 1 : index
    %c0_80 = arith.constant 0 : index
    %c0_81 = arith.constant 0 : index
    %227 = vector.load %arg7[%c1_79, %c0_80, %c0_81] : memref<2x1x64xf32, #tpu.memory_space<vmem>>, vector<1x1x64xf32>
    %228 = vector.shape_cast %227 : vector<1x1x64xf32> to vector<1x64xf32>
    %229 = arith.mulf %226, %226 : vector<48x64xf32>
    %cst_82 = arith.constant dense<0.000000e+00> : vector<48xf32>
    %230 = vector.multi_reduction <add>, %229, %cst_82 [1] : vector<48x64xf32> to vector<48xf32>
    %231 = vector.shape_cast %230 : vector<48xf32> to vector<48x1xf32>
    %cst_83 = arith.constant 6.400000e+01 : f32
    %232 = vector.broadcast %cst_83 : f32 to vector<48x1xf32>
    %233 = arith.divf %231, %232 : vector<48x1xf32>
    %cst_84 = arith.constant 9.99999997E-7 : f32
    %234 = vector.broadcast %cst_84 : f32 to vector<48x1xf32>
    %235 = arith.addf %233, %234 : vector<48x1xf32>
    %236 = math.rsqrt %235 : vector<48x1xf32>
    %237 = vector.broadcast %236 : vector<48x1xf32> to vector<48x64xf32>
    %238 = arith.mulf %226, %237 : vector<48x64xf32>
    %239 = vector.broadcast %228 : vector<1x64xf32> to vector<48x64xf32>
    %240 = arith.mulf %238, %239 : vector<48x64xf32>
    %241 = arith.truncf %240 : vector<48x64xf32> to vector<48x64xbf16>
    %c1_85 = arith.constant 1 : index
    %c0_86 = arith.constant 0 : index
    %c0_87 = arith.constant 0 : index
    %242 = vector.load %arg8[%c1_85, %c0_86, %c0_87] : memref<2x64x256xbf16, #tpu.memory_space<vmem>>, vector<1x64x256xbf16>
    %243 = vector.shape_cast %242 : vector<1x64x256xbf16> to vector<64x256xbf16>
    %cst_88 = arith.constant dense<0.000000e+00> : vector<48x256xf32>
    %244 = tpu.matmul %241, %243, %cst_88 {dimension_numbers = #tpu.dot_dimension_numbers<[1], [0], [0], [1], [0, 0, 1, 1], [], []>} : vector<48x64xbf16>, vector<64x256xbf16>, vector<48x256xf32> -> vector<48x256xf32>
    %245 = vector.extract_strided_slice %244 {offsets = [0, 0], sizes = [48, 128], strides = [1, 1]} : vector<48x256xf32> to vector<48x128xf32>
    %246 = arith.mulf %245, %245 : vector<48x128xf32>
    %247 = arith.mulf %245, %246 : vector<48x128xf32>
    %cst_89 = arith.constant 4.471500e-02 : f32
    %248 = vector.broadcast %cst_89 : f32 to vector<48x128xf32>
    %249 = arith.mulf %248, %247 : vector<48x128xf32>
    %250 = arith.addf %245, %249 : vector<48x128xf32>
    %cst_90 = arith.constant 0.797884583 : f32
    %251 = vector.broadcast %cst_90 : f32 to vector<48x128xf32>
    %252 = arith.mulf %251, %250 : vector<48x128xf32>
    %253 = math.tanh %252 : vector<48x128xf32>
    %cst_91 = arith.constant 1.000000e+00 : f32
    %254 = vector.broadcast %cst_91 : f32 to vector<48x128xf32>
    %255 = arith.addf %254, %253 : vector<48x128xf32>
    %cst_92 = arith.constant 5.000000e-01 : f32
    %256 = vector.broadcast %cst_92 : f32 to vector<48x128xf32>
    %257 = arith.mulf %256, %255 : vector<48x128xf32>
    %258 = arith.mulf %245, %257 : vector<48x128xf32>
    %259 = vector.extract_strided_slice %244 {offsets = [0, 128], sizes = [48, 128], strides = [1, 1]} : vector<48x256xf32> to vector<48x128xf32>
    %260 = arith.mulf %258, %259 : vector<48x128xf32>
    %261 = arith.truncf %260 : vector<48x128xf32> to vector<48x128xbf16>
    %c1_93 = arith.constant 1 : index
    %c0_94 = arith.constant 0 : index
    %c0_95 = arith.constant 0 : index
    %262 = vector.load %arg9[%c1_93, %c0_94, %c0_95] : memref<2x128x64xbf16, #tpu.memory_space<vmem>>, vector<1x128x64xbf16>
    %263 = vector.shape_cast %262 : vector<1x128x64xbf16> to vector<128x64xbf16>
    %cst_96 = arith.constant dense<0.000000e+00> : vector<48x64xf32>
    %264 = tpu.matmul %261, %263, %cst_96 {dimension_numbers = #tpu.dot_dimension_numbers<[1], [0], [0], [1], [0, 0, 1, 1], [], []>} : vector<48x128xbf16>, vector<128x64xbf16>, vector<48x64xf32> -> vector<48x64xf32>
    %265 = arith.addf %226, %264 : vector<48x64xf32>
    %c0_97 = arith.constant 0 : index
    %c0_98 = arith.constant 0 : index
    %266 = vector.load %arg10[%c0_97, %c0_98] : memref<1x64xf32, #tpu.memory_space<vmem>>, vector<1x64xf32>
    %267 = arith.mulf %265, %265 : vector<48x64xf32>
    %cst_99 = arith.constant dense<0.000000e+00> : vector<48xf32>
    %268 = vector.multi_reduction <add>, %267, %cst_99 [1] : vector<48x64xf32> to vector<48xf32>
    %269 = vector.shape_cast %268 : vector<48xf32> to vector<48x1xf32>
    %cst_100 = arith.constant 6.400000e+01 : f32
    %270 = vector.broadcast %cst_100 : f32 to vector<48x1xf32>
    %271 = arith.divf %269, %270 : vector<48x1xf32>
    %cst_101 = arith.constant 9.99999997E-7 : f32
    %272 = vector.broadcast %cst_101 : f32 to vector<48x1xf32>
    %273 = arith.addf %271, %272 : vector<48x1xf32>
    %274 = math.rsqrt %273 : vector<48x1xf32>
    %275 = vector.broadcast %274 : vector<48x1xf32> to vector<48x64xf32>
    %276 = arith.mulf %265, %275 : vector<48x64xf32>
    %277 = vector.broadcast %266 : vector<1x64xf32> to vector<48x64xf32>
    %278 = arith.mulf %276, %277 : vector<48x64xf32>
    %279 = arith.truncf %278 : vector<48x64xf32> to vector<48x64xbf16>
    %c0_102 = arith.constant 0 : index
    %c0_103 = arith.constant 0 : index
    %280 = vector.load %arg11[%c0_102, %c0_103] : memref<64x512xbf16, #tpu.memory_space<vmem>>, vector<64x512xbf16>
    %cst_104 = arith.constant dense<0.000000e+00> : vector<48x512xf32>
    %281 = tpu.matmul %279, %280, %cst_104 {dimension_numbers = #tpu.dot_dimension_numbers<[1], [0], [0], [1], [0, 0, 1, 1], [], []>} : vector<48x64xbf16>, vector<64x512xbf16>, vector<48x512xf32> -> vector<48x512xf32>
    %c0_105 = arith.constant 0 : index
    %c0_106 = arith.constant 0 : index
    %282 = vector.load %arg12[%c0_105, %c0_106] : memref<48x512xf32, #tpu.memory_space<vmem>>, vector<48x512xf32>
    tpu.vector_store %arg12[%c0_105, %c0_106], %281 {strides = array<i32>} : memref<48x512xf32, #tpu.memory_space<vmem>>, vector<48x512xf32>,
    return
  }
  func.func @transform_0(%arg0: i32) -> (i32, i32) {
    %c0_i32 = arith.constant 0 : i32
    %c0_i32_0 = arith.constant 0 : i32
    %c0_i32_1 = arith.constant 0 : i32
    return %c0_i32, %c0_i32_0 : i32, i32
  }
  func.func @transform_1(%arg0: i32) -> (i32, i32) {
    %c0_i32 = arith.constant 0 : i32
    %c0_i32_0 = arith.constant 0 : i32
    %c0_i32_1 = arith.constant 0 : i32
    return %c0_i32, %c0_i32_0 : i32, i32
  }
  func.func @transform_2(%arg0: i32) -> (i32, i32) {
    %c0_i32 = arith.constant 0 : i32
    %c0_i32_0 = arith.constant 0 : i32
    %c0_i32_1 = arith.constant 0 : i32
    return %c0_i32, %c0_i32_0 : i32, i32
  }
  func.func @transform_3(%arg0: i32) -> (i32, i32, i32) {
    %c0_i32 = arith.constant 0 : i32
    %c0_i32_0 = arith.constant 0 : i32
    %c0_i32_1 = arith.constant 0 : i32
    %c0_i32_2 = arith.constant 0 : i32
    return %c0_i32, %c0_i32_0, %c0_i32_1 : i32, i32, i32
  }
  func.func @transform_4(%arg0: i32) -> (i32, i32, i32) {
    %c0_i32 = arith.constant 0 : i32
    %c0_i32_0 = arith.constant 0 : i32
    %c0_i32_1 = arith.constant 0 : i32
    %c0_i32_2 = arith.constant 0 : i32
    return %c0_i32, %c0_i32_0, %c0_i32_1 : i32, i32, i32
  }
  func.func @transform_5(%arg0: i32) -> (i32, i32, i32) {
    %c0_i32 = arith.constant 0 : i32
    %c0_i32_0 = arith.constant 0 : i32
    %c0_i32_1 = arith.constant 0 : i32
    %c0_i32_2 = arith.constant 0 : i32
    return %c0_i32, %c0_i32_0, %c0_i32_1 : i32, i32, i32
  }
  func.func @transform_6(%arg0: i32) -> (i32, i32, i32) {
    %c0_i32 = arith.constant 0 : i32
    %c0_i32_0 = arith.constant 0 : i32
    %c0_i32_1 = arith.constant 0 : i32
    %c0_i32_2 = arith.constant 0 : i32
    return %c0_i32, %c0_i32_0, %c0_i32_1 : i32, i32, i32
  }
  func.func @transform_7(%arg0: i32) -> (i32, i32, i32) {
    %c0_i32 = arith.constant 0 : i32
    %c0_i32_0 = arith.constant 0 : i32
    %c0_i32_1 = arith.constant 0 : i32
    %c0_i32_2 = arith.constant 0 : i32
    return %c0_i32, %c0_i32_0, %c0_i32_1 : i32, i32, i32
  }
  func.func @transform_8(%arg0: i32) -> (i32, i32, i32) {
    %c0_i32 = arith.constant 0 : i32
    %c0_i32_0 = arith.constant 0 : i32
    %c0_i32_1 = arith.constant 0 : i32
    %c0_i32_2 = arith.constant 0 : i32
    return %c0_i32, %c0_i32_0, %c0_i32_1 : i32, i32, i32
  }
  func.func @transform_9(%arg0: i32) -> (i32, i32) {
    %c0_i32 = arith.constant 0 : i32
    %c0_i32_0 = arith.constant 0 : i32
    %c0_i32_1 = arith.constant 0 : i32
    return %c0_i32, %c0_i32_0 : i32, i32
  }
  func.func @transform_10(%arg0: i32) -> (i32, i32) {
    %c0_i32 = arith.constant 0 : i32
    %c0_i32_0 = arith.constant 0 : i32
    %c0_i32_1 = arith.constant 0 : i32
    return %c0_i32, %c0_i32_0 : i32, i32
  }
  func.func @transform_11(%arg0: i32) -> (i32, i32) {
    %c0_i32 = arith.constant 0 : i32
    %c0_i32_0 = arith.constant 0 : i32
    %c0_i32_1 = arith.constant 0 : i32
    return %c0_i32, %c0_i32_0 : i32, i32
  }
}

</mosaic_0001>

<llo_original>
// kernel: prefix_tuning_forward.1
$region0: #{prefix_tuning_forward.1}
  #allocation0 [shape = 'u32[]', space=smem, size = 0x4, offset = 0x4, fixed_abs, tag = 'smem constant byte address 0x4 - core index']
  #allocation1 [shape = 'u32[72,128]{1,0:T(1,128)}', space=vmem, size = 0x9000, scoped, tag = 'internal scratch']
  %s0 = inlined_call_operand.vmem [shape: s32[48,1], index: 0, kind: input, shape index: {}]
  %s1 = inlined_call_operand.vmem [shape: f32[4,64], index: 1, kind: input, shape index: {}]
  %s2 = inlined_call_operand.vmem [shape: f32[512,64], index: 2, kind: input, shape index: {}]
  %s3 = inlined_call_operand.vmem [shape: f32[2,1,64], index: 3, kind: input, shape index: {}]
  %s4 = inlined_call_operand.vmem [shape: bf16[2,64,192], index: 4, kind: input, shape index: {}]
  %s5 = inlined_call_operand.vmem [shape: bf16[2,64,64], index: 5, kind: input, shape index: {}]
  %s6 = inlined_call_operand.vmem [shape: f32[2,1,64], index: 6, kind: input, shape index: {}]
  %s7 = inlined_call_operand.vmem [shape: bf16[2,64,256], index: 7, kind: input, shape index: {}]
  %s8 = inlined_call_operand.vmem [shape: bf16[2,128,64], index: 8, kind: input, shape index: {}]
  %s9 = inlined_call_operand.vmem [shape: f32[1,64], index: 9, kind: input, shape index: {}]
  %s10 = inlined_call_operand.vmem [shape: bf16[64,512], index: 10, kind: input, shape index: {}]
  %s11 = inlined_call_operand.vmem [shape: f32[48,512], index: 11, kind: output, shape index: {}]
  %s12 = sld [smem:[#allocation0]]
  $region54: #{prefix_tuning_forward.1} parent=0
    _
  %s14 = ssub.s32 1, %s12
  %s15 = scalar_select 0, %s14, %s12
  // Predicated region
  $region2: #{prefix_tuning_forward.1} parent=0 // pred_check
    _
  $region3: #{prefix_tuning_forward.1} parent=0 // pred_check_branch
    %17 = sbr.rel (0) target = $region5
  $region4: #{prefix_tuning_forward.1} parent=0 // pred_region
    _
  $region5: #{prefix_tuning_forward.1} parent=0 // pred_fallthru
    _
  // Predicated region
  $region6: #{prefix_tuning_forward.1} parent=0 // pred_check
    _
  $region7: #{prefix_tuning_forward.1} parent=0 // pred_check_branch
    %19 = sbr.rel (0) target = $region9
  $region8: #{prefix_tuning_forward.1} parent=0 // pred_region
    _
  $region9: #{prefix_tuning_forward.1} parent=0 // pred_fallthru
    _
  // Predicated region
  $region10: #{prefix_tuning_forward.1} parent=0 // pred_check
    _
  $region11: #{prefix_tuning_forward.1} parent=0 // pred_check_branch
    %21 = sbr.rel (0) target = $region13
  $region12: #{prefix_tuning_forward.1} parent=0 // pred_region
    _
  $region13: #{prefix_tuning_forward.1} parent=0 // pred_fallthru
    _
  // Predicated region
  $region14: #{prefix_tuning_forward.1} parent=0 // pred_check
    _
  $region15: #{prefix_tuning_forward.1} parent=0 // pred_check_branch
    %23 = sbr.rel (0) target = $region17
  $region16: #{prefix_tuning_forward.1} parent=0 // pred_region
    _
  $region17: #{prefix_tuning_forward.1} parent=0 // pred_fallthru
    _
  // Predicated region
  $region18: #{prefix_tuning_forward.1} parent=0 // pred_check
    _
  $region19: #{prefix_tuning_forward.1} parent=0 // pred_check_branch
    %25 = sbr.rel (0) target = $region21
  $region20: #{prefix_tuning_forward.1} parent=0 // pred_region
    _
  $region21: #{prefix_tuning_forward.1} parent=0 // pred_fallthru
    _
  // Predicated region
  $region22: #{prefix_tuning_forward.1} parent=0 // pred_check
    _
  $region23: #{prefix_tuning_forward.1} parent=0 // pred_check_branch
    %27 = sbr.rel (0) target = $region25
  $region24: #{prefix_tuning_forward.1} parent=0 // pred_region
    _
  $region25: #{prefix_tuning_forward.1} parent=0 // pred_fallthru
    _
  // Predicated region
  $region26: #{prefix_tuning_forward.1} parent=0 // pred_check
    _
  $region27: #{prefix_tuning_forward.1} parent=0 // pred_check_branch
    %29 = sbr.rel (0) target = $region29
  $region28: #{prefix_tuning_forward.1} parent=0 // pred_region
    _
  $region29: #{prefix_tuning_forward.1} parent=0 // pred_fallthru
    _
  // Predicated region
  $region30: #{prefix_tuning_forward.1} parent=0 // pred_check
    _
  $region31: #{prefix_tuning_forward.1} parent=0 // pred_check_branch
    %31 = sbr.rel (0) target = $region33
  $region32: #{prefix_tuning_forward.1} parent=0 // pred_region
    _
  $region33: #{prefix_tuning_forward.1} parent=0 // pred_fallthru
    _
  // Predicated region
  $region34: #{prefix_tuning_forward.1} parent=0 // pred_check
    _
  $region35: #{prefix_tuning_forward.1} parent=0 // pred_check_branch
    %33 = sbr.rel (0) target = $region37
  $region36: #{prefix_tuning_forward.1} parent=0 // pred_region
    _
  $region37: #{prefix_tuning_forward.1} parent=0 // pred_fallthru
    _
  // Predicated region
  $region38: #{prefix_tuning_forward.1} parent=0 // pred_check
    _
  $region39: #{prefix_tuning_forward.1} parent=0 // pred_check_branch
    %35 = sbr.rel (0) target = $region41
  $region40: #{prefix_tuning_forward.1} parent=0 // pred_region
    _
  $region41: #{prefix_tuning_forward.1} parent=0 // pred_fallthru
    _
  // Predicated region
  $region42: #{prefix_tuning_forward.1} parent=0 // pred_check
    _
  $region43: #{prefix_tuning_forward.1} parent=0 // pred_check_branch
    %37 = sbr.rel (0) target = $region45
  $region44: #{prefix_tuning_forward.1} parent=0 // pred_region
    _
  $region45: #{prefix_tuning_forward.1} parent=0 // pred_fallthru
    _
  %v39 = vld [vmem:[%s0] sm:$0xff]
  %v40 = vld [vmem:[%s0 + $0x8] sm:$0xff]
  %v41 = vld [vmem:[%s0 + $0x10] sm:$0xff]
  %v42 = vld [vmem:[%s0 + $0x18] sm:$0xff]
  %v43 = vld [vmem:[%s0 + $0x20] sm:$0xff]
  %v44 = vld [vmem:[%s0 + $0x28] sm:$0xff]
  %v45 = vlaneseq
  %v46 = vand.u32 %v45, 127
  %v47 = vadd.s32 %v46, 128
  %v48 = vadd.s32 %v46, 256
  %v49 = vadd.s32 %v46, 384
  %50 = vset.pattern.permute.xlu0 0
  %51 = vperm.xlu0 %50, %v39
  %v52 = vpop.permute.xlu0 %51
  %53 = vset.pattern.permute.xlu0 0
  %54 = vperm.xlu0 %53, %v40
  %v55 = vpop.permute.xlu0 %54
  %56 = vset.pattern.permute.xlu0 0
  %57 = vperm.xlu0 %56, %v41
  %v58 = vpop.permute.xlu0 %57
  %59 = vset.pattern.permute.xlu0 0
  %60 = vperm.xlu0 %59, %v42
  %v61 = vpop.permute.xlu0 %60
  %62 = vset.pattern.permute.xlu0 0
  %63 = vperm.xlu0 %62, %v43
  %v64 = vpop.permute.xlu0 %63
  %65 = vset.pattern.permute.xlu0 0
  %66 = vperm.xlu0 %65, %v44
  %v67 = vpop.permute.xlu0 %66
  %vm68 = vcmp.eq.s32.totalorder %v46, %v52
  %vm69 = vcmp.eq.s32.totalorder %v47, %v52
  %vm70 = vcmp.eq.s32.totalorder %v48, %v52
  %vm71 = vcmp.eq.s32.totalorder %v49, %v52
  %vm72 = vcmp.eq.s32.totalorder %v46, %v55
  %vm73 = vcmp.eq.s32.totalorder %v47, %v55
  %vm74 = vcmp.eq.s32.totalorder %v48, %v55
  %vm75 = vcmp.eq.s32.totalorder %v49, %v55
  %vm76 = vcmp.eq.s32.totalorder %v46, %v58
  %vm77 = vcmp.eq.s32.totalorder %v47, %v58
  %vm78 = vcmp.eq.s32.totalorder %v48, %v58
  %vm79 = vcmp.eq.s32.totalorder %v49, %v58
  %vm80 = vcmp.eq.s32.totalorder %v46, %v61
  %vm81 = vcmp.eq.s32.totalorder %v47, %v61
  %vm82 = vcmp.eq.s32.totalorder %v48, %v61
  %vm83 = vcmp.eq.s32.totalorder %v49, %v61
  %vm84 = vcmp.eq.s32.totalorder %v46, %v64
  %vm85 = vcmp.eq.s32.totalorder %v47, %v64
  %vm86 = vcmp.eq.s32.totalorder %v48, %v64
  %vm87 = vcmp.eq.s32.totalorder %v49, %v64
  %vm88 = vcmp.eq.s32.totalorder %v46, %v67
  %vm89 = vcmp.eq.s32.totalorder %v47, %v67
  %vm90 = vcmp.eq.s32.totalorder %v48, %v67
  %vm91 = vcmp.eq.s32.totalorder %v49, %v67
  %v92 = vsel %vm68, 1, 0
  %v93 = vsel %vm69, 1, 0
  %v94 = vsel %vm70, 1, 0
  %v95 = vsel %vm71, 1, 0
  %v96 = vsel %vm72, 1, 0
  %v97 = vsel %vm73, 1, 0
  %v98 = vsel %vm74, 1, 0
  %v99 = vsel %vm75, 1, 0
  %v100 = vsel %vm76, 1, 0
  %v101 = vsel %vm77, 1, 0
  %v102 = vsel %vm78, 1, 0
  %v103 = vsel %vm79, 1, 0
  %v104 = vsel %vm80, 1, 0
  %v105 = vsel %vm81, 1, 0
  %v106 = vsel %vm82, 1, 0
  %v107 = vsel %vm83, 1, 0
  %v108 = vsel %vm84, 1, 0
  %v109 = vsel %vm85, 1, 0
  %v110 = vsel %vm86, 1, 0
  %v111 = vsel %vm87, 1, 0
  %v112 = vsel %vm88, 1, 0
  %v113 = vsel %vm89, 1, 0
  %v114 = vsel %vm90, 1, 0
  %v115 = vsel %vm91, 1, 0
  %v116 = vcvt.s32.f32 %v92
  %v117 = vcvt.s32.f32 %v93
  %v118 = vcvt.s32.f32 %v94
  %v119 = vcvt.s32.f32 %v95
  %v120 = vcvt.s32.f32 %v96
  %v121 = vcvt.s32.f32 %v97
  %v122 = vcvt.s32.f32 %v98
  %v123 = vcvt.s32.f32 %v99
  %v124 = vcvt.s32.f32 %v100
  %v125 = vcvt.s32.f32 %v101
  %v126 = vcvt.s32.f32 %v102
  %v127 = vcvt.s32.f32 %v103
  %v128 = vcvt.s32.f32 %v104
  %v129 = vcvt.s32.f32 %v105
  %v130 = vcvt.s32.f32 %v106
  %v131 = vcvt.s32.f32 %v107
  %v132 = vcvt.s32.f32 %v108
  %v133 = vcvt.s32.f32 %v109
  %v134 = vcvt.s32.f32 %v110
  %v135 = vcvt.s32.f32 %v111
  %v136 = vcvt.s32.f32 %v112
  %v137 = vcvt.s32.f32 %v113
  %v138 = vcvt.s32.f32 %v114
  %v139 = vcvt.s32.f32 %v115
  %v140 = vld [vmem:[%s2] sm:$0xff]
  %v141 = vld [vmem:[%s2 + $0x8] sm:$0xff]
  %v142 = vld [vmem:[%s2 + $0x10] sm:$0xff]
  %v143 = vld [vmem:[%s2 + $0x18] sm:$0xff]
  %v144 = vld [vmem:[%s2 + $0x20] sm:$0xff]
  %v145 = vld [vmem:[%s2 + $0x28] sm:$0xff]
  %v146 = vld [vmem:[%s2 + $0x30] sm:$0xff]
  %v147 = vld [vmem:[%s2 + $0x38] sm:$0xff]
  %v148 = vld [vmem:[%s2 + $0x40] sm:$0xff]
  %v149 = vld [vmem:[%s2 + $0x48] sm:$0xff]
  %v150 = vld [vmem:[%s2 + $0x50] sm:$0xff]
  %v151 = vld [vmem:[%s2 + $0x58] sm:$0xff]
  %v152 = vld [vmem:[%s2 + $0x60] sm:$0xff]
  %v153 = vld [vmem:[%s2 + $0x68] sm:$0xff]
  %v154 = vld [vmem:[%s2 + $0x70] sm:$0xff]
  %v155 = vld [vmem:[%s2 + $0x78] sm:$0xff]
  %v156 = vld [vmem:[%s2 + $0x80] sm:$0xff]
  %v157 = vld [vmem:[%s2 + $0x88] sm:$0xff]
  %v158 = vld [vmem:[%s2 + $0x90] sm:$0xff]
  %v159 = vld [vmem:[%s2 + $0x98] sm:$0xff]
  %v160 = vld [vmem:[%s2 + $0xa0] sm:$0xff]
  %v161 = vld [vmem:[%s2 + $0xa8] sm:$0xff]
  %v162 = vld [vmem:[%s2 + $0xb0] sm:$0xff]
  %v163 = vld [vmem:[%s2 + $0xb8] sm:$0xff]
  %v164 = vld [vmem:[%s2 + $0xc0] sm:$0xff]
  %v165 = vld [vmem:[%s2 + $0xc8] sm:$0xff]
  %v166 = vld [vmem:[%s2 + $0xd0] sm:$0xff]
  %v167 = vld [vmem:[%s2 + $0xd8] sm:$0xff]
  %v168 = vld [vmem:[%s2 + $0xe0] sm:$0xff]
  %v169 = vld [vmem:[%s2 + $0xe8] sm:$0xff]
  %v170 = vld [vmem:[%s2 + $0xf0] sm:$0xff]
  %v171 = vld [vmem:[%s2 + $0xf8] sm:$0xff]
  %v172 = vld [vmem:[%s2 + $0x100] sm:$0xff]
  %v173 = vld [vmem:[%s2 + $0x108] sm:$0xff]
  %v174 = vld [vmem:[%s2 + $0x110] sm:$0xff]
  %v175 = vld [vmem:[%s2 + $0x118] sm:$0xff]
  %v176 = vld [vmem:[%s2 + $0x120] sm:$0xff]
  %v177 = vld [vmem:[%s2 + $0x128] sm:$0xff]
  %v178 = vld [vmem:[%s2 + $0x130] sm:$0xff]
  %v179 = vld [vmem:[%s2 + $0x138] sm:$0xff]
  %v180 = vld [vmem:[%s2 + $0x140] sm:$0xff]
  %v181 = vld [vmem:[%s2 + $0x148] sm:$0xff]
  %v182 = vld [vmem:[%s2 + $0x150] sm:$0xff]
  %v183 = vld [vmem:[%s2 + $0x158] sm:$0xff]
  %v184 = vld [vmem:[%s2 + $0x160] sm:$0xff]
  %v185 = vld [vmem:[%s2 + $0x168] sm:$0xff]
  %v186 = vld [vmem:[%s2 + $0x170] sm:$0xff]
  %v187 = vld [vmem:[%s2 + $0x178] sm:$0xff]
  %v188 = vld [vmem:[%s2 + $0x180] sm:$0xff]
  %v189 = vld [vmem:[%s2 + $0x188] sm:$0xff]
  %v190 = vld [vmem:[%s2 + $0x190] sm:$0xff]
  %v191 = vld [vmem:[%s2 + $0x198] sm:$0xff]
  %v192 = vld [vmem:[%s2 + $0x1a0] sm:$0xff]
  %v193 = vld [vmem:[%s2 + $0x1a8] sm:$0xff]
  %v194 = vld [vmem:[%s2 + $0x1b0] sm:$0xff]
  %v195 = vld [vmem:[%s2 + $0x1b8] sm:$0xff]
  %v196 = vld [vmem:[%s2 + $0x1c0] sm:$0xff]
  %v197 = vld [vmem:[%s2 + $0x1c8] sm:$0xff]
  %v198 = vld [vmem:[%s2 + $0x1d0] sm:$0xff]
  %v199 = vld [vmem:[%s2 + $0x1d8] sm:$0xff]
  %v200 = vld [vmem:[%s2 + $0x1e0] sm:$0xff]
  %v201 = vld [vmem:[%s2 + $0x1e8] sm:$0xff]
  %v202 = vld [vmem:[%s2 + $0x1f0] sm:$0xff]
  %v203 = vld [vmem:[%s2 + $0x1f8] sm:$0xff]
  %204 = vmatpush.msra.mxu0 %v155
  %205 = vmatpush.msra.mxu0 %v154
  %206 = vmatpush.msra.mxu0 %v153
  %207 = vmatpush.msra.mxu0 %v152
  %208 = vmatpush.msra.mxu0 %v151
  %209 = vmatpush.msra.mxu0 %v150
  %210 = vmatpush.msra.mxu0 %v149
  %211 = vmatpush.msra.mxu0 %v148
  %212 = vmatpush.msra.mxu0 %v147
  %213 = vmatpush.msra.mxu0 %v146
  %214 = vmatpush.msra.mxu0 %v145
  %215 = vmatpush.msra.mxu0 %v144
  %216 = vmatpush.msra.mxu0 %v143
  %217 = vmatpush.msra.mxu0 %v142
  %218 = vmatpush.msra.mxu0 %v141
  %219 = vmatpush.msra.mxu0 %v140
  %220 = vmatmul.f32.gmra.mxu0 %v116
  %v221 = vpop.f32.mrf.mxu0
  %v222 = vadd.f32 0.0, %v221
  %223 = vmatmul.f32.gmra.mxu0 %v120
  %v224 = vpop.f32.mrf.mxu0
  %v225 = vadd.f32 0.0, %v224
  %226 = vmatmul.f32.gmra.mxu0 %v124
  %v227 = vpop.f32.mrf.mxu0
  %v228 = vadd.f32 0.0, %v227
  %229 = vmatmul.f32.gmra.mxu0 %v128
  %v230 = vpop.f32.mrf.mxu0
  %v231 = vadd.f32 0.0, %v230
  %232 = vmatmul.f32.gmra.mxu0 %v132
  %v233 = vpop.f32.mrf.mxu0
  %v234 = vadd.f32 0.0, %v233
  %235 = vmatmul.f32.gmra.mxu0 %v136
  %v236 = vpop.f32.mrf.mxu0
  %v237 = vadd.f32 0.0, %v236
  %238 = vdwg.mxu0
  %239 = vmatpush.msra.mxu0 %v171
  %240 = vmatpush.msra.mxu0 %v170
  %241 = vmatpush.msra.mxu0 %v169
  %242 = vmatpush.msra.mxu0 %v168
  %243 = vmatpush.msra.mxu0 %v167
  %244 = vmatpush.msra.mxu0 %v166
  %245 = vmatpush.msra.mxu0 %v165
  %246 = vmatpush.msra.mxu0 %v164
  %247 = vmatpush.msra.mxu0 %v163
  %248 = vmatpush.msra.mxu0 %v162
  %249 = vmatpush.msra.mxu0 %v161
  %250 = vmatpush.msra.mxu0 %v160
  %251 = vmatpush.msra.mxu0 %v159
  %252 = vmatpush.msra.mxu0 %v158
  %253 = vmatpush.msra.mxu0 %v157
  %254 = vmatpush.msra.mxu0 %v156
  %255 = vmatmul.f32.gmra.mxu0 %v117
  %v256 = vpop.f32.mrf.mxu0
  %v257 = vadd.f32 %v222, %v256
  %258 = vmatmul.f32.gmra.mxu0 %v121
  %v259 = vpop.f32.mrf.mxu0
  %v260 = vadd.f32 %v225, %v259
  %261 = vmatmul.f32.gmra.mxu0 %v125
  %v262 = vpop.f32.mrf.mxu0
  %v263 = vadd.f32 %v228, %v262
  %264 = vmatmul.f32.gmra.mxu0 %v129
  %v265 = vpop.f32.mrf.mxu0
  %v266 = vadd.f32 %v231, %v265
  %267 = vmatmul.f32.gmra.mxu0 %v133
  %v268 = vpop.f32.mrf.mxu0
  %v269 = vadd.f32 %v234, %v268
  %270 = vmatmul.f32.gmra.mxu0 %v137
  %v271 = vpop.f32.mrf.mxu0
  %v272 = vadd.f32 %v237, %v271
  %273 = vdwg.mxu0
  %274 = vmatpush.msra.mxu0 %v187
  %275 = vmatpush.msra.mxu0 %v186
  %276 = vmatpush.msra.mxu0 %v185
  %277 = vmatpush.msra.mxu0 %v184
  %278 = vmatpush.msra.mxu0 %v183
  %279 = vmatpush.msra.mxu0 %v182
  %280 = vmatpush.msra.mxu0 %v181
  %281 = vmatpush.msra.mxu0 %v180
  %282 = vmatpush.msra.mxu0 %v179
  %283 = vmatpush.msra.mxu0 %v178
  %284 = vmatpush.msra.mxu0 %v177
  %285 = vmatpush.msra.mxu0 %v176
  %286 = vmatpush.msra.mxu0 %v175
  %287 = vmatpush.msra.mxu0 %v174
  %288 = vmatpush.msra.mxu0 %v173
  %289 = vmatpush.msra.mxu0 %v172
  %290 = vmatmul.f32.gmra.mxu0 %v118
  %v291 = vpop.f32.mrf.mxu0
  %v292 = vadd.f32 %v257, %v291
  %293 = vmatmul.f32.gmra.mxu0 %v122
  %v294 = vpop.f32.mrf.mxu0
  %v295 = vadd.f32 %v260, %v294
  %296 = vmatmul.f32.gmra.mxu0 %v126
  %v297 = vpop.f32.mrf.mxu0
  %v298 = vadd.f32 %v263, %v297
  %299 = vmatmul.f32.gmra.mxu0 %v130
  %v300 = vpop.f32.mrf.mxu0
  %v301 = vadd.f32 %v266, %v300
  %302 = vmatmul.f32.gmra.mxu0 %v134
  %v303 = vpop.f32.mrf.mxu0
  %v304 = vadd.f32 %v269, %v303
  %305 = vmatmul.f32.gmra.mxu0 %v138
  %v306 = vpop.f32.mrf.mxu0
  %v307 = vadd.f32 %v272, %v306
  %308 = vdwg.mxu0
  %309 = vmatpush.msra.mxu0 %v203
  %310 = vmatpush.msra.mxu0 %v202
  %311 = vmatpush.msra.mxu0 %v201
  %312 = vmatpush.msra.mxu0 %v200
  %313 = vmatpush.msra.mxu0 %v199
  %314 = vmatpush.msra.mxu0 %v198
  %315 = vmatpush.msra.mxu0 %v197
  %316 = vmatpush.msra.mxu0 %v196
  %317 = vmatpush.msra.mxu0 %v195
  %318 = vmatpush.msra.mxu0 %v194
  %319 = vmatpush.msra.mxu0 %v193
  %320 = vmatpush.msra.mxu0 %v192
  %321 = vmatpush.msra.mxu0 %v191
  %322 = vmatpush.msra.mxu0 %v190
  %323 = vmatpush.msra.mxu0 %v189
  %324 = vmatpush.msra.mxu0 %v188
  %325 = vmatmul.f32.gmra.mxu0 %v119
  %v326 = vpop.f32.mrf.mxu0
  %v327 = vadd.f32 %v292, %v326
  %328 = vmatmul.f32.gmra.mxu0 %v123
  %v329 = vpop.f32.mrf.mxu0
  %v330 = vadd.f32 %v295, %v329
  %331 = vmatmul.f32.gmra.mxu0 %v127
  %v332 = vpop.f32.mrf.mxu0
  %v333 = vadd.f32 %v298, %v332
  %334 = vmatmul.f32.gmra.mxu0 %v131
  %v335 = vpop.f32.mrf.mxu0
  %v336 = vadd.f32 %v301, %v335
  %337 = vmatmul.f32.gmra.mxu0 %v135
  %v338 = vpop.f32.mrf.mxu0
  %v339 = vadd.f32 %v304, %v338
  %340 = vmatmul.f32.gmra.mxu0 %v139
  %v341 = vpop.f32.mrf.mxu0
  %v342 = vadd.f32 %v307, %v341
  %343 = vdwg.mxu0
  %v344 = vlaneseq
  %v345 = vshrl.u32 %v344, 7
  %v346 = vadd.s32 %v345, 8
  %v347 = vadd.s32 %v345, 16
  %v348 = vadd.s32 %v345, 24
  %v349 = vadd.s32 %v345, 32
  %v350 = vadd.s32 %v345, 40
  %vm351 = vcmp.eq.s32.totalorder %v345, 4
  %vm352 = vcmp.eq.s32.totalorder %v346, 4
  %vm353 = vcmp.eq.s32.totalorder %v347, 4
  %vm354 = vcmp.eq.s32.totalorder %v348, 4
  %vm355 = vcmp.eq.s32.totalorder %v349, 4
  %vm356 = vcmp.eq.s32.totalorder %v350, 4
  %v357 = vld [vmem:[%s1] sm:$0x1]
  %v358 = vsel %vm351, 1, 0
  %v359 = vsel %vm352, 1, 0
  %v360 = vsel %vm353, 1, 0
  %v361 = vsel %vm354, 1, 0
  %v362 = vsel %vm355, 1, 0
  %v363 = vsel %vm356, 1, 0
  %vm364 = vcmp.eq.s32.totalorder %v358, 1
  %vm365 = vcmp.eq.s32.totalorder %v359, 1
  %vm366 = vcmp.eq.s32.totalorder %v360, 1
  %vm367 = vcmp.eq.s32.totalorder %v361, 1
  %vm368 = vcmp.eq.s32.totalorder %v362, 1
  %vm369 = vcmp.eq.s32.totalorder %v363, 1
  %v370 = vperm.slane %v357, 0
  %v371 = vsel %vm364, %v370, %v327
  %v372 = vsel %vm365, %v370, %v330
  %v373 = vsel %vm366, %v370, %v333
  %v374 = vsel %vm367, %v370, %v336
  %v375 = vsel %vm368, %v370, %v339
  %v376 = vsel %vm369, %v370, %v342
  %vm377 = vcmp.eq.s32.totalorder %v345, 5
  %vm378 = vcmp.eq.s32.totalorder %v346, 5
  %vm379 = vcmp.eq.s32.totalorder %v347, 5
  %vm380 = vcmp.eq.s32.totalorder %v348, 5
  %vm381 = vcmp.eq.s32.totalorder %v349, 5
  %vm382 = vcmp.eq.s32.totalorder %v350, 5
  %v383 = vld [vmem:[%s1 + $0x1] sm:$0x1]
  %v384 = vsel %vm377, 1, 0
  %v385 = vsel %vm378, 1, 0
  %v386 = vsel %vm379, 1, 0
  %v387 = vsel %vm380, 1, 0
  %v388 = vsel %vm381, 1, 0
  %v389 = vsel %vm382, 1, 0
  %vm390 = vcmp.eq.s32.totalorder %v384, 1
  %vm391 = vcmp.eq.s32.totalorder %v385, 1
  %vm392 = vcmp.eq.s32.totalorder %v386, 1
  %vm393 = vcmp.eq.s32.totalorder %v387, 1
  %vm394 = vcmp.eq.s32.totalorder %v388, 1
  %vm395 = vcmp.eq.s32.totalorder %v389, 1
  %v396 = vperm.slane %v383, 0
  %v397 = vsel %vm390, %v396, %v371
  %v398 = vsel %vm391, %v396, %v372
  %v399 = vsel %vm392, %v396, %v373
  %v400 = vsel %vm393, %v396, %v374
  %v401 = vsel %vm394, %v396, %v375
  %v402 = vsel %vm395, %v396, %v376
  %vm403 = vcmp.eq.s32.totalorder %v345, 6
  %vm404 = vcmp.eq.s32.totalorder %v346, 6
  %vm405 = vcmp.eq.s32.totalorder %v347, 6
  %vm406 = vcmp.eq.s32.totalorder %v348, 6
  %vm407 = vcmp.eq.s32.totalorder %v349, 6
  %vm408 = vcmp.eq.s32.totalorder %v350, 6
  %v409 = vld [vmem:[%s1 + $0x2] sm:$0x1]
  %v410 = vsel %vm403, 1, 0
  %v411 = vsel %vm404, 1, 0
  %v412 = vsel %vm405, 1, 0
  %v413 = vsel %vm406, 1, 0
  %v414 = vsel %vm407, 1, 0
  %v415 = vsel %vm408, 1, 0
  %vm416 = vcmp.eq.s32.totalorder %v410, 1
  %vm417 = vcmp.eq.s32.totalorder %v411, 1
  %vm418 = vcmp.eq.s32.totalorder %v412, 1
  %vm419 = vcmp.eq.s32.totalorder %v413, 1
  %vm420 = vcmp.eq.s32.totalorder %v414, 1
  %vm421 = vcmp.eq.s32.totalorder %v415, 1
  %v422 = vperm.slane %v409, 0
  %v423 = vsel %vm416, %v422, %v397
  %v424 = vsel %vm417, %v422, %v398
  %v425 = vsel %vm418, %v422, %v399
  %v426 = vsel %vm419, %v422, %v400
  %v427 = vsel %vm420, %v422, %v401
  %v428 = vsel %vm421, %v422, %v402
  %vm429 = vcmp.eq.s32.totalorder %v345, 7
  %vm430 = vcmp.eq.s32.totalorder %v346, 7
  %vm431 = vcmp.eq.s32.totalorder %v347, 7
  %vm432 = vcmp.eq.s32.totalorder %v348, 7
  %vm433 = vcmp.eq.s32.totalorder %v349, 7
  %vm434 = vcmp.eq.s32.totalorder %v350, 7
  %v435 = vld [vmem:[%s1 + $0x3] sm:$0x1]
  %v436 = vsel %vm429, 1, 0
  %v437 = vsel %vm430, 1, 0
  %v438 = vsel %vm431, 1, 0
  %v439 = vsel %vm432, 1, 0
  %v440 = vsel %vm433, 1, 0
  %v441 = vsel %vm434, 1, 0
  %vm442 = vcmp.eq.s32.totalorder %v436, 1
  %vm443 = vcmp.eq.s32.totalorder %v437, 1
  %vm444 = vcmp.eq.s32.totalorder %v438, 1
  %vm445 = vcmp.eq.s32.totalorder %v439, 1
  %vm446 = vcmp.eq.s32.totalorder %v440, 1
  %vm447 = vcmp.eq.s32.totalorder %v441, 1
  %v448 = vperm.slane %v435, 0
  %v449 = vsel %vm442, %v448, %v423
  %v450 = vsel %vm443, %v448, %v424
  %v451 = vsel %vm444, %v448, %v425
  %v452 = vsel %vm445, %v448, %v426
  %v453 = vsel %vm446, %v448, %v427
  %v454 = vsel %vm447, %v448, %v428
  %vm455 = vcmp.eq.s32.totalorder %v345, 28
  %vm456 = vcmp.eq.s32.totalorder %v346, 28
  %vm457 = vcmp.eq.s32.totalorder %v347, 28
  %vm458 = vcmp.eq.s32.totalorder %v348, 28
  %vm459 = vcmp.eq.s32.totalorder %v349, 28
  %vm460 = vcmp.eq.s32.totalorder %v350, 28
  %v461 = vsel %vm455, 1, 0
  %v462 = vsel %vm456, 1, 0
  %v463 = vsel %vm457, 1, 0
  %v464 = vsel %vm458, 1, 0
  %v465 = vsel %vm459, 1, 0
  %v466 = vsel %vm460, 1, 0
  %vm467 = vcmp.eq.s32.totalorder %v461, 1
  %vm468 = vcmp.eq.s32.totalorder %v462, 1
  %vm469 = vcmp.eq.s32.totalorder %v463, 1
  %vm470 = vcmp.eq.s32.totalorder %v464, 1
  %vm471 = vcmp.eq.s32.totalorder %v465, 1
  %vm472 = vcmp.eq.s32.totalorder %v466, 1
  %v473 = vsel %vm467, %v370, %v449
  %v474 = vsel %vm468, %v370, %v450
  %v475 = vsel %vm469, %v370, %v451
  %v476 = vsel %vm470, %v370, %v452
  %v477 = vsel %vm471, %v370, %v453
  %v478 = vsel %vm472, %v370, %v454
  %vm479 = vcmp.eq.s32.totalorder %v345, 29
  %vm480 = vcmp.eq.s32.totalorder %v346, 29
  %vm481 = vcmp.eq.s32.totalorder %v347, 29
  %vm482 = vcmp.eq.s32.totalorder %v348, 29
  %vm483 = vcmp.eq.s32.totalorder %v349, 29
  %vm484 = vcmp.eq.s32.totalorder %v350, 29
  %v485 = vsel %vm479, 1, 0
  %v486 = vsel %vm480, 1, 0
  %v487 = vsel %vm481, 1, 0
  %v488 = vsel %vm482, 1, 0
  %v489 = vsel %vm483, 1, 0
  %v490 = vsel %vm484, 1, 0
  %vm491 = vcmp.eq.s32.totalorder %v485, 1
  %vm492 = vcmp.eq.s32.totalorder %v486, 1
  %vm493 = vcmp.eq.s32.totalorder %v487, 1
  %vm494 = vcmp.eq.s32.totalorder %v488, 1
  %vm495 = vcmp.eq.s32.totalorder %v489, 1
  %vm496 = vcmp.eq.s32.totalorder %v490, 1
  %v497 = vsel %vm491, %v396, %v473
  %v498 = vsel %vm492, %v396, %v474
  %v499 = vsel %vm493, %v396, %v475
  %v500 = vsel %vm494, %v396, %v476
  %v501 = vsel %vm495, %v396, %v477
  %v502 = vsel %vm496, %v396, %v478
  %vm503 = vcmp.eq.s32.totalorder %v345, 30
  %vm504 = vcmp.eq.s32.totalorder %v346, 30
  %vm505 = vcmp.eq.s32.totalorder %v347, 30
  %vm506 = vcmp.eq.s32.totalorder %v348, 30
  %vm507 = vcmp.eq.s32.totalorder %v349, 30
  %vm508 = vcmp.eq.s32.totalorder %v350, 30
  %v509 = vsel %vm503, 1, 0
  %v510 = vsel %vm504, 1, 0
  %v511 = vsel %vm505, 1, 0
  %v512 = vsel %vm506, 1, 0
  %v513 = vsel %vm507, 1, 0
  %v514 = vsel %vm508, 1, 0
  %vm515 = vcmp.eq.s32.totalorder %v509, 1
  %vm516 = vcmp.eq.s32.totalorder %v510, 1
  %vm517 = vcmp.eq.s32.totalorder %v511, 1
  %vm518 = vcmp.eq.s32.totalorder %v512, 1
  %vm519 = vcmp.eq.s32.totalorder %v513, 1
  %vm520 = vcmp.eq.s32.totalorder %v514, 1
  %v521 = vsel %vm515, %v422, %v497
  %v522 = vsel %vm516, %v422, %v498
  %v523 = vsel %vm517, %v422, %v499
  %v524 = vsel %vm518, %v422, %v500
  %v525 = vsel %vm519, %v422, %v501
  %v526 = vsel %vm520, %v422, %v502
  %vm527 = vcmp.eq.s32.totalorder %v345, 31
  %vm528 = vcmp.eq.s32.totalorder %v346, 31
  %vm529 = vcmp.eq.s32.totalorder %v347, 31
  %vm530 = vcmp.eq.s32.totalorder %v348, 31
  %vm531 = vcmp.eq.s32.totalorder %v349, 31
  %vm532 = vcmp.eq.s32.totalorder %v350, 31
  %v533 = vsel %vm527, 1, 0
  %v534 = vsel %vm528, 1, 0
  %v535 = vsel %vm529, 1, 0
  %v536 = vsel %vm530, 1, 0
  %v537 = vsel %vm531, 1, 0
  %v538 = vsel %vm532, 1, 0
  %vm539 = vcmp.eq.s32.totalorder %v533, 1
  %vm540 = vcmp.eq.s32.totalorder %v534, 1
  %vm541 = vcmp.eq.s32.totalorder %v535, 1
  %vm542 = vcmp.eq.s32.totalorder %v536, 1
  %vm543 = vcmp.eq.s32.totalorder %v537, 1
  %vm544 = vcmp.eq.s32.totalorder %v538, 1
  %v545 = vsel %vm539, %v448, %v521
  %v546 = vsel %vm540, %v448, %v522
  %v547 = vsel %vm541, %v448, %v523
  %v548 = vsel %vm542, %v448, %v524
  %v549 = vsel %vm543, %v448, %v525
  %v550 = vsel %vm544, %v448, %v526
  %vm551 = vcmp.ge.s32.totalorder %v345, 0
  %vm552 = vcmp.ge.s32.totalorder %v346, 0
  %vm553 = vcmp.ge.s32.totalorder %v347, 0
  %vm554 = vcmp.ge.s32.totalorder %v348, 0
  %vm555 = vcmp.ge.s32.totalorder %v349, 0
  %vm556 = vcmp.ge.s32.totalorder %v350, 0
  %vm557 = vcmp.lt.s32.totalorder %v345, 24
  %vm558 = vcmp.lt.s32.totalorder %v346, 24
  %vm559 = vcmp.lt.s32.totalorder %v347, 24
  %vm560 = vcmp.lt.s32.totalorder %v348, 24
  %vm561 = vcmp.lt.s32.totalorder %v349, 24
  %vm562 = vcmp.lt.s32.totalorder %v350, 24
  %vm563 = vmand %vm551, %vm557
  %vm564 = vmand %vm552, %vm558
  %vm565 = vmand %vm553, %vm559
  %vm566 = vmand %vm554, %vm560
  %vm567 = vmand %vm555, %vm561
  %vm568 = vmand %vm556, %vm562
  %vm569 = vcmp.ge.s32.totalorder %v46, 0
  %vm570 = vmand %vm563, %vm569
  %vm571 = vmand %vm564, %vm569
  %vm572 = vmand %vm565, %vm569
  %vm573 = vmand %vm566, %vm569
  %vm574 = vmand %vm567, %vm569
  %vm575 = vmand %vm568, %vm569
  %vm576 = vcmp.lt.s32.totalorder %v46, 24
  %vm577 = vmand %vm570, %vm576
  %vm578 = vmand %vm571, %vm576
  %vm579 = vmand %vm572, %vm576
  %vm580 = vmand %vm573, %vm576
  %vm581 = vmand %vm574, %vm576
  %vm582 = vmand %vm575, %vm576
  %vm583 = vcmp.ge.s32.totalorder %v345, 24
  %vm584 = vcmp.ge.s32.totalorder %v346, 24
  %vm585 = vcmp.ge.s32.totalorder %v347, 24
  %vm586 = vcmp.ge.s32.totalorder %v348, 24
  %vm587 = vcmp.ge.s32.totalorder %v349, 24
  %vm588 = vcmp.ge.s32.totalorder %v350, 24
  %vm589 = vcmp.lt.s32.totalorder %v345, 48
  %vm590 = vcmp.lt.s32.totalorder %v346, 48
  %vm591 = vcmp.lt.s32.totalorder %v347, 48
  %vm592 = vcmp.lt.s32.totalorder %v348, 48
  %vm593 = vcmp.lt.s32.totalorder %v349, 48
  %vm594 = vcmp.lt.s32.totalorder %v350, 48
  %vm595 = vmand %vm583, %vm589
  %vm596 = vmand %vm584, %vm590
  %vm597 = vmand %vm585, %vm591
  %vm598 = vmand %vm586, %vm592
  %vm599 = vmand %vm587, %vm593
  %vm600 = vmand %vm588, %vm594
  %vm601 = vcmp.ge.s32.totalorder %v46, 24
  %vm602 = vmand %vm595, %vm601
  %vm603 = vmand %vm596, %vm601
  %vm604 = vmand %vm597, %vm601
  %vm605 = vmand %vm598, %vm601
  %vm606 = vmand %vm599, %vm601
  %vm607 = vmand %vm600, %vm601
  %vm608 = vcmp.lt.s32.totalorder %v46, 48
  %vm609 = vmand %vm602, %vm608
  %vm610 = vmand %vm603, %vm608
  %vm611 = vmand %vm604, %vm608
  %vm612 = vmand %vm605, %vm608
  %vm613 = vmand %vm606, %vm608
  %vm614 = vmand %vm607, %vm608
  %vm615 = vmor %vm577, %vm609
  %vm616 = vmor %vm578, %vm610
  %vm617 = vmor %vm579, %vm611
  %vm618 = vmor %vm580, %vm612
  %vm619 = vmor %vm581, %vm613
  %vm620 = vmor %vm582, %vm614
  %vm621 = vcmp.le.s32.totalorder %v46, %v345
  %vm622 = vcmp.le.s32.totalorder %v46, %v346
  %vm623 = vcmp.le.s32.totalorder %v46, %v347
  %vm624 = vcmp.le.s32.totalorder %v46, %v348
  %vm625 = vcmp.le.s32.totalorder %v46, %v349
  %vm626 = vcmp.le.s32.totalorder %v46, %v350
  %vm627 = vmand %vm615, %vm621
  %vm628 = vmand %vm616, %vm622
  %vm629 = vmand %vm617, %vm623
  %vm630 = vmand %vm618, %vm624
  %vm631 = vmand %vm619, %vm625
  %vm632 = vmand %vm620, %vm626
  %v633 = vld [vmem:[%s3] sm:$0x1]
  %v634 = vmul.f32 %v545, %v545
  %v635 = vmul.f32 %v546, %v546
  %v636 = vmul.f32 %v547, %v547
  %v637 = vmul.f32 %v548, %v548
  %v638 = vmul.f32 %v549, %v549
  %v639 = vmul.f32 %v550, %v550
  %vm640 = vcmask 523264
  %v641 = vsel %vm640, %v634, 0.0
  %642 = vadd.xlane.f32.xlu0 %v641
  %v643 = vpop.xlane.xlu0 %642
  %v644 = vsel %vm640, %v635, 0.0
  %645 = vadd.xlane.f32.xlu0 %v644
  %v646 = vpop.xlane.xlu0 %645
  %v647 = vsel %vm640, %v636, 0.0
  %648 = vadd.xlane.f32.xlu0 %v647
  %v649 = vpop.xlane.xlu0 %648
  %v650 = vsel %vm640, %v637, 0.0
  %651 = vadd.xlane.f32.xlu0 %v650
  %v652 = vpop.xlane.xlu0 %651
  %v653 = vsel %vm640, %v638, 0.0
  %654 = vadd.xlane.f32.xlu0 %v653
  %v655 = vpop.xlane.xlu0 %654
  %v656 = vsel %vm640, %v639, 0.0
  %657 = vadd.xlane.f32.xlu0 %v656
  %v658 = vpop.xlane.xlu0 %657
  %v659 = vrcp.pop 64.0
  %v660 = vmul.f32 64.0, %v659
  %v661 = vsub.f32 1.0, %v660
  %v662 = vmul.f32 %v659, %v661
  %v663 = vadd.f32 %v659, %v662
  %vm664 = vweird.f32 %v659
  %v665 = vsel %vm664, %v659, %v663
  %v666 = vmul.f32 %v643, %v665
  %v667 = vmul.f32 %v646, %v665
  %v668 = vmul.f32 %v649, %v665
  %v669 = vmul.f32 %v652, %v665
  %v670 = vmul.f32 %v655, %v665
  %v671 = vmul.f32 %v658, %v665
  %v672 = vadd.f32 %v666, 1e-06
  %v673 = vadd.f32 %v667, 1e-06
  %v674 = vadd.f32 %v668, 1e-06
  %v675 = vadd.f32 %v669, 1e-06
  %v676 = vadd.f32 %v670, 1e-06
  %v677 = vadd.f32 %v671, 1e-06
  %v678 = vrsqrt.pop %v672
  %v679 = vmul.f32 %v678, %v672
  %v680 = vmul.f32 %v679, %v678
  %v681 = vmul.f32 0.5, %v680
  %v682 = vsub.f32 1.5, %v681
  %v683 = vmul.f32 %v678, %v682
  %vm684 = vweird.f32 %v672
  %vm685 = vweird.f32 %v678
  %vm686 = vmor %vm684, %vm685
  %v687 = vsel %vm686, %v678, %v683
  %v688 = vrsqrt.pop %v673
  %v689 = vmul.f32 %v688, %v673
  %v690 = vmul.f32 %v689, %v688
  %v691 = vmul.f32 0.5, %v690
  %v692 = vsub.f32 1.5, %v691
  %v693 = vmul.f32 %v688, %v692
  %vm694 = vweird.f32 %v673
  %vm695 = vweird.f32 %v688
  %vm696 = vmor %vm694, %vm695
  %v697 = vsel %vm696, %v688, %v693
  %v698 = vrsqrt.pop %v674
  %v699 = vmul.f32 %v698, %v674
  %v700 = vmul.f32 %v699, %v698
  %v701 = vmul.f32 0.5, %v700
  %v702 = vsub.f32 1.5, %v701
  %v703 = vmul.f32 %v698, %v702
  %vm704 = vweird.f32 %v674
  %vm705 = vweird.f32 %v698
  %vm706 = vmor %vm704, %vm705
  %v707 = vsel %vm706, %v698, %v703
  %v708 = vrsqrt.pop %v675
  %v709 = vmul.f32 %v708, %v675
  %v710 = vmul.f32 %v709, %v708
  %v711 = vmul.f32 0.5, %v710
  %v712 = vsub.f32 1.5, %v711
  %v713 = vmul.f32 %v708, %v712
  %vm714 = vweird.f32 %v675
  %vm715 = vweird.f32 %v708
  %vm716 = vmor %vm714, %vm715
  %v717 = vsel %vm716, %v708, %v713
  %v718 = vrsqrt.pop %v676
  %v719 = vmul.f32 %v718, %v676
  %v720 = vmul.f32 %v719, %v718
  %v721 = vmul.f32 0.5, %v720
  %v722 = vsub.f32 1.5, %v721
  %v723 = vmul.f32 %v718, %v722
  %vm724 = vweird.f32 %v676
  %vm725 = vweird.f32 %v718
  %vm726 = vmor %vm724, %vm725
  %v727 = vsel %vm726, %v718, %v723
  %v728 = vrsqrt.pop %v677
  %v729 = vmul.f32 %v728, %v677
  %v730 = vmul.f32 %v729, %v728
  %v731 = vmul.f32 0.5, %v730
  %v732 = vsub.f32 1.5, %v731
  %v733 = vmul.f32 %v728, %v732
  %vm734 = vweird.f32 %v677
  %vm735 = vweird.f32 %v728
  %vm736 = vmor %vm734, %vm735
  %v737 = vsel %vm736, %v728, %v733
  %v738 = vmul.f32 %v545, %v687
  %v739 = vmul.f32 %v546, %v697
  %v740 = vmul.f32 %v547, %v707
  %v741 = vmul.f32 %v548, %v717
  %v742 = vmul.f32 %v549, %v727
  %v743 = vmul.f32 %v550, %v737
  %v745 = vperm.slane %v633, 0
  %v747 = vmul.f32 %v738, %v745
  %v748 = vmul.f32 %v739, %v745
  %v749 = vmul.f32 %v740, %v745
  %v750 = vmul.f32 %v741, %v745
  %v751 = vmul.f32 %v742, %v745
  %v752 = vmul.f32 %v743, %v745
  %v753 = vpack.c.bf16 %v748, %v747
  %v754 = vpack.c.bf16 %v750, %v749
  %v755 = vpack.c.bf16 %v752, %v751
  %v756 = vld [vmem:[%s4] sm:$0xff]
  %v757 = vld [vmem:[%s4 + $0x8] sm:$0xff]
  %v758 = vld [vmem:[%s4 + $0x10] sm:$0xff]
  %v759 = vld [vmem:[%s4 + $0x18] sm:$0xff]
  %v760 = vld [vmem:[%s4 + $0x20] sm:$0xff]
  %v761 = vld [vmem:[%s4 + $0x28] sm:$0xff]
  %v762 = vld [vmem:[%s4 + $0x30] sm:$0xff]
  %v763 = vld [vmem:[%s4 + $0x38] sm:$0xff]
  %v772 = vunpack.c.l.b16 %v756
  %v773 = vunpack.c.h.b16 %v756
  %v774 = vunpack.c.l.b16 %v757
  %v775 = vunpack.c.h.b16 %v757
  %v776 = vunpack.c.l.b16 %v758
  %v777 = vunpack.c.h.b16 %v758
  %v778 = vunpack.c.l.b16 %v759
  %v779 = vunpack.c.h.b16 %v759
  %v780 = vunpack.c.l.b16 %v760
  %v781 = vunpack.c.h.b16 %v760
  %v782 = vunpack.c.l.b16 %v761
  %v783 = vunpack.c.h.b16 %v761
  %v784 = vunpack.c.l.b16 %v762
  %v785 = vunpack.c.h.b16 %v762
  %v786 = vunpack.c.l.b16 %v763
  %v787 = vunpack.c.h.b16 %v763
  %v788 = vpack.c.b16 %v774, %v772
  %v789 = vpack.c.b16 %v775, %v773
  %v790 = vpack.c.b16 %v778, %v776
  %v791 = vpack.c.b16 %v779, %v777
  %v792 = vpack.c.b16 %v782, %v780
  %v793 = vpack.c.b16 %v783, %v781
  %v794 = vpack.c.b16 %v786, %v784
  %v795 = vpack.c.b16 %v787, %v785
  %v805 = vsel %vm640, %v753, 0
  %v808 = vsel %vm640, %v754, 0
  %v811 = vsel %vm640, %v755, 0
  %813 = vmatpush.bf16.msra.mxu0 0
  %814 = vmatpush.bf16.msra.mxu0 0
  %815 = vmatpush.bf16.msra.mxu0 0
  %816 = vmatpush.bf16.msra.mxu0 0
  %817 = vmatpush.bf16.msra.mxu0 %v794
  %818 = vmatpush.bf16.msra.mxu0 %v792
  %819 = vmatpush.bf16.msra.mxu0 %v790
  %820 = vmatpush.bf16.msra.mxu0 %v788
  %821 = vmatmul.bf16.gmra.mxu0 %v805
  %v822 = vpop.f32.mrf.mxu0
  %v823 = vadd.f32 0.0, %v822
  %v824 = vpop.f32.mrf.mxu0
  %v825 = vadd.f32 0.0, %v824
  %826 = vmatmul.bf16.gmra.mxu0 %v808
  %v827 = vpop.f32.mrf.mxu0
  %v828 = vadd.f32 0.0, %v827
  %v829 = vpop.f32.mrf.mxu0
  %v830 = vadd.f32 0.0, %v829
  %831 = vmatmul.bf16.gmra.mxu0 %v811
  %v832 = vpop.f32.mrf.mxu0
  %v833 = vadd.f32 0.0, %v832
  %v834 = vpop.f32.mrf.mxu0
  %v835 = vadd.f32 0.0, %v834
  %836 = vdwg.mxu0
  %837 = vmatpush.bf16.msra.mxu0 0
  %838 = vmatpush.bf16.msra.mxu0 0
  %839 = vmatpush.bf16.msra.mxu0 0
  %840 = vmatpush.bf16.msra.mxu0 0
  %841 = vmatpush.bf16.msra.mxu0 %v795
  %842 = vmatpush.bf16.msra.mxu0 %v793
  %843 = vmatpush.bf16.msra.mxu0 %v791
  %844 = vmatpush.bf16.msra.mxu0 %v789
  %845 = vmatmul.bf16.gmra.mxu0 %v805
  %v846 = vpop.f32.mrf.mxu0
  %v847 = vadd.f32 0.0, %v846
  %v848 = vpop.f32.mrf.mxu0
  %v849 = vadd.f32 0.0, %v848
  %850 = vmatmul.bf16.gmra.mxu0 %v808
  %v851 = vpop.f32.mrf.mxu0
  %v852 = vadd.f32 0.0, %v851
  %v853 = vpop.f32.mrf.mxu0
  %v854 = vadd.f32 0.0, %v853
  %855 = vmatmul.bf16.gmra.mxu0 %v811
  %v856 = vpop.f32.mrf.mxu0
  %v857 = vadd.f32 0.0, %v856
  %v858 = vpop.f32.mrf.mxu0
  %v859 = vadd.f32 0.0, %v858
  %860 = vdwg.mxu0
  %v861 = vpack.c.bf16 %v847, %v823
  %v862 = vpack.c.bf16 %v849, %v825
  %v863 = vpack.c.bf16 %v852, %v828
  %v864 = vpack.c.bf16 %v854, %v830
  %v865 = vpack.c.bf16 %v857, %v833
  %v866 = vpack.c.bf16 %v859, %v835
  %v873 = vunpack.c.l.b16 %v861
  %v874 = vunpack.c.l.b16 %v862
  %v875 = vunpack.c.l.b16 %v863
  %v876 = vunpack.c.l.b16 %v864
  %v877 = vunpack.c.l.b16 %v865
  %v878 = vunpack.c.l.b16 %v866
  %v879 = vpack.c.b16 %v874, %v873
  %v880 = vpack.c.b16 %v876, %v875
  %v881 = vpack.c.b16 %v878, %v877
  %882 = vrot.lane.b32.xlu0 %v879, 64
  %v883 = vpop.permute.xlu0 %882
  %884 = vrot.lane.b32.xlu0 %v880, 64
  %v885 = vpop.permute.xlu0 %884
  %886 = vrot.lane.b32.xlu0 %v881, 64
  %v887 = vpop.permute.xlu0 %886
  %v889 = vsel %vm640, %v879, 0
  %v892 = vsel %vm640, %v880, 0
  %v895 = vsel %vm640, %v881, 0
  %v898 = vsel %vm640, %v883, 0
  %v901 = vsel %vm640, %v885, 0
  %v904 = vsel %vm640, %v887, 0
  %906 = vmatpush.bf16.xpose.msra.mxu0 0
  %907 = vmatpush.bf16.xpose.msra.mxu0 0
  %908 = vmatpush.bf16.xpose.msra.mxu0 0
  %909 = vmatpush.bf16.xpose.msra.mxu0 0
  %910 = vmatpush.bf16.xpose.msra.mxu0 0
  %911 = vmatpush.bf16.xpose.msra.mxu0 %v904
  %912 = vmatpush.bf16.xpose.msra.mxu0 %v901
  %913 = vmatpush.bf16.xpose.msra.mxu0 %v898
  %914 = vmatmul.bf16.gmra.mxu0 %v889
  %v915 = vpop.f32.mrf.mxu0
  %v916 = vadd.f32 0.0, %v915
  %v917 = vpop.f32.mrf.mxu0
  %v918 = vadd.f32 0.0, %v917
  %919 = vmatmul.bf16.gmra.mxu0 %v892
  %v920 = vpop.f32.mrf.mxu0
  %v921 = vadd.f32 0.0, %v920
  %v922 = vpop.f32.mrf.mxu0
  %v923 = vadd.f32 0.0, %v922
  %924 = vmatmul.bf16.gmra.mxu0 %v895
  %v925 = vpop.f32.mrf.mxu0
  %v926 = vadd.f32 0.0, %v925
  %v927 = vpop.f32.mrf.mxu0
  %v928 = vadd.f32 0.0, %v927
  %929 = vdwg.mxu0
  %v930 = vmul.f32 %v916, 0.125
  %v931 = vmul.f32 %v918, 0.125
  %v932 = vmul.f32 %v921, 0.125
  %v933 = vmul.f32 %v923, 0.125
  %v934 = vmul.f32 %v926, 0.125
  %v935 = vmul.f32 %v928, 0.125
  %v936 = vsel %vm627, %v930, -1e+30
  %v937 = vsel %vm628, %v931, -1e+30
  %v938 = vsel %vm629, %v932, -1e+30
  %v939 = vsel %vm630, %v933, -1e+30
  %v940 = vsel %vm631, %v934, -1e+30
  %v941 = vsel %vm632, %v935, -1e+30
  %vm942 = vcmask 392192
  %v943 = vsel %vm942, %v936, -inf
  %944 = vmax.xlane.f32.xlu0 %v943
  %v945 = vpop.xlane.xlu0 %944
  %v946 = vsel %vm942, %v937, -inf
  %947 = vmax.xlane.f32.xlu0 %v946
  %v948 = vpop.xlane.xlu0 %947
  %v949 = vsel %vm942, %v938, -inf
  %950 = vmax.xlane.f32.xlu0 %v949
  %v951 = vpop.xlane.xlu0 %950
  %v952 = vsel %vm942, %v939, -inf
  %953 = vmax.xlane.f32.xlu0 %v952
  %v954 = vpop.xlane.xlu0 %953
  %v955 = vsel %vm942, %v940, -inf
  %956 = vmax.xlane.f32.xlu0 %v955
  %v957 = vpop.xlane.xlu0 %956
  %v958 = vsel %vm942, %v941, -inf
  %959 = vmax.xlane.f32.xlu0 %v958
  %v960 = vpop.xlane.xlu0 %959
  %v961 = vsub.f32 %v936, %v945
  %v962 = vsub.f32 %v937, %v948
  %v963 = vsub.f32 %v938, %v951
  %v964 = vsub.f32 %v939, %v954
  %v965 = vsub.f32 %v940, %v957
  %v966 = vsub.f32 %v941, %v960
  %v967 = vmul.f32 %v961, 1.442695
  %v968 = vpow.pop %v967
  %v969 = vmul.f32 %v962, 1.442695
  %v970 = vpow.pop %v969
  %v971 = vmul.f32 %v963, 1.442695
  %v972 = vpow.pop %v971
  %v973 = vmul.f32 %v964, 1.442695
  %v974 = vpow.pop %v973
  %v975 = vmul.f32 %v965, 1.442695
  %v976 = vpow.pop %v975
  %v977 = vmul.f32 %v966, 1.442695
  %v978 = vpow.pop %v977
  %v979 = vsel %vm942, %v968, 0.0
  %980 = vadd.xlane.f32.xlu0 %v979
  %v981 = vpop.xlane.xlu0 %980
  %v982 = vsel %vm942, %v970, 0.0
  %983 = vadd.xlane.f32.xlu0 %v982
  %v984 = vpop.xlane.xlu0 %983
  %v985 = vsel %vm942, %v972, 0.0
  %986 = vadd.xlane.f32.xlu0 %v985
  %v987 = vpop.xlane.xlu0 %986
  %v988 = vsel %vm942, %v974, 0.0
  %989 = vadd.xlane.f32.xlu0 %v988
  %v990 = vpop.xlane.xlu0 %989
  %v991 = vsel %vm942, %v976, 0.0
  %992 = vadd.xlane.f32.xlu0 %v991
  %v993 = vpop.xlane.xlu0 %992
  %v994 = vsel %vm942, %v978, 0.0
  %995 = vadd.xlane.f32.xlu0 %v994
  %v996 = vpop.xlane.xlu0 %995
  %v997 = vrcp.pop %v981
  %v998 = vrcp.pop %v984
  %v999 = vrcp.pop %v987
  %v1000 = vrcp.pop %v990
  %v1001 = vrcp.pop %v993
  %v1002 = vrcp.pop %v996
  %v1003 = vmul.f32 %v968, %v997
  %v1004 = vmul.f32 %v970, %v998
  %v1005 = vmul.f32 %v972, %v999
  %v1006 = vmul.f32 %v974, %v1000
  %v1007 = vmul.f32 %v976, %v1001
  %v1008 = vmul.f32 %v978, %v1002
  %v1009 = vpack.c.bf16 %v1004, %v1003
  %v1010 = vpack.c.bf16 %v1006, %v1005
  %v1011 = vpack.c.bf16 %v1008, %v1007
  %v1012 = vunpack.c.h.b16 %v861
  %v1013 = vunpack.c.h.b16 %v862
  %v1014 = vunpack.c.h.b16 %v863
  %v1015 = vunpack.c.h.b16 %v864
  %v1016 = vunpack.c.h.b16 %v865
  %v1017 = vunpack.c.h.b16 %v866
  %v1018 = vpack.c.b16 %v1013, %v1012
  %v1019 = vpack.c.b16 %v1015, %v1014
  %v1020 = vpack.c.b16 %v1017, %v1016
  %v1025 = vsel %vm942, %v1009, 0
  %v1028 = vsel %vm942, %v1010, 0
  %v1031 = vsel %vm942, %v1011, 0
  %1033 = vmatpush.bf16.msra.mxu0 0
  %1034 = vmatpush.bf16.msra.mxu0 0
  %1035 = vmatpush.bf16.msra.mxu0 0
  %1036 = vmatpush.bf16.msra.mxu0 0
  %1037 = vmatpush.bf16.msra.mxu0 0
  %1038 = vmatpush.bf16.msra.mxu0 %v1020
  %1039 = vmatpush.bf16.msra.mxu0 %v1019
  %1040 = vmatpush.bf16.msra.mxu0 %v1018
  %1041 = vmatmul.bf16.gmra.mxu0 %v1025
  %v1042 = vpop.f32.mrf.mxu0
  %v1043 = vadd.f32 0.0, %v1042
  %v1044 = vpop.f32.mrf.mxu0
  %v1045 = vadd.f32 0.0, %v1044
  %1046 = vmatmul.bf16.gmra.mxu0 %v1028
  %v1047 = vpop.f32.mrf.mxu0
  %v1048 = vadd.f32 0.0, %v1047
  %v1049 = vpop.f32.mrf.mxu0
  %v1050 = vadd.f32 0.0, %v1049
  %1051 = vmatmul.bf16.gmra.mxu0 %v1031
  %v1052 = vpop.f32.mrf.mxu0
  %v1053 = vadd.f32 0.0, %v1052
  %v1054 = vpop.f32.mrf.mxu0
  %v1055 = vadd.f32 0.0, %v1054
  %1056 = vdwg.mxu0
  %v1057 = vpack.c.bf16 %v1045, %v1043
  %v1058 = vpack.c.bf16 %v1050, %v1048
  %v1059 = vpack.c.bf16 %v1055, %v1053
  %v1060 = vld [vmem:[%s5] sm:$0xf]
  %v1061 = vld [vmem:[%s5 + $0x4] sm:$0xf]
  %v1062 = vld [vmem:[%s5 + $0x8] sm:$0xf]
  %v1063 = vld [vmem:[%s5 + $0xc] sm:$0xf]
  %v1064 = vld [vmem:[%s5 + $0x10] sm:$0xf]
  %v1065 = vld [vmem:[%s5 + $0x14] sm:$0xf]
  %v1066 = vld [vmem:[%s5 + $0x18] sm:$0xf]
  %v1067 = vld [vmem:[%s5 + $0x1c] sm:$0xf]
  %v1076 = vunpack.c.l.b16 %v1060
  %v1077 = vunpack.c.l.b16 %v1061
  %v1078 = vunpack.c.l.b16 %v1062
  %v1079 = vunpack.c.l.b16 %v1063
  %v1080 = vunpack.c.l.b16 %v1064
  %v1081 = vunpack.c.l.b16 %v1065
  %v1082 = vunpack.c.l.b16 %v1066
  %v1083 = vunpack.c.l.b16 %v1067
  %v1084 = vpack.c.b16 %v1077, %v1076
  %v1085 = vpack.c.b16 %v1079, %v1078
  %v1086 = vpack.c.b16 %v1081, %v1080
  %v1087 = vpack.c.b16 %v1083, %v1082
  %v1093 = vsel %vm640, %v1057, 0
  %v1096 = vsel %vm640, %v1058, 0
  %v1099 = vsel %vm640, %v1059, 0
  %1101 = vmatpush.bf16.msra.mxu0 0
  %1102 = vmatpush.bf16.msra.mxu0 0
  %1103 = vmatpush.bf16.msra.mxu0 0
  %1104 = vmatpush.bf16.msra.mxu0 0
  %1105 = vmatpush.bf16.msra.mxu0 %v1087
  %1106 = vmatpush.bf16.msra.mxu0 %v1086
  %1107 = vmatpush.bf16.msra.mxu0 %v1085
  %1108 = vmatpush.bf16.msra.mxu0 %v1084
  %1109 = vmatmul.bf16.gmra.mxu0 %v1093
  %v1110 = vpop.f32.mrf.mxu0
  %v1111 = vadd.f32 0.0, %v1110
  %v1112 = vpop.f32.mrf.mxu0
  %v1113 = vadd.f32 0.0, %v1112
  %1114 = vmatmul.bf16.gmra.mxu0 %v1096
  %v1115 = vpop.f32.mrf.mxu0
  %v1116 = vadd.f32 0.0, %v1115
  %v1117 = vpop.f32.mrf.mxu0
  %v1118 = vadd.f32 0.0, %v1117
  %1119 = vmatmul.bf16.gmra.mxu0 %v1099
  %v1120 = vpop.f32.mrf.mxu0
  %v1121 = vadd.f32 0.0, %v1120
  %v1122 = vpop.f32.mrf.mxu0
  %v1123 = vadd.f32 0.0, %v1122
  %1124 = vdwg.mxu0
  %v1125 = vadd.f32 %v545, %v1111
  %v1126 = vadd.f32 %v546, %v1113
  %v1127 = vadd.f32 %v547, %v1116
  %v1128 = vadd.f32 %v548, %v1118
  %v1129 = vadd.f32 %v549, %v1121
  %v1130 = vadd.f32 %v550, %v1123
  %v1131 = vld [vmem:[%s6] sm:$0x1]
  %v1132 = vmul.f32 %v1125, %v1125
  %v1133 = vmul.f32 %v1126, %v1126
  %v1134 = vmul.f32 %v1127, %v1127
  %v1135 = vmul.f32 %v1128, %v1128
  %v1136 = vmul.f32 %v1129, %v1129
  %v1137 = vmul.f32 %v1130, %v1130
  %v1138 = vsel %vm640, %v1132, 0.0
  %1139 = vadd.xlane.f32.xlu0 %v1138
  %v1140 = vpop.xlane.xlu0 %1139
  %v1141 = vsel %vm640, %v1133, 0.0
  %1142 = vadd.xlane.f32.xlu0 %v1141
  %v1143 = vpop.xlane.xlu0 %1142
  %v1144 = vsel %vm640, %v1134, 0.0
  %1145 = vadd.xlane.f32.xlu0 %v1144
  %v1146 = vpop.xlane.xlu0 %1145
  %v1147 = vsel %vm640, %v1135, 0.0
  %1148 = vadd.xlane.f32.xlu0 %v1147
  %v1149 = vpop.xlane.xlu0 %1148
  %v1150 = vsel %vm640, %v1136, 0.0
  %1151 = vadd.xlane.f32.xlu0 %v1150
  %v1152 = vpop.xlane.xlu0 %1151
  %v1153 = vsel %vm640, %v1137, 0.0
  %1154 = vadd.xlane.f32.xlu0 %v1153
  %v1155 = vpop.xlane.xlu0 %1154
  %v1156 = vmul.f32 %v1140, %v665
  %v1157 = vmul.f32 %v1143, %v665
  %v1158 = vmul.f32 %v1146, %v665
  %v1159 = vmul.f32 %v1149, %v665
  %v1160 = vmul.f32 %v1152, %v665
  %v1161 = vmul.f32 %v1155, %v665
  %v1162 = vadd.f32 %v1156, 1e-06
  %v1163 = vadd.f32 %v1157, 1e-06
  %v1164 = vadd.f32 %v1158, 1e-06
  %v1165 = vadd.f32 %v1159, 1e-06
  %v1166 = vadd.f32 %v1160, 1e-06
  %v1167 = vadd.f32 %v1161, 1e-06
  %v1168 = vrsqrt.pop %v1162
  %v1169 = vmul.f32 %v1168, %v1162
  %v1170 = vmul.f32 %v1169, %v1168
  %v1171 = vmul.f32 0.5, %v1170
  %v1172 = vsub.f32 1.5, %v1171
  %v1173 = vmul.f32 %v1168, %v1172
  %vm1174 = vweird.f32 %v1162
  %vm1175 = vweird.f32 %v1168
  %vm1176 = vmor %vm1174, %vm1175
  %v1177 = vsel %vm1176, %v1168, %v1173
  %v1178 = vrsqrt.pop %v1163
  %v1179 = vmul.f32 %v1178, %v1163
  %v1180 = vmul.f32 %v1179, %v1178
  %v1181 = vmul.f32 0.5, %v1180
  %v1182 = vsub.f32 1.5, %v1181
  %v1183 = vmul.f32 %v1178, %v1182
  %vm1184 = vweird.f32 %v1163
  %vm1185 = vweird.f32 %v1178
  %vm1186 = vmor %vm1184, %vm1185
  %v1187 = vsel %vm1186, %v1178, %v1183
  %v1188 = vrsqrt.pop %v1164
  %v1189 = vmul.f32 %v1188, %v1164
  %v1190 = vmul.f32 %v1189, %v1188
  %v1191 = vmul.f32 0.5, %v1190
  %v1192 = vsub.f32 1.5, %v1191
  %v1193 = vmul.f32 %v1188, %v1192
  %vm1194 = vweird.f32 %v1164
  %vm1195 = vweird.f32 %v1188
  %vm1196 = vmor %vm1194, %vm1195
  %v1197 = vsel %vm1196, %v1188, %v1193
  %v1198 = vrsqrt.pop %v1165
  %v1199 = vmul.f32 %v1198, %v1165
  %v1200 = vmul.f32 %v1199, %v1198
  %v1201 = vmul.f32 0.5, %v1200
  %v1202 = vsub.f32 1.5, %v1201
  %v1203 = vmul.f32 %v1198, %v1202
  %vm1204 = vweird.f32 %v1165
  %vm1205 = vweird.f32 %v1198
  %vm1206 = vmor %vm1204, %vm1205
  %v1207 = vsel %vm1206, %v1198, %v1203
  %v1208 = vrsqrt.pop %v1166
  %v1209 = vmul.f32 %v1208, %v1166
  %v1210 = vmul.f32 %v1209, %v1208
  %v1211 = vmul.f32 0.5, %v1210
  %v1212 = vsub.f32 1.5, %v1211
  %v1213 = vmul.f32 %v1208, %v1212
  %vm1214 = vweird.f32 %v1166
  %vm1215 = vweird.f32 %v1208
  %vm1216 = vmor %vm1214, %vm1215
  %v1217 = vsel %vm1216, %v1208, %v1213
  %v1218 = vrsqrt.pop %v1167
  %v1219 = vmul.f32 %v1218, %v1167
  %v1220 = vmul.f32 %v1219, %v1218
  %v1221 = vmul.f32 0.5, %v1220
  %v1222 = vsub.f32 1.5, %v1221
  %v1223 = vmul.f32 %v1218, %v1222
  %vm1224 = vweird.f32 %v1167
  %vm1225 = vweird.f32 %v1218
  %vm1226 = vmor %vm1224, %vm1225
  %v1227 = vsel %vm1226, %v1218, %v1223
  %v1228 = vmul.f32 %v1125, %v1177
  %v1229 = vmul.f32 %v1126, %v1187
  %v1230 = vmul.f32 %v1127, %v1197
  %v1231 = vmul.f32 %v1128, %v1207
  %v1232 = vmul.f32 %v1129, %v1217
  %v1233 = vmul.f32 %v1130, %v1227
  %v1235 = vperm.slane %v1131, 0
  %v1237 = vmul.f32 %v1228, %v1235
  %v1238 = vmul.f32 %v1229, %v1235
  %v1239 = vmul.f32 %v1230, %v1235
  %v1240 = vmul.f32 %v1231, %v1235
  %v1241 = vmul.f32 %v1232, %v1235
  %v1242 = vmul.f32 %v1233, %v1235
  %v1243 = vpack.c.bf16 %v1238, %v1237
  %v1244 = vpack.c.bf16 %v1240, %v1239
  %v1245 = vpack.c.bf16 %v1242, %v1241
  %v1246 = vld [vmem:[%s7] sm:$0xff]
  %v1247 = vld [vmem:[%s7 + $0x8] sm:$0xff]
  %v1248 = vld [vmem:[%s7 + $0x10] sm:$0xff]
  %v1249 = vld [vmem:[%s7 + $0x18] sm:$0xff]
  %v1250 = vld [vmem:[%s7 + $0x20] sm:$0xff]
  %v1251 = vld [vmem:[%s7 + $0x28] sm:$0xff]
  %v1252 = vld [vmem:[%s7 + $0x30] sm:$0xff]
  %v1253 = vld [vmem:[%s7 + $0x38] sm:$0xff]
  %v1262 = vunpack.c.l.b16 %v1246
  %v1263 = vunpack.c.h.b16 %v1246
  %v1264 = vunpack.c.l.b16 %v1247
  %v1265 = vunpack.c.h.b16 %v1247
  %v1266 = vunpack.c.l.b16 %v1248
  %v1267 = vunpack.c.h.b16 %v1248
  %v1268 = vunpack.c.l.b16 %v1249
  %v1269 = vunpack.c.h.b16 %v1249
  %v1270 = vunpack.c.l.b16 %v1250
  %v1271 = vunpack.c.h.b16 %v1250
  %v1272 = vunpack.c.l.b16 %v1251
  %v1273 = vunpack.c.h.b16 %v1251
  %v1274 = vunpack.c.l.b16 %v1252
  %v1275 = vunpack.c.h.b16 %v1252
  %v1276 = vunpack.c.l.b16 %v1253
  %v1277 = vunpack.c.h.b16 %v1253
  %v1278 = vpack.c.b16 %v1264, %v1262
  %v1279 = vpack.c.b16 %v1265, %v1263
  %v1280 = vpack.c.b16 %v1268, %v1266
  %v1281 = vpack.c.b16 %v1269, %v1267
  %v1282 = vpack.c.b16 %v1272, %v1270
  %v1283 = vpack.c.b16 %v1273, %v1271
  %v1284 = vpack.c.b16 %v1276, %v1274
  %v1285 = vpack.c.b16 %v1277, %v1275
  %v1295 = vsel %vm640, %v1243, 0
  %v1298 = vsel %vm640, %v1244, 0
  %v1301 = vsel %vm640, %v1245, 0
  %1303 = vmatpush.bf16.msra.mxu0 0
  %1304 = vmatpush.bf16.msra.mxu0 0
  %1305 = vmatpush.bf16.msra.mxu0 0
  %1306 = vmatpush.bf16.msra.mxu0 0
  %1307 = vmatpush.bf16.msra.mxu0 %v1284
  %1308 = vmatpush.bf16.msra.mxu0 %v1282
  %1309 = vmatpush.bf16.msra.mxu0 %v1280
  %1310 = vmatpush.bf16.msra.mxu0 %v1278
  %1311 = vmatmul.bf16.gmra.mxu0 %v1295
  %v1312 = vpop.f32.mrf.mxu0
  %v1313 = vadd.f32 0.0, %v1312
  %v1314 = vpop.f32.mrf.mxu0
  %v1315 = vadd.f32 0.0, %v1314
  %1316 = vmatmul.bf16.gmra.mxu0 %v1298
  %v1317 = vpop.f32.mrf.mxu0
  %v1318 = vadd.f32 0.0, %v1317
  %v1319 = vpop.f32.mrf.mxu0
  %v1320 = vadd.f32 0.0, %v1319
  %1321 = vmatmul.bf16.gmra.mxu0 %v1301
  %v1322 = vpop.f32.mrf.mxu0
  %v1323 = vadd.f32 0.0, %v1322
  %v1324 = vpop.f32.mrf.mxu0
  %v1325 = vadd.f32 0.0, %v1324
  %1326 = vdwg.mxu0
  %1327 = vmatpush.bf16.msra.mxu0 0
  %1328 = vmatpush.bf16.msra.mxu0 0
  %1329 = vmatpush.bf16.msra.mxu0 0
  %1330 = vmatpush.bf16.msra.mxu0 0
  %1331 = vmatpush.bf16.msra.mxu0 %v1285
  %1332 = vmatpush.bf16.msra.mxu0 %v1283
  %1333 = vmatpush.bf16.msra.mxu0 %v1281
  %1334 = vmatpush.bf16.msra.mxu0 %v1279
  %1335 = vmatmul.bf16.gmra.mxu0 %v1295
  %v1336 = vpop.f32.mrf.mxu0
  %v1337 = vadd.f32 0.0, %v1336
  %v1338 = vpop.f32.mrf.mxu0
  %v1339 = vadd.f32 0.0, %v1338
  %1340 = vmatmul.bf16.gmra.mxu0 %v1298
  %v1341 = vpop.f32.mrf.mxu0
  %v1342 = vadd.f32 0.0, %v1341
  %v1343 = vpop.f32.mrf.mxu0
  %v1344 = vadd.f32 0.0, %v1343
  %1345 = vmatmul.bf16.gmra.mxu0 %v1301
  %v1346 = vpop.f32.mrf.mxu0
  %v1347 = vadd.f32 0.0, %v1346
  %v1348 = vpop.f32.mrf.mxu0
  %v1349 = vadd.f32 0.0, %v1348
  %1350 = vdwg.mxu0
  %v1351 = vmul.f32 %v1313, %v1313
  %v1352 = vmul.f32 %v1315, %v1315
  %v1353 = vmul.f32 %v1318, %v1318
  %v1354 = vmul.f32 %v1320, %v1320
  %v1355 = vmul.f32 %v1323, %v1323
  %v1356 = vmul.f32 %v1325, %v1325
  %v1357 = vmul.f32 %v1313, %v1351
  %v1358 = vmul.f32 %v1315, %v1352
  %v1359 = vmul.f32 %v1318, %v1353
  %v1360 = vmul.f32 %v1320, %v1354
  %v1361 = vmul.f32 %v1323, %v1355
  %v1362 = vmul.f32 %v1325, %v1356
  %v1363 = vmul.f32 %v1357, 0.044715
  %v1364 = vmul.f32 %v1358, 0.044715
  %v1365 = vmul.f32 %v1359, 0.044715
  %v1366 = vmul.f32 %v1360, 0.044715
  %v1367 = vmul.f32 %v1361, 0.044715
  %v1368 = vmul.f32 %v1362, 0.044715
  %v1369 = vadd.f32 %v1313, %v1363
  %v1370 = vadd.f32 %v1315, %v1364
  %v1371 = vadd.f32 %v1318, %v1365
  %v1372 = vadd.f32 %v1320, %v1366
  %v1373 = vadd.f32 %v1323, %v1367
  %v1374 = vadd.f32 %v1325, %v1368
  %v1375 = vmul.f32 %v1369, 0.7978846
  %v1376 = vmul.f32 %v1370, 0.7978846
  %v1377 = vmul.f32 %v1371, 0.7978846
  %v1378 = vmul.f32 %v1372, 0.7978846
  %v1379 = vmul.f32 %v1373, 0.7978846
  %v1380 = vmul.f32 %v1374, 0.7978846
  %v1381 = vtanh.pop %v1375
  %v1382 = vtanh.pop %v1376
  %v1383 = vtanh.pop %v1377
  %v1384 = vtanh.pop %v1378
  %v1385 = vtanh.pop %v1379
  %v1386 = vtanh.pop %v1380
  %v1387 = vadd.f32 %v1381, 1.0
  %v1388 = vadd.f32 %v1382, 1.0
  %v1389 = vadd.f32 %v1383, 1.0
  %v1390 = vadd.f32 %v1384, 1.0
  %v1391 = vadd.f32 %v1385, 1.0
  %v1392 = vadd.f32 %v1386, 1.0
  %v1393 = vmul.f32 %v1387, 0.5
  %v1394 = vmul.f32 %v1388, 0.5
  %v1395 = vmul.f32 %v1389, 0.5
  %v1396 = vmul.f32 %v1390, 0.5
  %v1397 = vmul.f32 %v1391, 0.5
  %v1398 = vmul.f32 %v1392, 0.5
  %v1399 = vmul.f32 %v1313, %v1393
  %v1400 = vmul.f32 %v1315, %v1394
  %v1401 = vmul.f32 %v1318, %v1395
  %v1402 = vmul.f32 %v1320, %v1396
  %v1403 = vmul.f32 %v1323, %v1397
  %v1404 = vmul.f32 %v1325, %v1398
  %v1405 = vmul.f32 %v1399, %v1337
  %v1406 = vmul.f32 %v1400, %v1339
  %v1407 = vmul.f32 %v1401, %v1342
  %v1408 = vmul.f32 %v1402, %v1344
  %v1409 = vmul.f32 %v1403, %v1347
  %v1410 = vmul.f32 %v1404, %v1349
  %v1411 = vpack.c.bf16 %v1406, %v1405
  %v1412 = vpack.c.bf16 %v1408, %v1407
  %v1413 = vpack.c.bf16 %v1410, %v1409
  %v1414 = vld [vmem:[%s8] sm:$0xf]
  %v1415 = vld [vmem:[%s8 + $0x4] sm:$0xf]
  %v1416 = vld [vmem:[%s8 + $0x8] sm:$0xf]
  %v1417 = vld [vmem:[%s8 + $0xc] sm:$0xf]
  %v1418 = vld [vmem:[%s8 + $0x10] sm:$0xf]
  %v1419 = vld [vmem:[%s8 + $0x14] sm:$0xf]
  %v1420 = vld [vmem:[%s8 + $0x18] sm:$0xf]
  %v1421 = vld [vmem:[%s8 + $0x1c] sm:$0xf]
  %v1422 = vld [vmem:[%s8 + $0x20] sm:$0xf]
  %v1423 = vld [vmem:[%s8 + $0x24] sm:$0xf]
  %v1424 = vld [vmem:[%s8 + $0x28] sm:$0xf]
  %v1425 = vld [vmem:[%s8 + $0x2c] sm:$0xf]
  %v1426 = vld [vmem:[%s8 + $0x30] sm:$0xf]
  %v1427 = vld [vmem:[%s8 + $0x34] sm:$0xf]
  %v1428 = vld [vmem:[%s8 + $0x38] sm:$0xf]
  %v1429 = vld [vmem:[%s8 + $0x3c] sm:$0xf]
  %v1446 = vunpack.c.l.b16 %v1414
  %v1447 = vunpack.c.l.b16 %v1415
  %v1448 = vunpack.c.l.b16 %v1416
  %v1449 = vunpack.c.l.b16 %v1417
  %v1450 = vunpack.c.l.b16 %v1418
  %v1451 = vunpack.c.l.b16 %v1419
  %v1452 = vunpack.c.l.b16 %v1420
  %v1453 = vunpack.c.l.b16 %v1421
  %v1454 = vunpack.c.l.b16 %v1422
  %v1455 = vunpack.c.l.b16 %v1423
  %v1456 = vunpack.c.l.b16 %v1424
  %v1457 = vunpack.c.l.b16 %v1425
  %v1458 = vunpack.c.l.b16 %v1426
  %v1459 = vunpack.c.l.b16 %v1427
  %v1460 = vunpack.c.l.b16 %v1428
  %v1461 = vunpack.c.l.b16 %v1429
  %v1462 = vpack.c.b16 %v1447, %v1446
  %v1463 = vpack.c.b16 %v1449, %v1448
  %v1464 = vpack.c.b16 %v1451, %v1450
  %v1465 = vpack.c.b16 %v1453, %v1452
  %v1466 = vpack.c.b16 %v1455, %v1454
  %v1467 = vpack.c.b16 %v1457, %v1456
  %v1468 = vpack.c.b16 %v1459, %v1458
  %v1469 = vpack.c.b16 %v1461, %v1460
  %1478 = vmatpush.bf16.msra.mxu0 %v1469
  %1479 = vmatpush.bf16.msra.mxu0 %v1468
  %1480 = vmatpush.bf16.msra.mxu0 %v1467
  %1481 = vmatpush.bf16.msra.mxu0 %v1466
  %1482 = vmatpush.bf16.msra.mxu0 %v1465
  %1483 = vmatpush.bf16.msra.mxu0 %v1464
  %1484 = vmatpush.bf16.msra.mxu0 %v1463
  %1485 = vmatpush.bf16.msra.mxu0 %v1462
  %1486 = vmatmul.bf16.gmra.mxu0 %v1411
  %v1487 = vpop.f32.mrf.mxu0
  %v1488 = vadd.f32 0.0, %v1487
  %v1489 = vpop.f32.mrf.mxu0
  %v1490 = vadd.f32 0.0, %v1489
  %1491 = vmatmul.bf16.gmra.mxu0 %v1412
  %v1492 = vpop.f32.mrf.mxu0
  %v1493 = vadd.f32 0.0, %v1492
  %v1494 = vpop.f32.mrf.mxu0
  %v1495 = vadd.f32 0.0, %v1494
  %1496 = vmatmul.bf16.gmra.mxu0 %v1413
  %v1497 = vpop.f32.mrf.mxu0
  %v1498 = vadd.f32 0.0, %v1497
  %v1499 = vpop.f32.mrf.mxu0
  %v1500 = vadd.f32 0.0, %v1499
  %1501 = vdwg.mxu0
  %v1502 = vadd.f32 %v1125, %v1488
  %v1503 = vadd.f32 %v1126, %v1490
  %v1504 = vadd.f32 %v1127, %v1493
  %v1505 = vadd.f32 %v1128, %v1495
  %v1506 = vadd.f32 %v1129, %v1498
  %v1507 = vadd.f32 %v1130, %v1500
  %s1508 = scalar_lea.vmem %s3, 1
  %v1509 = vld [vmem:[%s1508] sm:$0x1]
  %v1510 = vmul.f32 %v1502, %v1502
  %v1511 = vmul.f32 %v1503, %v1503
  %v1512 = vmul.f32 %v1504, %v1504
  %v1513 = vmul.f32 %v1505, %v1505
  %v1514 = vmul.f32 %v1506, %v1506
  %v1515 = vmul.f32 %v1507, %v1507
  %v1516 = vsel %vm640, %v1510, 0.0
  %1517 = vadd.xlane.f32.xlu0 %v1516
  %v1518 = vpop.xlane.xlu0 %1517
  %v1519 = vsel %vm640, %v1511, 0.0
  %1520 = vadd.xlane.f32.xlu0 %v1519
  %v1521 = vpop.xlane.xlu0 %1520
  %v1522 = vsel %vm640, %v1512, 0.0
  %1523 = vadd.xlane.f32.xlu0 %v1522
  %v1524 = vpop.xlane.xlu0 %1523
  %v1525 = vsel %vm640, %v1513, 0.0
  %1526 = vadd.xlane.f32.xlu0 %v1525
  %v1527 = vpop.xlane.xlu0 %1526
  %v1528 = vsel %vm640, %v1514, 0.0
  %1529 = vadd.xlane.f32.xlu0 %v1528
  %v1530 = vpop.xlane.xlu0 %1529
  %v1531 = vsel %vm640, %v1515, 0.0
  %1532 = vadd.xlane.f32.xlu0 %v1531
  %v1533 = vpop.xlane.xlu0 %1532
  %v1534 = vmul.f32 %v1518, %v665
  %v1535 = vmul.f32 %v1521, %v665
  %v1536 = vmul.f32 %v1524, %v665
  %v1537 = vmul.f32 %v1527, %v665
  %v1538 = vmul.f32 %v1530, %v665
  %v1539 = vmul.f32 %v1533, %v665
  %v1540 = vadd.f32 %v1534, 1e-06
  %v1541 = vadd.f32 %v1535, 1e-06
  %v1542 = vadd.f32 %v1536, 1e-06
  %v1543 = vadd.f32 %v1537, 1e-06
  %v1544 = vadd.f32 %v1538, 1e-06
  %v1545 = vadd.f32 %v1539, 1e-06
  %v1546 = vrsqrt.pop %v1540
  %v1547 = vmul.f32 %v1546, %v1540
  %v1548 = vmul.f32 %v1547, %v1546
  %v1549 = vmul.f32 0.5, %v1548
  %v1550 = vsub.f32 1.5, %v1549
  %v1551 = vmul.f32 %v1546, %v1550
  %vm1552 = vweird.f32 %v1540
  %vm1553 = vweird.f32 %v1546
  %vm1554 = vmor %vm1552, %vm1553
  %v1555 = vsel %vm1554, %v1546, %v1551
  %v1556 = vrsqrt.pop %v1541
  %v1557 = vmul.f32 %v1556, %v1541
  %v1558 = vmul.f32 %v1557, %v1556
  %v1559 = vmul.f32 0.5, %v1558
  %v1560 = vsub.f32 1.5, %v1559
  %v1561 = vmul.f32 %v1556, %v1560
  %vm1562 = vweird.f32 %v1541
  %vm1563 = vweird.f32 %v1556
  %vm1564 = vmor %vm1562, %vm1563
  %v1565 = vsel %vm1564, %v1556, %v1561
  %v1566 = vrsqrt.pop %v1542
  %v1567 = vmul.f32 %v1566, %v1542
  %v1568 = vmul.f32 %v1567, %v1566
  %v1569 = vmul.f32 0.5, %v1568
  %v1570 = vsub.f32 1.5, %v1569
  %v1571 = vmul.f32 %v1566, %v1570
  %vm1572 = vweird.f32 %v1542
  %vm1573 = vweird.f32 %v1566
  %vm1574 = vmor %vm1572, %vm1573
  %v1575 = vsel %vm1574, %v1566, %v1571
  %v1576 = vrsqrt.pop %v1543
  %v1577 = vmul.f32 %v1576, %v1543
  %v1578 = vmul.f32 %v1577, %v1576
  %v1579 = vmul.f32 0.5, %v1578
  %v1580 = vsub.f32 1.5, %v1579
  %v1581 = vmul.f32 %v1576, %v1580
  %vm1582 = vweird.f32 %v1543
  %vm1583 = vweird.f32 %v1576
  %vm1584 = vmor %vm1582, %vm1583
  %v1585 = vsel %vm1584, %v1576, %v1581
  %v1586 = vrsqrt.pop %v1544
  %v1587 = vmul.f32 %v1586, %v1544
  %v1588 = vmul.f32 %v1587, %v1586
  %v1589 = vmul.f32 0.5, %v1588
  %v1590 = vsub.f32 1.5, %v1589
  %v1591 = vmul.f32 %v1586, %v1590
  %vm1592 = vweird.f32 %v1544
  %vm1593 = vweird.f32 %v1586
  %vm1594 = vmor %vm1592, %vm1593
  %v1595 = vsel %vm1594, %v1586, %v1591
  %v1596 = vrsqrt.pop %v1545
  %v1597 = vmul.f32 %v1596, %v1545
  %v1598 = vmul.f32 %v1597, %v1596
  %v1599 = vmul.f32 0.5, %v1598
  %v1600 = vsub.f32 1.5, %v1599
  %v1601 = vmul.f32 %v1596, %v1600
  %vm1602 = vweird.f32 %v1545
  %vm1603 = vweird.f32 %v1596
  %vm1604 = vmor %vm1602, %vm1603
  %v1605 = vsel %vm1604, %v1596, %v1601
  %v1606 = vmul.f32 %v1502, %v1555
  %v1607 = vmul.f32 %v1503, %v1565
  %v1608 = vmul.f32 %v1504, %v1575
  %v1609 = vmul.f32 %v1505, %v1585
  %v1610 = vmul.f32 %v1506, %v1595
  %v1611 = vmul.f32 %v1507, %v1605
  %v1613 = vperm.slane %v1509, 0
  %v1615 = vmul.f32 %v1606, %v1613
  %v1616 = vmul.f32 %v1607, %v1613
  %v1617 = vmul.f32 %v1608, %v1613
  %v1618 = vmul.f32 %v1609, %v1613
  %v1619 = vmul.f32 %v1610, %v1613
  %v1620 = vmul.f32 %v1611, %v1613
  %v1621 = vpack.c.bf16 %v1616, %v1615
  %v1622 = vpack.c.bf16 %v1618, %v1617
  %v1623 = vpack.c.bf16 %v1620, %v1619
  %s1624 = scalar_lea.vmem %s4, 64
  %v1625 = vld [vmem:[%s1624] sm:$0xff]
  %v1626 = vld [vmem:[%s1624 + $0x8] sm:$0xff]
  %v1627 = vld [vmem:[%s1624 + $0x10] sm:$0xff]
  %v1628 = vld [vmem:[%s1624 + $0x18] sm:$0xff]
  %v1629 = vld [vmem:[%s1624 + $0x20] sm:$0xff]
  %v1630 = vld [vmem:[%s1624 + $0x28] sm:$0xff]
  %v1631 = vld [vmem:[%s1624 + $0x30] sm:$0xff]
  %v1632 = vld [vmem:[%s1624 + $0x38] sm:$0xff]
  %v1641 = vunpack.c.l.b16 %v1625
  %v1642 = vunpack.c.h.b16 %v1625
  %v1643 = vunpack.c.l.b16 %v1626
  %v1644 = vunpack.c.h.b16 %v1626
  %v1645 = vunpack.c.l.b16 %v1627
  %v1646 = vunpack.c.h.b16 %v1627
  %v1647 = vunpack.c.l.b16 %v1628
  %v1648 = vunpack.c.h.b16 %v1628
  %v1649 = vunpack.c.l.b16 %v1629
  %v1650 = vunpack.c.h.b16 %v1629
  %v1651 = vunpack.c.l.b16 %v1630
  %v1652 = vunpack.c.h.b16 %v1630
  %v1653 = vunpack.c.l.b16 %v1631
  %v1654 = vunpack.c.h.b16 %v1631
  %v1655 = vunpack.c.l.b16 %v1632
  %v1656 = vunpack.c.h.b16 %v1632
  %v1657 = vpack.c.b16 %v1643, %v1641
  %v1658 = vpack.c.b16 %v1644, %v1642
  %v1659 = vpack.c.b16 %v1647, %v1645
  %v1660 = vpack.c.b16 %v1648, %v1646
  %v1661 = vpack.c.b16 %v1651, %v1649
  %v1662 = vpack.c.b16 %v1652, %v1650
  %v1663 = vpack.c.b16 %v1655, %v1653
  %v1664 = vpack.c.b16 %v1656, %v1654
  %v1674 = vsel %vm640, %v1621, 0
  %v1677 = vsel %vm640, %v1622, 0
  %v1680 = vsel %vm640, %v1623, 0
  %1682 = vmatpush.bf16.msra.mxu0 0
  %1683 = vmatpush.bf16.msra.mxu0 0
  %1684 = vmatpush.bf16.msra.mxu0 0
  %1685 = vmatpush.bf16.msra.mxu0 0
  %1686 = vmatpush.bf16.msra.mxu0 %v1663
  %1687 = vmatpush.bf16.msra.mxu0 %v1661
  %1688 = vmatpush.bf16.msra.mxu0 %v1659
  %1689 = vmatpush.bf16.msra.mxu0 %v1657
  %1690 = vmatmul.bf16.gmra.mxu0 %v1674
  %v1691 = vpop.f32.mrf.mxu0
  %v1692 = vadd.f32 0.0, %v1691
  %v1693 = vpop.f32.mrf.mxu0
  %v1694 = vadd.f32 0.0, %v1693
  %1695 = vmatmul.bf16.gmra.mxu0 %v1677
  %v1696 = vpop.f32.mrf.mxu0
  %v1697 = vadd.f32 0.0, %v1696
  %v1698 = vpop.f32.mrf.mxu0
  %v1699 = vadd.f32 0.0, %v1698
  %1700 = vmatmul.bf16.gmra.mxu0 %v1680
  %v1701 = vpop.f32.mrf.mxu0
  %v1702 = vadd.f32 0.0, %v1701
  %v1703 = vpop.f32.mrf.mxu0
  %v1704 = vadd.f32 0.0, %v1703
  %1705 = vdwg.mxu0
  %1706 = vmatpush.bf16.msra.mxu0 0
  %1707 = vmatpush.bf16.msra.mxu0 0
  %1708 = vmatpush.bf16.msra.mxu0 0
  %1709 = vmatpush.bf16.msra.mxu0 0
  %1710 = vmatpush.bf16.msra.mxu0 %v1664
  %1711 = vmatpush.bf16.msra.mxu0 %v1662
  %1712 = vmatpush.bf16.msra.mxu0 %v1660
  %1713 = vmatpush.bf16.msra.mxu0 %v1658
  %1714 = vmatmul.bf16.gmra.mxu0 %v1674
  %v1715 = vpop.f32.mrf.mxu0
  %v1716 = vadd.f32 0.0, %v1715
  %v1717 = vpop.f32.mrf.mxu0
  %v1718 = vadd.f32 0.0, %v1717
  %1719 = vmatmul.bf16.gmra.mxu0 %v1677
  %v1720 = vpop.f32.mrf.mxu0
  %v1721 = vadd.f32 0.0, %v1720
  %v1722 = vpop.f32.mrf.mxu0
  %v1723 = vadd.f32 0.0, %v1722
  %1724 = vmatmul.bf16.gmra.mxu0 %v1680
  %v1725 = vpop.f32.mrf.mxu0
  %v1726 = vadd.f32 0.0, %v1725
  %v1727 = vpop.f32.mrf.mxu0
  %v1728 = vadd.f32 0.0, %v1727
  %1729 = vdwg.mxu0
  %v1730 = vpack.c.bf16 %v1716, %v1692
  %v1731 = vpack.c.bf16 %v1718, %v1694
  %v1732 = vpack.c.bf16 %v1721, %v1697
  %v1733 = vpack.c.bf16 %v1723, %v1699
  %v1734 = vpack.c.bf16 %v1726, %v1702
  %v1735 = vpack.c.bf16 %v1728, %v1704
  %v1742 = vunpack.c.l.b16 %v1730
  %v1743 = vunpack.c.l.b16 %v1731
  %v1744 = vunpack.c.l.b16 %v1732
  %v1745 = vunpack.c.l.b16 %v1733
  %v1746 = vunpack.c.l.b16 %v1734
  %v1747 = vunpack.c.l.b16 %v1735
  %v1748 = vpack.c.b16 %v1743, %v1742
  %v1749 = vpack.c.b16 %v1745, %v1744
  %v1750 = vpack.c.b16 %v1747, %v1746
  %1751 = vrot.lane.b32.xlu0 %v1748, 64
  %v1752 = vpop.permute.xlu0 %1751
  %1753 = vrot.lane.b32.xlu0 %v1749, 64
  %v1754 = vpop.permute.xlu0 %1753
  %1755 = vrot.lane.b32.xlu0 %v1750, 64
  %v1756 = vpop.permute.xlu0 %1755
  %v1758 = vsel %vm640, %v1748, 0
  %v1761 = vsel %vm640, %v1749, 0
  %v1764 = vsel %vm640, %v1750, 0
  %v1767 = vsel %vm640, %v1752, 0
  %v1770 = vsel %vm640, %v1754, 0
  %v1773 = vsel %vm640, %v1756, 0
  %1775 = vmatpush.bf16.xpose.msra.mxu0 0
  %1776 = vmatpush.bf16.xpose.msra.mxu0 0
  %1777 = vmatpush.bf16.xpose.msra.mxu0 0
  %1778 = vmatpush.bf16.xpose.msra.mxu0 0
  %1779 = vmatpush.bf16.xpose.msra.mxu0 0
  %1780 = vmatpush.bf16.xpose.msra.mxu0 %v1773
  %1781 = vmatpush.bf16.xpose.msra.mxu0 %v1770
  %1782 = vmatpush.bf16.xpose.msra.mxu0 %v1767
  %1783 = vmatmul.bf16.gmra.mxu0 %v1758
  %v1784 = vpop.f32.mrf.mxu0
  %v1785 = vadd.f32 0.0, %v1784
  %v1786 = vpop.f32.mrf.mxu0
  %v1787 = vadd.f32 0.0, %v1786
  %1788 = vmatmul.bf16.gmra.mxu0 %v1761
  %v1789 = vpop.f32.mrf.mxu0
  %v1790 = vadd.f32 0.0, %v1789
  %v1791 = vpop.f32.mrf.mxu0
  %v1792 = vadd.f32 0.0, %v1791
  %1793 = vmatmul.bf16.gmra.mxu0 %v1764
  %v1794 = vpop.f32.mrf.mxu0
  %v1795 = vadd.f32 0.0, %v1794
  %v1796 = vpop.f32.mrf.mxu0
  %v1797 = vadd.f32 0.0, %v1796
  %1798 = vdwg.mxu0
  %v1799 = vmul.f32 %v1785, 0.125
  %v1800 = vmul.f32 %v1787, 0.125
  %v1801 = vmul.f32 %v1790, 0.125
  %v1802 = vmul.f32 %v1792, 0.125
  %v1803 = vmul.f32 %v1795, 0.125
  %v1804 = vmul.f32 %v1797, 0.125
  %v1805 = vsel %vm627, %v1799, -1e+30
  %v1806 = vsel %vm628, %v1800, -1e+30
  %v1807 = vsel %vm629, %v1801, -1e+30
  %v1808 = vsel %vm630, %v1802, -1e+30
  %v1809 = vsel %vm631, %v1803, -1e+30
  %v1810 = vsel %vm632, %v1804, -1e+30
  %v1811 = vsel %vm942, %v1805, -inf
  %1812 = vmax.xlane.f32.xlu0 %v1811
  %v1813 = vpop.xlane.xlu0 %1812
  %v1814 = vsel %vm942, %v1806, -inf
  %1815 = vmax.xlane.f32.xlu0 %v1814
  %v1816 = vpop.xlane.xlu0 %1815
  %v1817 = vsel %vm942, %v1807, -inf
  %1818 = vmax.xlane.f32.xlu0 %v1817
  %v1819 = vpop.xlane.xlu0 %1818
  %v1820 = vsel %vm942, %v1808, -inf
  %1821 = vmax.xlane.f32.xlu0 %v1820
  %v1822 = vpop.xlane.xlu0 %1821
  %v1823 = vsel %vm942, %v1809, -inf
  %1824 = vmax.xlane.f32.xlu0 %v1823
  %v1825 = vpop.xlane.xlu0 %1824
  %v1826 = vsel %vm942, %v1810, -inf
  %1827 = vmax.xlane.f32.xlu0 %v1826
  %v1828 = vpop.xlane.xlu0 %1827
  %v1829 = vsub.f32 %v1805, %v1813
  %v1830 = vsub.f32 %v1806, %v1816
  %v1831 = vsub.f32 %v1807, %v1819
  %v1832 = vsub.f32 %v1808, %v1822
  %v1833 = vsub.f32 %v1809, %v1825
  %v1834 = vsub.f32 %v1810, %v1828
  %v1835 = vmul.f32 %v1829, 1.442695
  %v1836 = vpow.pop %v1835
  %v1837 = vmul.f32 %v1830, 1.442695
  %v1838 = vpow.pop %v1837
  %v1839 = vmul.f32 %v1831, 1.442695
  %v1840 = vpow.pop %v1839
  %v1841 = vmul.f32 %v1832, 1.442695
  %v1842 = vpow.pop %v1841
  %v1843 = vmul.f32 %v1833, 1.442695
  %v1844 = vpow.pop %v1843
  %v1845 = vmul.f32 %v1834, 1.442695
  %v1846 = vpow.pop %v1845
  %v1847 = vsel %vm942, %v1836, 0.0
  %1848 = vadd.xlane.f32.xlu0 %v1847
  %v1849 = vpop.xlane.xlu0 %1848
  %v1850 = vsel %vm942, %v1838, 0.0
  %1851 = vadd.xlane.f32.xlu0 %v1850
  %v1852 = vpop.xlane.xlu0 %1851
  %v1853 = vsel %vm942, %v1840, 0.0
  %1854 = vadd.xlane.f32.xlu0 %v1853
  %v1855 = vpop.xlane.xlu0 %1854
  %v1856 = vsel %vm942, %v1842, 0.0
  %1857 = vadd.xlane.f32.xlu0 %v1856
  %v1858 = vpop.xlane.xlu0 %1857
  %v1859 = vsel %vm942, %v1844, 0.0
  %1860 = vadd.xlane.f32.xlu0 %v1859
  %v1861 = vpop.xlane.xlu0 %1860
  %v1862 = vsel %vm942, %v1846, 0.0
  %1863 = vadd.xlane.f32.xlu0 %v1862
  %v1864 = vpop.xlane.xlu0 %1863
  %v1865 = vrcp.pop %v1849
  %v1866 = vrcp.pop %v1852
  %v1867 = vrcp.pop %v1855
  %v1868 = vrcp.pop %v1858
  %v1869 = vrcp.pop %v1861
  %v1870 = vrcp.pop %v1864
  %v1871 = vmul.f32 %v1836, %v1865
  %v1872 = vmul.f32 %v1838, %v1866
  %v1873 = vmul.f32 %v1840, %v1867
  %v1874 = vmul.f32 %v1842, %v1868
  %v1875 = vmul.f32 %v1844, %v1869
  %v1876 = vmul.f32 %v1846, %v1870
  %v1877 = vpack.c.bf16 %v1872, %v1871
  %v1878 = vpack.c.bf16 %v1874, %v1873
  %v1879 = vpack.c.bf16 %v1876, %v1875
  %v1880 = vunpack.c.h.b16 %v1730
  %v1881 = vunpack.c.h.b16 %v1731
  %v1882 = vunpack.c.h.b16 %v1732
  %v1883 = vunpack.c.h.b16 %v1733
  %v1884 = vunpack.c.h.b16 %v1734
  %v1885 = vunpack.c.h.b16 %v1735
  %v1886 = vpack.c.b16 %v1881, %v1880
  %v1887 = vpack.c.b16 %v1883, %v1882
  %v1888 = vpack.c.b16 %v1885, %v1884
  %v1893 = vsel %vm942, %v1877, 0
  %v1896 = vsel %vm942, %v1878, 0
  %v1899 = vsel %vm942, %v1879, 0
  %1901 = vmatpush.bf16.msra.mxu0 0
  %1902 = vmatpush.bf16.msra.mxu0 0
  %1903 = vmatpush.bf16.msra.mxu0 0
  %1904 = vmatpush.bf16.msra.mxu0 0
  %1905 = vmatpush.bf16.msra.mxu0 0
  %1906 = vmatpush.bf16.msra.mxu0 %v1888
  %1907 = vmatpush.bf16.msra.mxu0 %v1887
  %1908 = vmatpush.bf16.msra.mxu0 %v1886
  %1909 = vmatmul.bf16.gmra.mxu0 %v1893
  %v1910 = vpop.f32.mrf.mxu0
  %v1911 = vadd.f32 0.0, %v1910
  %v1912 = vpop.f32.mrf.mxu0
  %v1913 = vadd.f32 0.0, %v1912
  %1914 = vmatmul.bf16.gmra.mxu0 %v1896
  %v1915 = vpop.f32.mrf.mxu0
  %v1916 = vadd.f32 0.0, %v1915
  %v1917 = vpop.f32.mrf.mxu0
  %v1918 = vadd.f32 0.0, %v1917
  %1919 = vmatmul.bf16.gmra.mxu0 %v1899
  %v1920 = vpop.f32.mrf.mxu0
  %v1921 = vadd.f32 0.0, %v1920
  %v1922 = vpop.f32.mrf.mxu0
  %v1923 = vadd.f32 0.0, %v1922
  %1924 = vdwg.mxu0
  %v1925 = vpack.c.bf16 %v1913, %v1911
  %v1926 = vpack.c.bf16 %v1918, %v1916
  %v1927 = vpack.c.bf16 %v1923, %v1921
  %s1928 = scalar_lea.vmem %s5, 32
  %v1929 = vld [vmem:[%s1928] sm:$0xf]
  %v1930 = vld [vmem:[%s1928 + $0x4] sm:$0xf]
  %v1931 = vld [vmem:[%s1928 + $0x8] sm:$0xf]
  %v1932 = vld [vmem:[%s1928 + $0xc] sm:$0xf]
  %v1933 = vld [vmem:[%s1928 + $0x10] sm:$0xf]
  %v1934 = vld [vmem:[%s1928 + $0x14] sm:$0xf]
  %v1935 = vld [vmem:[%s1928 + $0x18] sm:$0xf]
  %v1936 = vld [vmem:[%s1928 + $0x1c] sm:$0xf]
  %v1945 = vunpack.c.l.b16 %v1929
  %v1946 = vunpack.c.l.b16 %v1930
  %v1947 = vunpack.c.l.b16 %v1931
  %v1948 = vunpack.c.l.b16 %v1932
  %v1949 = vunpack.c.l.b16 %v1933
  %v1950 = vunpack.c.l.b16 %v1934
  %v1951 = vunpack.c.l.b16 %v1935
  %v1952 = vunpack.c.l.b16 %v1936
  %v1953 = vpack.c.b16 %v1946, %v1945
  %v1954 = vpack.c.b16 %v1948, %v1947
  %v1955 = vpack.c.b16 %v1950, %v1949
  %v1956 = vpack.c.b16 %v1952, %v1951
  %v1962 = vsel %vm640, %v1925, 0
  %v1965 = vsel %vm640, %v1926, 0
  %v1968 = vsel %vm640, %v1927, 0
  %1970 = vmatpush.bf16.msra.mxu0 0
  %1971 = vmatpush.bf16.msra.mxu0 0
  %1972 = vmatpush.bf16.msra.mxu0 0
  %1973 = vmatpush.bf16.msra.mxu0 0
  %1974 = vmatpush.bf16.msra.mxu0 %v1956
  %1975 = vmatpush.bf16.msra.mxu0 %v1955
  %1976 = vmatpush.bf16.msra.mxu0 %v1954
  %1977 = vmatpush.bf16.msra.mxu0 %v1953
  %1978 = vmatmul.bf16.gmra.mxu0 %v1962
  %v1979 = vpop.f32.mrf.mxu0
  %v1980 = vadd.f32 0.0, %v1979
  %v1981 = vpop.f32.mrf.mxu0
  %v1982 = vadd.f32 0.0, %v1981
  %1983 = vmatmul.bf16.gmra.mxu0 %v1965
  %v1984 = vpop.f32.mrf.mxu0
  %v1985 = vadd.f32 0.0, %v1984
  %v1986 = vpop.f32.mrf.mxu0
  %v1987 = vadd.f32 0.0, %v1986
  %1988 = vmatmul.bf16.gmra.mxu0 %v1968
  %v1989 = vpop.f32.mrf.mxu0
  %v1990 = vadd.f32 0.0, %v1989
  %v1991 = vpop.f32.mrf.mxu0
  %v1992 = vadd.f32 0.0, %v1991
  %1993 = vdwg.mxu0
  %v1994 = vadd.f32 %v1502, %v1980
  %v1995 = vadd.f32 %v1503, %v1982
  %v1996 = vadd.f32 %v1504, %v1985
  %v1997 = vadd.f32 %v1505, %v1987
  %v1998 = vadd.f32 %v1506, %v1990
  %v1999 = vadd.f32 %v1507, %v1992
  %s2000 = scalar_lea.vmem %s6, 1
  %v2001 = vld [vmem:[%s2000] sm:$0x1]
  %v2002 = vmul.f32 %v1994, %v1994
  %v2003 = vmul.f32 %v1995, %v1995
  %v2004 = vmul.f32 %v1996, %v1996
  %v2005 = vmul.f32 %v1997, %v1997
  %v2006 = vmul.f32 %v1998, %v1998
  %v2007 = vmul.f32 %v1999, %v1999
  %v2008 = vsel %vm640, %v2002, 0.0
  %2009 = vadd.xlane.f32.xlu0 %v2008
  %v2010 = vpop.xlane.xlu0 %2009
  %v2011 = vsel %vm640, %v2003, 0.0
  %2012 = vadd.xlane.f32.xlu0 %v2011
  %v2013 = vpop.xlane.xlu0 %2012
  %v2014 = vsel %vm640, %v2004, 0.0
  %2015 = vadd.xlane.f32.xlu0 %v2014
  %v2016 = vpop.xlane.xlu0 %2015
  %v2017 = vsel %vm640, %v2005, 0.0
  %2018 = vadd.xlane.f32.xlu0 %v2017
  %v2019 = vpop.xlane.xlu0 %2018
  %v2020 = vsel %vm640, %v2006, 0.0
  %2021 = vadd.xlane.f32.xlu0 %v2020
  %v2022 = vpop.xlane.xlu0 %2021
  %v2023 = vsel %vm640, %v2007, 0.0
  %2024 = vadd.xlane.f32.xlu0 %v2023
  %v2025 = vpop.xlane.xlu0 %2024
  %v2026 = vmul.f32 %v2010, %v665
  %v2027 = vmul.f32 %v2013, %v665
  %v2028 = vmul.f32 %v2016, %v665
  %v2029 = vmul.f32 %v2019, %v665
  %v2030 = vmul.f32 %v2022, %v665
  %v2031 = vmul.f32 %v2025, %v665
  %v2032 = vadd.f32 %v2026, 1e-06
  %v2033 = vadd.f32 %v2027, 1e-06
  %v2034 = vadd.f32 %v2028, 1e-06
  %v2035 = vadd.f32 %v2029, 1e-06
  %v2036 = vadd.f32 %v2030, 1e-06
  %v2037 = vadd.f32 %v2031, 1e-06
  %v2038 = vrsqrt.pop %v2032
  %v2039 = vmul.f32 %v2038, %v2032
  %v2040 = vmul.f32 %v2039, %v2038
  %v2041 = vmul.f32 0.5, %v2040
  %v2042 = vsub.f32 1.5, %v2041
  %v2043 = vmul.f32 %v2038, %v2042
  %vm2044 = vweird.f32 %v2032
  %vm2045 = vweird.f32 %v2038
  %vm2046 = vmor %vm2044, %vm2045
  %v2047 = vsel %vm2046, %v2038, %v2043
  %v2048 = vrsqrt.pop %v2033
  %v2049 = vmul.f32 %v2048, %v2033
  %v2050 = vmul.f32 %v2049, %v2048
  %v2051 = vmul.f32 0.5, %v2050
  %v2052 = vsub.f32 1.5, %v2051
  %v2053 = vmul.f32 %v2048, %v2052
  %vm2054 = vweird.f32 %v2033
  %vm2055 = vweird.f32 %v2048
  %vm2056 = vmor %vm2054, %vm2055
  %v2057 = vsel %vm2056, %v2048, %v2053
  %v2058 = vrsqrt.pop %v2034
  %v2059 = vmul.f32 %v2058, %v2034
  %v2060 = vmul.f32 %v2059, %v2058
  %v2061 = vmul.f32 0.5, %v2060
  %v2062 = vsub.f32 1.5, %v2061
  %v2063 = vmul.f32 %v2058, %v2062
  %vm2064 = vweird.f32 %v2034
  %vm2065 = vweird.f32 %v2058
  %vm2066 = vmor %vm2064, %vm2065
  %v2067 = vsel %vm2066, %v2058, %v2063
  %v2068 = vrsqrt.pop %v2035
  %v2069 = vmul.f32 %v2068, %v2035
  %v2070 = vmul.f32 %v2069, %v2068
  %v2071 = vmul.f32 0.5, %v2070
  %v2072 = vsub.f32 1.5, %v2071
  %v2073 = vmul.f32 %v2068, %v2072
  %vm2074 = vweird.f32 %v2035
  %vm2075 = vweird.f32 %v2068
  %vm2076 = vmor %vm2074, %vm2075
  %v2077 = vsel %vm2076, %v2068, %v2073
  %v2078 = vrsqrt.pop %v2036
  %v2079 = vmul.f32 %v2078, %v2036
  %v2080 = vmul.f32 %v2079, %v2078
  %v2081 = vmul.f32 0.5, %v2080
  %v2082 = vsub.f32 1.5, %v2081
  %v2083 = vmul.f32 %v2078, %v2082
  %vm2084 = vweird.f32 %v2036
  %vm2085 = vweird.f32 %v2078
  %vm2086 = vmor %vm2084, %vm2085
  %v2087 = vsel %vm2086, %v2078, %v2083
  %v2088 = vrsqrt.pop %v2037
  %v2089 = vmul.f32 %v2088, %v2037
  %v2090 = vmul.f32 %v2089, %v2088
  %v2091 = vmul.f32 0.5, %v2090
  %v2092 = vsub.f32 1.5, %v2091
  %v2093 = vmul.f32 %v2088, %v2092
  %vm2094 = vweird.f32 %v2037
  %vm2095 = vweird.f32 %v2088
  %vm2096 = vmor %vm2094, %vm2095
  %v2097 = vsel %vm2096, %v2088, %v2093
  %v2098 = vmul.f32 %v1994, %v2047
  %v2099 = vmul.f32 %v1995, %v2057
  %v2100 = vmul.f32 %v1996, %v2067
  %v2101 = vmul.f32 %v1997, %v2077
  %v2102 = vmul.f32 %v1998, %v2087
  %v2103 = vmul.f32 %v1999, %v2097
  %v2105 = vperm.slane %v2001, 0
  %v2107 = vmul.f32 %v2098, %v2105
  %v2108 = vmul.f32 %v2099, %v2105
  %v2109 = vmul.f32 %v2100, %v2105
  %v2110 = vmul.f32 %v2101, %v2105
  %v2111 = vmul.f32 %v2102, %v2105
  %v2112 = vmul.f32 %v2103, %v2105
  %v2113 = vpack.c.bf16 %v2108, %v2107
  %v2114 = vpack.c.bf16 %v2110, %v2109
  %v2115 = vpack.c.bf16 %v2112, %v2111
  %s2116 = scalar_lea.vmem %s7, 64
  %v2117 = vld [vmem:[%s2116] sm:$0xff]
  %v2118 = vld [vmem:[%s2116 + $0x8] sm:$0xff]
  %v2119 = vld [vmem:[%s2116 + $0x10] sm:$0xff]
  %v2120 = vld [vmem:[%s2116 + $0x18] sm:$0xff]
  %v2121 = vld [vmem:[%s2116 + $0x20] sm:$0xff]
  %v2122 = vld [vmem:[%s2116 + $0x28] sm:$0xff]
  %v2123 = vld [vmem:[%s2116 + $0x30] sm:$0xff]
  %v2124 = vld [vmem:[%s2116 + $0x38] sm:$0xff]
  %v2133 = vunpack.c.l.b16 %v2117
  %v2134 = vunpack.c.h.b16 %v2117
  %v2135 = vunpack.c.l.b16 %v2118
  %v2136 = vunpack.c.h.b16 %v2118
  %v2137 = vunpack.c.l.b16 %v2119
  %v2138 = vunpack.c.h.b16 %v2119
  %v2139 = vunpack.c.l.b16 %v2120
  %v2140 = vunpack.c.h.b16 %v2120
  %v2141 = vunpack.c.l.b16 %v2121
  %v2142 = vunpack.c.h.b16 %v2121
  %v2143 = vunpack.c.l.b16 %v2122
  %v2144 = vunpack.c.h.b16 %v2122
  %v2145 = vunpack.c.l.b16 %v2123
  %v2146 = vunpack.c.h.b16 %v2123
  %v2147 = vunpack.c.l.b16 %v2124
  %v2148 = vunpack.c.h.b16 %v2124
  %v2149 = vpack.c.b16 %v2135, %v2133
  %v2150 = vpack.c.b16 %v2136, %v2134
  %v2151 = vpack.c.b16 %v2139, %v2137
  %v2152 = vpack.c.b16 %v2140, %v2138
  %v2153 = vpack.c.b16 %v2143, %v2141
  %v2154 = vpack.c.b16 %v2144, %v2142
  %v2155 = vpack.c.b16 %v2147, %v2145
  %v2156 = vpack.c.b16 %v2148, %v2146
  %v2166 = vsel %vm640, %v2113, 0
  %v2169 = vsel %vm640, %v2114, 0
  %v2172 = vsel %vm640, %v2115, 0
  %2174 = vmatpush.bf16.msra.mxu0 0
  %2175 = vmatpush.bf16.msra.mxu0 0
  %2176 = vmatpush.bf16.msra.mxu0 0
  %2177 = vmatpush.bf16.msra.mxu0 0
  %2178 = vmatpush.bf16.msra.mxu0 %v2155
  %2179 = vmatpush.bf16.msra.mxu0 %v2153
  %2180 = vmatpush.bf16.msra.mxu0 %v2151
  %2181 = vmatpush.bf16.msra.mxu0 %v2149
  %2182 = vmatmul.bf16.gmra.mxu0 %v2166
  %v2183 = vpop.f32.mrf.mxu0
  %v2184 = vadd.f32 0.0, %v2183
  %v2185 = vpop.f32.mrf.mxu0
  %v2186 = vadd.f32 0.0, %v2185
  %2187 = vmatmul.bf16.gmra.mxu0 %v2169
  %v2188 = vpop.f32.mrf.mxu0
  %v2189 = vadd.f32 0.0, %v2188
  %v2190 = vpop.f32.mrf.mxu0
  %v2191 = vadd.f32 0.0, %v2190
  %2192 = vmatmul.bf16.gmra.mxu0 %v2172
  %v2193 = vpop.f32.mrf.mxu0
  %v2194 = vadd.f32 0.0, %v2193
  %v2195 = vpop.f32.mrf.mxu0
  %v2196 = vadd.f32 0.0, %v2195
  %2197 = vdwg.mxu0
  %2198 = vmatpush.bf16.msra.mxu0 0
  %2199 = vmatpush.bf16.msra.mxu0 0
  %2200 = vmatpush.bf16.msra.mxu0 0
  %2201 = vmatpush.bf16.msra.mxu0 0
  %2202 = vmatpush.bf16.msra.mxu0 %v2156
  %2203 = vmatpush.bf16.msra.mxu0 %v2154
  %2204 = vmatpush.bf16.msra.mxu0 %v2152
  %2205 = vmatpush.bf16.msra.mxu0 %v2150
  %2206 = vmatmul.bf16.gmra.mxu0 %v2166
  %v2207 = vpop.f32.mrf.mxu0
  %v2208 = vadd.f32 0.0, %v2207
  %v2209 = vpop.f32.mrf.mxu0
  %v2210 = vadd.f32 0.0, %v2209
  %2211 = vmatmul.bf16.gmra.mxu0 %v2169
  %v2212 = vpop.f32.mrf.mxu0
  %v2213 = vadd.f32 0.0, %v2212
  %v2214 = vpop.f32.mrf.mxu0
  %v2215 = vadd.f32 0.0, %v2214
  %2216 = vmatmul.bf16.gmra.mxu0 %v2172
  %v2217 = vpop.f32.mrf.mxu0
  %v2218 = vadd.f32 0.0, %v2217
  %v2219 = vpop.f32.mrf.mxu0
  %v2220 = vadd.f32 0.0, %v2219
  %2221 = vdwg.mxu0
  %v2222 = vmul.f32 %v2184, %v2184
  %v2223 = vmul.f32 %v2186, %v2186
  %v2224 = vmul.f32 %v2189, %v2189
  %v2225 = vmul.f32 %v2191, %v2191
  %v2226 = vmul.f32 %v2194, %v2194
  %v2227 = vmul.f32 %v2196, %v2196
  %v2228 = vmul.f32 %v2184, %v2222
  %v2229 = vmul.f32 %v2186, %v2223
  %v2230 = vmul.f32 %v2189, %v2224
  %v2231 = vmul.f32 %v2191, %v2225
  %v2232 = vmul.f32 %v2194, %v2226
  %v2233 = vmul.f32 %v2196, %v2227
  %v2234 = vmul.f32 %v2228, 0.044715
  %v2235 = vmul.f32 %v2229, 0.044715
  %v2236 = vmul.f32 %v2230, 0.044715
  %v2237 = vmul.f32 %v2231, 0.044715
  %v2238 = vmul.f32 %v2232, 0.044715
  %v2239 = vmul.f32 %v2233, 0.044715
  %v2240 = vadd.f32 %v2184, %v2234
  %v2241 = vadd.f32 %v2186, %v2235
  %v2242 = vadd.f32 %v2189, %v2236
  %v2243 = vadd.f32 %v2191, %v2237
  %v2244 = vadd.f32 %v2194, %v2238
  %v2245 = vadd.f32 %v2196, %v2239
  %v2246 = vmul.f32 %v2240, 0.7978846
  %v2247 = vmul.f32 %v2241, 0.7978846
  %v2248 = vmul.f32 %v2242, 0.7978846
  %v2249 = vmul.f32 %v2243, 0.7978846
  %v2250 = vmul.f32 %v2244, 0.7978846
  %v2251 = vmul.f32 %v2245, 0.7978846
  %v2252 = vtanh.pop %v2246
  %v2253 = vtanh.pop %v2247
  %v2254 = vtanh.pop %v2248
  %v2255 = vtanh.pop %v2249
  %v2256 = vtanh.pop %v2250
  %v2257 = vtanh.pop %v2251
  %v2258 = vadd.f32 %v2252, 1.0
  %v2259 = vadd.f32 %v2253, 1.0
  %v2260 = vadd.f32 %v2254, 1.0
  %v2261 = vadd.f32 %v2255, 1.0
  %v2262 = vadd.f32 %v2256, 1.0
  %v2263 = vadd.f32 %v2257, 1.0
  %v2264 = vmul.f32 %v2258, 0.5
  %v2265 = vmul.f32 %v2259, 0.5
  %v2266 = vmul.f32 %v2260, 0.5
  %v2267 = vmul.f32 %v2261, 0.5
  %v2268 = vmul.f32 %v2262, 0.5
  %v2269 = vmul.f32 %v2263, 0.5
  %v2270 = vmul.f32 %v2184, %v2264
  %v2271 = vmul.f32 %v2186, %v2265
  %v2272 = vmul.f32 %v2189, %v2266
  %v2273 = vmul.f32 %v2191, %v2267
  %v2274 = vmul.f32 %v2194, %v2268
  %v2275 = vmul.f32 %v2196, %v2269
  %v2276 = vmul.f32 %v2270, %v2208
  %v2277 = vmul.f32 %v2271, %v2210
  %v2278 = vmul.f32 %v2272, %v2213
  %v2279 = vmul.f32 %v2273, %v2215
  %v2280 = vmul.f32 %v2274, %v2218
  %v2281 = vmul.f32 %v2275, %v2220
  %v2282 = vpack.c.bf16 %v2277, %v2276
  %v2283 = vpack.c.bf16 %v2279, %v2278
  %v2284 = vpack.c.bf16 %v2281, %v2280
  %s2285 = scalar_lea.vmem %s8, 64
  %v2286 = vld [vmem:[%s2285] sm:$0xf]
  %v2287 = vld [vmem:[%s2285 + $0x4] sm:$0xf]
  %v2288 = vld [vmem:[%s2285 + $0x8] sm:$0xf]
  %v2289 = vld [vmem:[%s2285 + $0xc] sm:$0xf]
  %v2290 = vld [vmem:[%s2285 + $0x10] sm:$0xf]
  %v2291 = vld [vmem:[%s2285 + $0x14] sm:$0xf]
  %v2292 = vld [vmem:[%s2285 + $0x18] sm:$0xf]
  %v2293 = vld [vmem:[%s2285 + $0x1c] sm:$0xf]
  %v2294 = vld [vmem:[%s2285 + $0x20] sm:$0xf]
  %v2295 = vld [vmem:[%s2285 + $0x24] sm:$0xf]
  %v2296 = vld [vmem:[%s2285 + $0x28] sm:$0xf]
  %v2297 = vld [vmem:[%s2285 + $0x2c] sm:$0xf]
  %v2298 = vld [vmem:[%s2285 + $0x30] sm:$0xf]
  %v2299 = vld [vmem:[%s2285 + $0x34] sm:$0xf]
  %v2300 = vld [vmem:[%s2285 + $0x38] sm:$0xf]
  %v2301 = vld [vmem:[%s2285 + $0x3c] sm:$0xf]
  %v2318 = vunpack.c.l.b16 %v2286
  %v2319 = vunpack.c.l.b16 %v2287
  %v2320 = vunpack.c.l.b16 %v2288
  %v2321 = vunpack.c.l.b16 %v2289
  %v2322 = vunpack.c.l.b16 %v2290
  %v2323 = vunpack.c.l.b16 %v2291
  %v2324 = vunpack.c.l.b16 %v2292
  %v2325 = vunpack.c.l.b16 %v2293
  %v2326 = vunpack.c.l.b16 %v2294
  %v2327 = vunpack.c.l.b16 %v2295
  %v2328 = vunpack.c.l.b16 %v2296
  %v2329 = vunpack.c.l.b16 %v2297
  %v2330 = vunpack.c.l.b16 %v2298
  %v2331 = vunpack.c.l.b16 %v2299
  %v2332 = vunpack.c.l.b16 %v2300
  %v2333 = vunpack.c.l.b16 %v2301
  %v2334 = vpack.c.b16 %v2319, %v2318
  %v2335 = vpack.c.b16 %v2321, %v2320
  %v2336 = vpack.c.b16 %v2323, %v2322
  %v2337 = vpack.c.b16 %v2325, %v2324
  %v2338 = vpack.c.b16 %v2327, %v2326
  %v2339 = vpack.c.b16 %v2329, %v2328
  %v2340 = vpack.c.b16 %v2331, %v2330
  %v2341 = vpack.c.b16 %v2333, %v2332
  %2350 = vmatpush.bf16.msra.mxu0 %v2341
  %2351 = vmatpush.bf16.msra.mxu0 %v2340
  %2352 = vmatpush.bf16.msra.mxu0 %v2339
  %2353 = vmatpush.bf16.msra.mxu0 %v2338
  %2354 = vmatpush.bf16.msra.mxu0 %v2337
  %2355 = vmatpush.bf16.msra.mxu0 %v2336
  %2356 = vmatpush.bf16.msra.mxu0 %v2335
  %2357 = vmatpush.bf16.msra.mxu0 %v2334
  %2358 = vmatmul.bf16.gmra.mxu0 %v2282
  %v2359 = vpop.f32.mrf.mxu0
  %v2360 = vadd.f32 0.0, %v2359
  %v2361 = vpop.f32.mrf.mxu0
  %v2362 = vadd.f32 0.0, %v2361
  %2363 = vmatmul.bf16.gmra.mxu0 %v2283
  %v2364 = vpop.f32.mrf.mxu0
  %v2365 = vadd.f32 0.0, %v2364
  %v2366 = vpop.f32.mrf.mxu0
  %v2367 = vadd.f32 0.0, %v2366
  %2368 = vmatmul.bf16.gmra.mxu0 %v2284
  %v2369 = vpop.f32.mrf.mxu0
  %v2370 = vadd.f32 0.0, %v2369
  %v2371 = vpop.f32.mrf.mxu0
  %v2372 = vadd.f32 0.0, %v2371
  %2373 = vdwg.mxu0
  %v2374 = vadd.f32 %v1994, %v2360
  %v2375 = vadd.f32 %v1995, %v2362
  %v2376 = vadd.f32 %v1996, %v2365
  %v2377 = vadd.f32 %v1997, %v2367
  %v2378 = vadd.f32 %v1998, %v2370
  %v2379 = vadd.f32 %v1999, %v2372
  %v2380 = vld [vmem:[%s9] sm:$0x1]
  %v2381 = vmul.f32 %v2374, %v2374
  %v2382 = vmul.f32 %v2375, %v2375
  %v2383 = vmul.f32 %v2376, %v2376
  %v2384 = vmul.f32 %v2377, %v2377
  %v2385 = vmul.f32 %v2378, %v2378
  %v2386 = vmul.f32 %v2379, %v2379
  %v2387 = vsel %vm640, %v2381, 0.0
  %2388 = vadd.xlane.f32.xlu0 %v2387
  %v2389 = vpop.xlane.xlu0 %2388
  %v2390 = vsel %vm640, %v2382, 0.0
  %2391 = vadd.xlane.f32.xlu0 %v2390
  %v2392 = vpop.xlane.xlu0 %2391
  %v2393 = vsel %vm640, %v2383, 0.0
  %2394 = vadd.xlane.f32.xlu0 %v2393
  %v2395 = vpop.xlane.xlu0 %2394
  %v2396 = vsel %vm640, %v2384, 0.0
  %2397 = vadd.xlane.f32.xlu0 %v2396
  %v2398 = vpop.xlane.xlu0 %2397
  %v2399 = vsel %vm640, %v2385, 0.0
  %2400 = vadd.xlane.f32.xlu0 %v2399
  %v2401 = vpop.xlane.xlu0 %2400
  %v2402 = vsel %vm640, %v2386, 0.0
  %2403 = vadd.xlane.f32.xlu0 %v2402
  %v2404 = vpop.xlane.xlu0 %2403
  %v2405 = vmul.f32 %v2389, %v665
  %v2406 = vmul.f32 %v2392, %v665
  %v2407 = vmul.f32 %v2395, %v665
  %v2408 = vmul.f32 %v2398, %v665
  %v2409 = vmul.f32 %v2401, %v665
  %v2410 = vmul.f32 %v2404, %v665
  %v2411 = vadd.f32 %v2405, 1e-06
  %v2412 = vadd.f32 %v2406, 1e-06
  %v2413 = vadd.f32 %v2407, 1e-06
  %v2414 = vadd.f32 %v2408, 1e-06
  %v2415 = vadd.f32 %v2409, 1e-06
  %v2416 = vadd.f32 %v2410, 1e-06
  %v2417 = vrsqrt.pop %v2411
  %v2418 = vmul.f32 %v2417, %v2411
  %v2419 = vmul.f32 %v2418, %v2417
  %v2420 = vmul.f32 0.5, %v2419
  %v2421 = vsub.f32 1.5, %v2420
  %v2422 = vmul.f32 %v2417, %v2421
  %vm2423 = vweird.f32 %v2411
  %vm2424 = vweird.f32 %v2417
  %vm2425 = vmor %vm2423, %vm2424
  %v2426 = vsel %vm2425, %v2417, %v2422
  %v2427 = vrsqrt.pop %v2412
  %v2428 = vmul.f32 %v2427, %v2412
  %v2429 = vmul.f32 %v2428, %v2427
  %v2430 = vmul.f32 0.5, %v2429
  %v2431 = vsub.f32 1.5, %v2430
  %v2432 = vmul.f32 %v2427, %v2431
  %vm2433 = vweird.f32 %v2412
  %vm2434 = vweird.f32 %v2427
  %vm2435 = vmor %vm2433, %vm2434
  %v2436 = vsel %vm2435, %v2427, %v2432
  %v2437 = vrsqrt.pop %v2413
  %v2438 = vmul.f32 %v2437, %v2413
  %v2439 = vmul.f32 %v2438, %v2437
  %v2440 = vmul.f32 0.5, %v2439
  %v2441 = vsub.f32 1.5, %v2440
  %v2442 = vmul.f32 %v2437, %v2441
  %vm2443 = vweird.f32 %v2413
  %vm2444 = vweird.f32 %v2437
  %vm2445 = vmor %vm2443, %vm2444
  %v2446 = vsel %vm2445, %v2437, %v2442
  %v2447 = vrsqrt.pop %v2414
  %v2448 = vmul.f32 %v2447, %v2414
  %v2449 = vmul.f32 %v2448, %v2447
  %v2450 = vmul.f32 0.5, %v2449
  %v2451 = vsub.f32 1.5, %v2450
  %v2452 = vmul.f32 %v2447, %v2451
  %vm2453 = vweird.f32 %v2414
  %vm2454 = vweird.f32 %v2447
  %vm2455 = vmor %vm2453, %vm2454
  %v2456 = vsel %vm2455, %v2447, %v2452
  %v2457 = vrsqrt.pop %v2415
  %v2458 = vmul.f32 %v2457, %v2415
  %v2459 = vmul.f32 %v2458, %v2457
  %v2460 = vmul.f32 0.5, %v2459
  %v2461 = vsub.f32 1.5, %v2460
  %v2462 = vmul.f32 %v2457, %v2461
  %vm2463 = vweird.f32 %v2415
  %vm2464 = vweird.f32 %v2457
  %vm2465 = vmor %vm2463, %vm2464
  %v2466 = vsel %vm2465, %v2457, %v2462
  %v2467 = vrsqrt.pop %v2416
  %v2468 = vmul.f32 %v2467, %v2416
  %v2469 = vmul.f32 %v2468, %v2467
  %v2470 = vmul.f32 0.5, %v2469
  %v2471 = vsub.f32 1.5, %v2470
  %v2472 = vmul.f32 %v2467, %v2471
  %vm2473 = vweird.f32 %v2416
  %vm2474 = vweird.f32 %v2467
  %vm2475 = vmor %vm2473, %vm2474
  %v2476 = vsel %vm2475, %v2467, %v2472
  %v2477 = vmul.f32 %v2374, %v2426
  %v2478 = vmul.f32 %v2375, %v2436
  %v2479 = vmul.f32 %v2376, %v2446
  %v2480 = vmul.f32 %v2377, %v2456
  %v2481 = vmul.f32 %v2378, %v2466
  %v2482 = vmul.f32 %v2379, %v2476
  %v2484 = vperm.slane %v2380, 0
  %v2486 = vmul.f32 %v2477, %v2484
  %v2487 = vmul.f32 %v2478, %v2484
  %v2488 = vmul.f32 %v2479, %v2484
  %v2489 = vmul.f32 %v2480, %v2484
  %v2490 = vmul.f32 %v2481, %v2484
  %v2491 = vmul.f32 %v2482, %v2484
  %v2492 = vpack.c.bf16 %v2487, %v2486
  %v2493 = vpack.c.bf16 %v2489, %v2488
  %v2494 = vpack.c.bf16 %v2491, %v2490
  %v2495 = vld [vmem:[%s10] sm:$0xff]
  %v2496 = vld [vmem:[%s10 + $0x8] sm:$0xff]
  %v2497 = vld [vmem:[%s10 + $0x10] sm:$0xff]
  %v2498 = vld [vmem:[%s10 + $0x18] sm:$0xff]
  %v2499 = vld [vmem:[%s10 + $0x20] sm:$0xff]
  %v2500 = vld [vmem:[%s10 + $0x28] sm:$0xff]
  %v2501 = vld [vmem:[%s10 + $0x30] sm:$0xff]
  %v2502 = vld [vmem:[%s10 + $0x38] sm:$0xff]
  %v2503 = vld [vmem:[%s10 + $0x40] sm:$0xff]
  %v2504 = vld [vmem:[%s10 + $0x48] sm:$0xff]
  %v2505 = vld [vmem:[%s10 + $0x50] sm:$0xff]
  %v2506 = vld [vmem:[%s10 + $0x58] sm:$0xff]
  %v2507 = vld [vmem:[%s10 + $0x60] sm:$0xff]
  %v2508 = vld [vmem:[%s10 + $0x68] sm:$0xff]
  %v2509 = vld [vmem:[%s10 + $0x70] sm:$0xff]
  %v2510 = vld [vmem:[%s10 + $0x78] sm:$0xff]
  %v2527 = vunpack.c.l.b16 %v2495
  %v2528 = vunpack.c.h.b16 %v2495
  %v2529 = vunpack.c.l.b16 %v2496
  %v2530 = vunpack.c.h.b16 %v2496
  %v2531 = vunpack.c.l.b16 %v2497
  %v2532 = vunpack.c.h.b16 %v2497
  %v2533 = vunpack.c.l.b16 %v2498
  %v2534 = vunpack.c.h.b16 %v2498
  %v2535 = vunpack.c.l.b16 %v2499
  %v2536 = vunpack.c.h.b16 %v2499
  %v2537 = vunpack.c.l.b16 %v2500
  %v2538 = vunpack.c.h.b16 %v2500
  %v2539 = vunpack.c.l.b16 %v2501
  %v2540 = vunpack.c.h.b16 %v2501
  %v2541 = vunpack.c.l.b16 %v2502
  %v2542 = vunpack.c.h.b16 %v2502
  %v2543 = vunpack.c.l.b16 %v2503
  %v2544 = vunpack.c.h.b16 %v2503
  %v2545 = vunpack.c.l.b16 %v2504
  %v2546 = vunpack.c.h.b16 %v2504
  %v2547 = vunpack.c.l.b16 %v2505
  %v2548 = vunpack.c.h.b16 %v2505
  %v2549 = vunpack.c.l.b16 %v2506
  %v2550 = vunpack.c.h.b16 %v2506
  %v2551 = vunpack.c.l.b16 %v2507
  %v2552 = vunpack.c.h.b16 %v2507
  %v2553 = vunpack.c.l.b16 %v2508
  %v2554 = vunpack.c.h.b16 %v2508
  %v2555 = vunpack.c.l.b16 %v2509
  %v2556 = vunpack.c.h.b16 %v2509
  %v2557 = vunpack.c.l.b16 %v2510
  %v2558 = vunpack.c.h.b16 %v2510
  %v2559 = vpack.c.b16 %v2531, %v2527
  %v2560 = vpack.c.b16 %v2532, %v2528
  %v2561 = vpack.c.b16 %v2533, %v2529
  %v2562 = vpack.c.b16 %v2534, %v2530
  %v2563 = vpack.c.b16 %v2539, %v2535
  %v2564 = vpack.c.b16 %v2540, %v2536
  %v2565 = vpack.c.b16 %v2541, %v2537
  %v2566 = vpack.c.b16 %v2542, %v2538
  %v2567 = vpack.c.b16 %v2547, %v2543
  %v2568 = vpack.c.b16 %v2548, %v2544
  %v2569 = vpack.c.b16 %v2549, %v2545
  %v2570 = vpack.c.b16 %v2550, %v2546
  %v2571 = vpack.c.b16 %v2555, %v2551
  %v2572 = vpack.c.b16 %v2556, %v2552
  %v2573 = vpack.c.b16 %v2557, %v2553
  %v2574 = vpack.c.b16 %v2558, %v2554
  %v2592 = vsel %vm640, %v2492, 0
  %v2595 = vsel %vm640, %v2493, 0
  %v2598 = vsel %vm640, %v2494, 0
  %2600 = vmatpush.bf16.msra.mxu0 0
  %2601 = vmatpush.bf16.msra.mxu0 0
  %2602 = vmatpush.bf16.msra.mxu0 0
  %2603 = vmatpush.bf16.msra.mxu0 0
  %2604 = vmatpush.bf16.msra.mxu0 %v2571
  %2605 = vmatpush.bf16.msra.mxu0 %v2567
  %2606 = vmatpush.bf16.msra.mxu0 %v2563
  %2607 = vmatpush.bf16.msra.mxu0 %v2559
  %2608 = vmatmul.bf16.gmra.mxu0 %v2592
  %v2609 = vpop.f32.mrf.mxu0
  %v2610 = vadd.f32 0.0, %v2609
  %v2611 = vpop.f32.mrf.mxu0
  %v2612 = vadd.f32 0.0, %v2611
  %2613 = vmatmul.bf16.gmra.mxu0 %v2595
  %v2614 = vpop.f32.mrf.mxu0
  %v2615 = vadd.f32 0.0, %v2614
  %v2616 = vpop.f32.mrf.mxu0
  %v2617 = vadd.f32 0.0, %v2616
  %2618 = vmatmul.bf16.gmra.mxu0 %v2598
  %v2619 = vpop.f32.mrf.mxu0
  %v2620 = vadd.f32 0.0, %v2619
  %v2621 = vpop.f32.mrf.mxu0
  %v2622 = vadd.f32 0.0, %v2621
  %2623 = vdwg.mxu0
  %2624 = vmatpush.bf16.msra.mxu0 0
  %2625 = vmatpush.bf16.msra.mxu0 0
  %2626 = vmatpush.bf16.msra.mxu0 0
  %2627 = vmatpush.bf16.msra.mxu0 0
  %2628 = vmatpush.bf16.msra.mxu0 %v2572
  %2629 = vmatpush.bf16.msra.mxu0 %v2568
  %2630 = vmatpush.bf16.msra.mxu0 %v2564
  %2631 = vmatpush.bf16.msra.mxu0 %v2560
  %2632 = vmatmul.bf16.gmra.mxu0 %v2592
  %v2633 = vpop.f32.mrf.mxu0
  %v2634 = vadd.f32 0.0, %v2633
  %v2635 = vpop.f32.mrf.mxu0
  %v2636 = vadd.f32 0.0, %v2635
  %2637 = vmatmul.bf16.gmra.mxu0 %v2595
  %v2638 = vpop.f32.mrf.mxu0
  %v2639 = vadd.f32 0.0, %v2638
  %v2640 = vpop.f32.mrf.mxu0
  %v2641 = vadd.f32 0.0, %v2640
  %2642 = vmatmul.bf16.gmra.mxu0 %v2598
  %v2643 = vpop.f32.mrf.mxu0
  %v2644 = vadd.f32 0.0, %v2643
  %v2645 = vpop.f32.mrf.mxu0
  %v2646 = vadd.f32 0.0, %v2645
  %2647 = vdwg.mxu0
  %2648 = vmatpush.bf16.msra.mxu0 0
  %2649 = vmatpush.bf16.msra.mxu0 0
  %2650 = vmatpush.bf16.msra.mxu0 0
  %2651 = vmatpush.bf16.msra.mxu0 0
  %2652 = vmatpush.bf16.msra.mxu0 %v2573
  %2653 = vmatpush.bf16.msra.mxu0 %v2569
  %2654 = vmatpush.bf16.msra.mxu0 %v2565
  %2655 = vmatpush.bf16.msra.mxu0 %v2561
  %2656 = vmatmul.bf16.gmra.mxu0 %v2592
  %v2657 = vpop.f32.mrf.mxu0
  %v2658 = vadd.f32 0.0, %v2657
  %v2659 = vpop.f32.mrf.mxu0
  %v2660 = vadd.f32 0.0, %v2659
  %2661 = vmatmul.bf16.gmra.mxu0 %v2595
  %v2662 = vpop.f32.mrf.mxu0
  %v2663 = vadd.f32 0.0, %v2662
  %v2664 = vpop.f32.mrf.mxu0
  %v2665 = vadd.f32 0.0, %v2664
  %2666 = vmatmul.bf16.gmra.mxu0 %v2598
  %v2667 = vpop.f32.mrf.mxu0
  %v2668 = vadd.f32 0.0, %v2667
  %v2669 = vpop.f32.mrf.mxu0
  %v2670 = vadd.f32 0.0, %v2669
  %2671 = vdwg.mxu0
  %2672 = vmatpush.bf16.msra.mxu0 0
  %2673 = vmatpush.bf16.msra.mxu0 0
  %2674 = vmatpush.bf16.msra.mxu0 0
  %2675 = vmatpush.bf16.msra.mxu0 0
  %2676 = vmatpush.bf16.msra.mxu0 %v2574
  %2677 = vmatpush.bf16.msra.mxu0 %v2570
  %2678 = vmatpush.bf16.msra.mxu0 %v2566
  %2679 = vmatpush.bf16.msra.mxu0 %v2562
  %2680 = vmatmul.bf16.gmra.mxu0 %v2592
  %v2681 = vpop.f32.mrf.mxu0
  %v2682 = vadd.f32 0.0, %v2681
  %v2683 = vpop.f32.mrf.mxu0
  %v2684 = vadd.f32 0.0, %v2683
  %2685 = vmatmul.bf16.gmra.mxu0 %v2595
  %v2686 = vpop.f32.mrf.mxu0
  %v2687 = vadd.f32 0.0, %v2686
  %v2688 = vpop.f32.mrf.mxu0
  %v2689 = vadd.f32 0.0, %v2688
  %2690 = vmatmul.bf16.gmra.mxu0 %v2598
  %v2691 = vpop.f32.mrf.mxu0
  %v2692 = vadd.f32 0.0, %v2691
  %v2693 = vpop.f32.mrf.mxu0
  %v2694 = vadd.f32 0.0, %v2693
  %2695 = vdwg.mxu0
  %2696 = vst [vmem:[%s11] sm:$0xff] %v2610
  %2697 = vst [vmem:[%s11 + $0x8] sm:$0xff] %v2634
  %2698 = vst [vmem:[%s11 + $0x10] sm:$0xff] %v2658
  %2699 = vst [vmem:[%s11 + $0x18] sm:$0xff] %v2682
  %2700 = vst [vmem:[%s11 + $0x20] sm:$0xff] %v2612
  %2701 = vst [vmem:[%s11 + $0x28] sm:$0xff] %v2636
  %2702 = vst [vmem:[%s11 + $0x30] sm:$0xff] %v2660
  %2703 = vst [vmem:[%s11 + $0x38] sm:$0xff] %v2684
  %2704 = vst [vmem:[%s11 + $0x40] sm:$0xff] %v2615
  %2705 = vst [vmem:[%s11 + $0x48] sm:$0xff] %v2639
  %2706 = vst [vmem:[%s11 + $0x50] sm:$0xff] %v2663
  %2707 = vst [vmem:[%s11 + $0x58] sm:$0xff] %v2687
  %2708 = vst [vmem:[%s11 + $0x60] sm:$0xff] %v2617
  %2709 = vst [vmem:[%s11 + $0x68] sm:$0xff] %v2641
  %2710 = vst [vmem:[%s11 + $0x70] sm:$0xff] %v2665
  %2711 = vst [vmem:[%s11 + $0x78] sm:$0xff] %v2689
  %2712 = vst [vmem:[%s11 + $0x80] sm:$0xff] %v2620
  %2713 = vst [vmem:[%s11 + $0x88] sm:$0xff] %v2644
  %2714 = vst [vmem:[%s11 + $0x90] sm:$0xff] %v2668
  %2715 = vst [vmem:[%s11 + $0x98] sm:$0xff] %v2692
  %2716 = vst [vmem:[%s11 + $0xa0] sm:$0xff] %v2622
  %2717 = vst [vmem:[%s11 + $0xa8] sm:$0xff] %v2646
  %2718 = vst [vmem:[%s11 + $0xb0] sm:$0xff] %v2670
  %2719 = vst [vmem:[%s11 + $0xb8] sm:$0xff] %v2694
  // Predicated region
  $region46: #{prefix_tuning_forward.1} parent=0 // pred_check
    _
  $region47: #{prefix_tuning_forward.1} parent=0 // pred_check_branch
    %2721 = sbr.rel (0) target = $region49
  $region48: #{prefix_tuning_forward.1} parent=0 // pred_region
    _
  $region49: #{prefix_tuning_forward.1} parent=0 // pred_fallthru
    _
  // Predicated region
  $region50: #{prefix_tuning_forward.1} parent=0 // pred_check
    _
  $region51: #{prefix_tuning_forward.1} parent=0 // pred_check_branch
    %2723 = sbr.rel (0) target = $region53
  $region52: #{prefix_tuning_forward.1} parent=0 // pred_region
    _
  $region53: #{prefix_tuning_forward.1} parent=0 // pred_fallthru
    _

</llo_original>
